<compile_context>
chip_gen: v5e
topology: v5e:2x2
jax: 0.10.0
libtpu: 0.0.40
codegen_flags: <defaults>
</compile_context>

<pallas_src>
import functools

import jax
import jax.numpy as jnp
import numpy as np
from jax.experimental import pallas as pl
from jax.experimental.pallas import tpu as pltpu


def _bf16_vpu_ok():
    """bf16 VALU/EUP exist on v6e/v7x; on older chips keep VPU math in f32."""
    try:
        kind = jax.devices()[0].device_kind.lower()
        return any(s in kind for s in ("v6", "v7", "tpu7"))
    except Exception:
        return False


# --------------------------------------------------------------------------------------
# Shared math: used by the Pallas kernel (weights passed as Refs, sliced per layer) and
# by the pure-JAX reference (weights passed as arrays -- identical indexing syntax).
# --------------------------------------------------------------------------------------
def _decoder_math(ex, f0, x, wpe1, wpe2, wemb, w1, w3, wdw, pdh, p2dh, p4dh,
                  *, num_layers, T, dh, use_bf16, eps=1e-5):
    BB = ex.shape[0]
    M = BB * T
    C2 = 2 * dh
    L = num_layers
    f32 = jnp.float32
    bf16 = jnp.bfloat16
    cdt = bf16 if use_bf16 else f32          # VPU compute dtype for the depthwise/act phase

    def conv_k3(inp, w, bias):
        # inp: (BB, T, Cin); w: (3*Cin, Cout) bf16; bias: (1, Cout) f32.
        # im2col in bf16 (per-batch zero halo along time) -> ONE MXU matmul, K = 3*Cin.
        Cin = inp.shape[-1]
        inp_b = inp.astype(bf16)
        z = jnp.zeros((BB, 1, Cin), bf16)
        p = jnp.concatenate([z, inp_b, z], axis=1)                     # (BB, T+2, Cin)
        cols = jnp.concatenate([p[:, 0:T], p[:, 1:T + 1], p[:, 2:T + 2]],
                               axis=-1)                                # (BB, T, 3*Cin) bf16
        out = jnp.dot(cols.reshape(M, 3 * Cin), w,
                      preferred_element_type=f32) + bias               # (M, Cout) f32
        return out.reshape(BB, T, w.shape[1])

    def conv_1x1(inp, w, bias):
        # inp: (BB, T, Cin); w: (Cin, Cout) bf16; bias: (1, Cout) f32.
        out = jnp.dot(inp.reshape(M, inp.shape[-1]).astype(bf16), w,
                      preferred_element_type=f32) + bias
        return out.reshape(BB, T, w.shape[1])

    def depthwise31(y, wdw_l, bdw):
        # Depthwise Conv1d(C2, C2, k=31, pad=15, groups=C2), channels-last.
        # y: (BB, T, C2); wdw_l: (32, C2) (row 31 is zero pad); bdw: (1, C2) f32.
        yc = y.astype(cdt)
        zf = jnp.zeros((BB, 15, C2), cdt)
        zb = jnp.zeros((BB, 17, C2), cdt)
        yp = jnp.concatenate([zf, yc, zb], axis=1)                     # (BB, T+32, C2)
        # 8 sublane-phase shifted copies -> 8 relayouts instead of 31; every tap below
        # reads one of them at a statically 8-aligned sublane offset (plain vlds).
        shifted = [yp[:, r:r + T + 24, :] for r in range(8)]
        wdc = wdw_l.astype(cdt)
        acc = jnp.broadcast_to(bdw, (BB, T, C2))                       # f32
        for q in range(4):                                             # taps 8q .. 8q+7
            part = None
            for r in range(8):
                k = 8 * q + r
                if k >= 31:
                    break
                term = shifted[r][:, 8 * q:8 * q + T, :] * wdc[k:k + 1, :]
                part = term if part is None else part + term
            acc = acc + part.astype(f32)                               # promote every 8 taps
        return acc

    # ---- packed small parameters (all f32) ----
    wf0  = pdh[0:1, :]
    bf0  = pdh[1:2, :]
    bpe2 = pdh[2:3, :]
    bemb = pdh[3:4, :]
    bpe1 = p2dh[0:1, :]

    # phase_emb: Conv1d(2*hop -> 2*dh, k3) -> GELU(tanh) -> Conv1d(2*dh -> dh, k3)
    h = conv_k3(ex, wpe1[...], bpe1)
    h = jax.nn.gelu(h.astype(cdt), approximate=True)
    emb = conv_k3(h, wpe2[...], bpe2)

    # f0_emb: Conv1d(1 -> dh, k1) == broadcast scale+shift (VPU, f32)
    f0e = f0 * wf0 + bf0                                               # (BB,T,1)*(1,dh)

    # emb: Conv1d(enc_hidden -> dh, k1)
    xe = conv_1x1(x, wemb[...], bemb)

    h = xe + emb + f0e                                                 # (BB, T, dh) f32

    # ---- EncoderLayer stack ----
    for l in range(L):
        gam = pdh[4 + l:5 + l, :]
        bet = pdh[4 + L + l:5 + L + l, :]
        b3  = pdh[4 + 2 * L + l:5 + 2 * L + l, :]
        b1  = p4dh[l:l + 1, :]
        bdw = p2dh[1 + l:2 + l, :]
        # per-layer weight slabs are loaded lazily from the stacked refs (8-aligned starts)
        w1_l  = w1[l * 3 * dh:(l + 1) * 3 * dh, :]                     # (3*dh, 4*dh) bf16
        w3_l  = w3[l * C2:(l + 1) * C2, :]                             # (2*dh, dh)   bf16
        wdw_l = wdw[l * 32:(l + 1) * 32, :]                            # (32, 2*dh)   f32

        # TransposedLayerNorm: LayerNorm over channel dim per time step (f32)
        mu = jnp.mean(h, axis=-1, keepdims=True)
        var = jnp.mean(jnp.square(h - mu), axis=-1, keepdims=True)
        y = (h - mu) * jax.lax.rsqrt(var + eps) * gam + bet

        # Conv1d(dh -> 4dh, k3, pad 1): one im2col matmul
        y = conv_k3(y, w1_l, b1)                                       # (BB, T, 4*dh) f32

        # GLU(dim=channels): first half gated by sigmoid of second half
        a, b = y[..., :C2], y[..., C2:]
        y = a.astype(cdt) * jax.nn.sigmoid(b.astype(cdt))              # (BB, T, 2*dh)

        # Depthwise Conv1d(2dh, 2dh, k=31, pad=15, groups=2dh): aligned-phase VPU MACs
        y = depthwise31(y, wdw_l, bdw)                                 # (BB, T, 2*dh) f32
        y = jax.nn.gelu(y.astype(cdt), approximate=True)

        # Dropout(0.0) -> identity.  Conv1d(2dh -> dh, k1)
        y = conv_1x1(y, w3_l, b3)

        h = h + y                                                      # residual (f32)
    return h


# --------------------------------------------------------------------------------------
# Pallas kernel: one grid step = one batch block (default: one batch element), whole
# sequence resident in VMEM, matmul M dimension = batch_block * T.
# --------------------------------------------------------------------------------------
def decoder_kernel(ex_ref, f0_ref, x_ref,
                   wpe1_ref, wpe2_ref, wemb_ref, w1_ref, w3_ref, wdw_ref,
                   pdh_ref, p2dh_ref, p4dh_ref, o_ref,
                   *, num_layers, T, dh, use_bf16):
    out = _decoder_math(
        ex_ref[...], f0_ref[...], x_ref[...],
        wpe1_ref, wpe2_ref, wemb_ref, w1_ref, w3_ref, wdw_ref,
        pdh_ref, p2dh_ref, p4dh_ref,
        num_layers=num_layers, T=T, dh=dh, use_bf16=use_bf16)
    o_ref[...] = out.astype(o_ref.dtype)                               # (BB, T, dh)


# --------------------------------------------------------------------------------------
# Glue: framing (== F.conv1d with eye kernel, stride=hop), layout, weight packing.
# --------------------------------------------------------------------------------------
def _prepare_inputs(x, f0, noise, phase, *, hop):
    B, _, T = x.shape
    sinus = jnp.sin(2.0 * jnp.pi * phase)[..., 0]                      # (B, L)
    sin_frames = sinus.reshape(B, T, hop)                              # [b,t,k] = sinus[b, t*hop+k]
    noi_frames = noise[:, 0, :].reshape(B, T, hop)
    exciter = jnp.concatenate([sin_frames, noi_frames], axis=-1).astype(jnp.float32)
    f0_t = jnp.transpose(f0, (0, 2, 1)).astype(jnp.float32)            # (B, T, 1)
    x_t = jnp.transpose(x, (0, 2, 1)).astype(jnp.float32)              # (B, T, Cenc)
    return exciter, f0_t, x_t


def _pack_weights(params, *, num_layers, hop, dh):
    """Reshape conv weights for im2col matmuls (bf16) and pack the small per-layer
    scale/bias parameters into three f32 arrays grouped by channel width."""
    L = num_layers
    bf16 = jnp.bfloat16
    wpe1 = params["wpe1"].reshape(3 * 2 * hop, 2 * dh).astype(bf16)    # rows: (k, cin)
    wpe2 = params["wpe2"].reshape(3 * 2 * dh, dh).astype(bf16)
    wemb = params["wemb"].astype(bf16)                                 # (Cenc, dh)
    w1 = params["w1s"].reshape(L * 3 * dh, 4 * dh).astype(bf16)        # rows: (l, k, cin)
    w3 = params["w3s"].reshape(L * 2 * dh, dh).astype(bf16)            # rows: (l, cin)
    # depthwise taps: pad to 32 rows/layer so per-layer slabs start 8-aligned
    wdw = jnp.concatenate(
        [params["wdws"], jnp.zeros((L, 1, 2 * dh), jnp.float32)], axis=1
    ).reshape(L * 32, 2 * dh).astype(jnp.float32)                      # rows: (l, tap[0..31])
    # width-dh rows: [wf0, bf0, bpe2, bemb, gam(L), bet(L), b3s(L)]
    pdh = jnp.concatenate([params["wf0"], params["bf0"], params["bpe2"], params["bemb"],
                           params["gam"], params["bet"], params["b3s"]],
                          axis=0).astype(jnp.float32)                  # (4+3L, dh)
    # width-2dh rows: [bpe1, bdws(L)]
    p2dh = jnp.concatenate([params["bpe1"], params["bdws"]], axis=0).astype(jnp.float32)
    p4dh = params["b1s"].astype(jnp.float32)                           # (L, 4dh)
    return (wpe1, wpe2, wemb, w1, w3, wdw, pdh, p2dh, p4dh)


def decoder_forward(x, f0, noise, phase, params, *, hop, num_layers,
                    batch_block=1, use_bf16=None):
    """x: (B, Cenc, T)  f0: (B, 1, T)  noise: (B, 1, T*hop)  phase: (B, T*hop, 1).
    Returns (B, decoder_hidden, T) like the PyTorch module."""
    B, Cenc, T = x.shape
    dh = params["wemb"].shape[1]
    if use_bf16 is None:
        use_bf16 = _bf16_vpu_ok()

    exciter, f0_t, x_t = _prepare_inputs(x, f0, noise, phase, hop=hop)
    packed = _pack_weights(params, num_layers=num_layers, hop=hop, dh=dh)

    BB = B if batch_block is None else min(batch_block, B)
    assert B % BB == 0, "batch_block must divide batch size"
    grid = (B // BB,)

    in_specs = [
        pl.BlockSpec((BB, T, 2 * hop), lambda g: (g, 0, 0)),
        pl.BlockSpec((BB, T, 1), lambda g: (g, 0, 0)),
        pl.BlockSpec((BB, T, Cenc), lambda g: (g, 0, 0)),
    ] + [pl.BlockSpec(w.shape, lambda g: (0, 0)) for w in packed]

    # advisory cost estimate so XLA schedules the framing / final transpose around the call
    M_total = B * T
    flops = 2 * M_total * (3 * (2 * hop) * (2 * dh) + 3 * (2 * dh) * dh + Cenc * dh + dh
                           + num_layers * (3 * dh * 4 * dh + 2 * dh * dh + 31 * 2 * dh))
    transcendentals = M_total * (2 * dh + num_layers * 4 * dh)
    bytes_accessed = int(4 * (exciter.size + f0_t.size + x_t.size + B * T * dh)
                         + sum(int(w.size) * w.dtype.itemsize for w in packed))

    out = pl.pallas_call(
        functools.partial(decoder_kernel, num_layers=num_layers, T=T, dh=dh,
                          use_bf16=use_bf16),
        out_shape=jax.ShapeDtypeStruct((B, T, dh), jnp.float32),
        grid=grid,
        in_specs=in_specs,
        out_specs=pl.BlockSpec((BB, T, dh), lambda g: (g, 0, 0)),
        compiler_params=pltpu.CompilerParams(
            dimension_semantics=("parallel",),
            vmem_limit_bytes=48 * 1024 * 1024),
        cost_estimate=pl.CostEstimate(flops=flops, transcendentals=transcendentals,
                                      bytes_accessed=bytes_accessed),
    )(exciter, f0_t, x_t, *packed)

    # final layout transpose (smallest tensor involved) is left to XLA
    return jnp.transpose(out, (0, 2, 1))                               # (B, dh, T)


# --------------------------------------------------------------------------------------
# Parameter init (effective weight-norm weights, PyTorch-consistent layouts).
# --------------------------------------------------------------------------------------
def init_params(key, *, hop, enc_hidden, dec_hidden, num_layers):
    dh = dec_hidden
    L = num_layers
    ks = jax.random.split(key, 14)
    n = lambda k, shape, scale: scale * jax.random.normal(k, shape, jnp.float32)
    return {
        # phase_emb
        "wpe1": n(ks[0], (3, 2 * hop, 2 * dh), 0.05),    # [k, cin, cout]
        "bpe1": n(ks[1], (1, 2 * dh), 0.01),
        "wpe2": n(ks[2], (3, 2 * dh, dh), 0.05),
        "bpe2": n(ks[3], (1, dh), 0.01),
        # f0_emb (Conv1d(1 -> hidden, 1))
        "wf0": n(ks[4], (1, dh), 0.05),
        "bf0": n(ks[5], (1, dh), 0.01),
        # emb (Conv1d(enc_hidden -> dec_hidden, 1))
        "wemb": n(ks[6], (enc_hidden, dh), 0.05),
        "bemb": n(ks[7], (1, dh), 0.01),
        # EncoderLayer stack (stacked along leading layer dim)
        "gam": jnp.ones((L, dh), jnp.float32),
        "bet": jnp.zeros((L, dh), jnp.float32),
        "w1s": n(ks[8], (L, 3, dh, 4 * dh), 0.05),       # [l, k, cin, cout]
        "b1s": n(ks[9], (L, 4 * dh), 0.01),
        "wdws": n(ks[10], (L, 31, 2 * dh), 0.05),        # [l, tap, channel]
        "bdws": n(ks[11], (L, 2 * dh), 0.01),
        "w3s": n(ks[12], (L, 2 * dh, dh), 0.05),         # [l, cin, cout]
        "b3s": n(ks[13], (L, dh), 0.01),
    }


if __name__ == "__main__":
    # small shapes consistent with the module
    B = 2
    hop = 16            # hop_length
    T = 16              # number of frames
    Lw = T * hop        # waveform length
    enc_hidden = 32
    dec_hidden = 32     # must equal enc_hidden for the `x + emb + f0` add
    num_layers = 2

    key = jax.random.PRNGKey(0)
    k_x, k_f0, k_noise, k_phase, k_p = jax.random.split(key, 5)

    x = jax.random.normal(k_x, (B, enc_hidden, T), jnp.float32)
    f0 = jnp.abs(jax.random.normal(k_f0, (B, 1, T), jnp.float32)) * 200.0
    noise = jax.random.normal(k_noise, (B, 1, Lw), jnp.float32)
    phase = jax.random.uniform(k_phase, (B, Lw, 1), jnp.float32)

    params = init_params(k_p, hop=hop, enc_hidden=enc_hidden,
                         dec_hidden=dec_hidden, num_layers=num_layers)

    use_bf16 = _bf16_vpu_ok()
    out = decoder_forward(x, f0, noise, phase, params, hop=hop, num_layers=num_layers,
                          batch_block=1, use_bf16=use_bf16)
    out = jax.block_until_ready(out)
    assert out.shape == (B, dec_hidden, T)

    # pure-JAX reference: same packed weights, same shared math (no Pallas)
    ex_r, f0_r, x_r = _prepare_inputs(x, f0, noise, phase, hop=hop)
    packed_r = _pack_weights(params, num_layers=num_layers, hop=hop, dh=dec_hidden)
    ref = _decoder_math(ex_r, f0_r, x_r, *packed_r,
                        num_layers=num_layers, T=T, dh=dec_hidden, use_bf16=use_bf16)
    ref = jnp.transpose(ref, (0, 2, 1))
    np.testing.assert_allclose(np.asarray(out), np.asarray(ref), rtol=1e-3, atol=1e-3)

    print("KERNEL_OK")
</pallas_src>

<mosaic_0001>
module attributes {stable_mosaic.version = 11 : i64} {
  func.func @decoder_kernel(%arg0: i32, %arg1: memref<1x16x32xf32, #tpu.memory_space<vmem>>, %arg2: memref<1x16x1xf32, #tpu.memory_space<vmem>>, %arg3: memref<1x16x32xf32, #tpu.memory_space<vmem>>, %arg4: memref<96x64xbf16, #tpu.memory_space<vmem>>, %arg5: memref<192x32xbf16, #tpu.memory_space<vmem>>, %arg6: memref<32x32xbf16, #tpu.memory_space<vmem>>, %arg7: memref<192x128xbf16, #tpu.memory_space<vmem>>, %arg8: memref<128x32xbf16, #tpu.memory_space<vmem>>, %arg9: memref<64x64xf32, #tpu.memory_space<vmem>>, %arg10: memref<10x32xf32, #tpu.memory_space<vmem>>, %arg11: memref<3x64xf32, #tpu.memory_space<vmem>>, %arg12: memref<2x128xf32, #tpu.memory_space<vmem>>, %arg13: memref<1x16x32xf32, #tpu.memory_space<vmem>>) attributes {dimension_semantics = [#tpu.dimension_semantics<parallel>], iteration_bounds = array<i64: 2>, scalar_prefetch = 0 : i64, scratch_operands = 0 : i64, tpu.core_type = #tpu.core_type<tc>, window_params = [{transform_indices = @transform_0, window_bounds = array<i64: 1, 16, 32>}, {transform_indices = @transform_1, window_bounds = array<i64: 1, 16, 1>}, {transform_indices = @transform_2, window_bounds = array<i64: 1, 16, 32>}, {pipeline_mode = #tpu.pipeline_mode<synchronous>, transform_indices = @transform_3, window_bounds = array<i64: 96, 64>}, {pipeline_mode = #tpu.pipeline_mode<synchronous>, transform_indices = @transform_4, window_bounds = array<i64: 192, 32>}, {pipeline_mode = #tpu.pipeline_mode<synchronous>, transform_indices = @transform_5, window_bounds = array<i64: 32, 32>}, {pipeline_mode = #tpu.pipeline_mode<synchronous>, transform_indices = @transform_6, window_bounds = array<i64: 192, 128>}, {pipeline_mode = #tpu.pipeline_mode<synchronous>, transform_indices = @transform_7, window_bounds = array<i64: 128, 32>}, {pipeline_mode = #tpu.pipeline_mode<synchronous>, transform_indices = @transform_8, window_bounds = array<i64: 64, 64>}, {pipeline_mode = #tpu.pipeline_mode<synchronous>, transform_indices = @transform_9, window_bounds = array<i64: 10, 32>}, {pipeline_mode = #tpu.pipeline_mode<synchronous>, transform_indices = @transform_10, window_bounds = array<i64: 3, 64>}, {pipeline_mode = #tpu.pipeline_mode<synchronous>, transform_indices = @transform_11, window_bounds = array<i64: 2, 128>}, {transform_indices = @transform_12, window_bounds = array<i64: 1, 16, 32>}]} {
    %c0 = arith.constant 0 : index
    %c0_0 = arith.constant 0 : index
    %c0_1 = arith.constant 0 : index
    %0 = vector.load %arg1[%c0, %c0_0, %c0_1] : memref<1x16x32xf32, #tpu.memory_space<vmem>>, vector<1x16x32xf32>
    %c0_2 = arith.constant 0 : index
    %c0_3 = arith.constant 0 : index
    %c0_4 = arith.constant 0 : index
    %1 = vector.load %arg2[%c0_2, %c0_3, %c0_4] : memref<1x16x1xf32, #tpu.memory_space<vmem>>, vector<1x16x1xf32>
    %c0_5 = arith.constant 0 : index
    %c0_6 = arith.constant 0 : index
    %c0_7 = arith.constant 0 : index
    %2 = vector.load %arg3[%c0_5, %c0_6, %c0_7] : memref<1x16x32xf32, #tpu.memory_space<vmem>>, vector<1x16x32xf32>
    %c0_8 = arith.constant 0 : index
    %c0_9 = arith.constant 0 : index
    %3 = vector.load %arg10[%c0_8, %c0_9] : memref<10x32xf32, #tpu.memory_space<vmem>>, vector<1x32xf32>
    %c1 = arith.constant 1 : index
    %c0_10 = arith.constant 0 : index
    %4 = vector.load %arg10[%c1, %c0_10] : memref<10x32xf32, #tpu.memory_space<vmem>>, vector<1x32xf32>
    %c2 = arith.constant 2 : index
    %c0_11 = arith.constant 0 : index
    %5 = vector.load %arg10[%c2, %c0_11] : memref<10x32xf32, #tpu.memory_space<vmem>>, vector<1x32xf32>
    %c3 = arith.constant 3 : index
    %c0_12 = arith.constant 0 : index
    %6 = vector.load %arg10[%c3, %c0_12] : memref<10x32xf32, #tpu.memory_space<vmem>>, vector<1x32xf32>
    %c0_13 = arith.constant 0 : index
    %c0_14 = arith.constant 0 : index
    %7 = vector.load %arg11[%c0_13, %c0_14] : memref<3x64xf32, #tpu.memory_space<vmem>>, vector<1x64xf32>
    %c0_15 = arith.constant 0 : index
    %c0_16 = arith.constant 0 : index
    %8 = vector.load %arg4[%c0_15, %c0_16] : memref<96x64xbf16, #tpu.memory_space<vmem>>, vector<96x64xbf16>
    %9 = arith.truncf %0 : vector<1x16x32xf32> to vector<1x16x32xbf16>
    %cst = arith.constant 0.000000e+00 : bf16
    %10 = vector.broadcast %cst : bf16 to vector<1x1x32xbf16>
    %11 = tpu.concatenate %10, %9, %10 in 1 : vector<1x1x32xbf16>, vector<1x16x32xbf16>, vector<1x1x32xbf16> -> vector<1x18x32xbf16>
    %12 = vector.extract_strided_slice %11 {offsets = [0, 0, 0], sizes = [1, 16, 32], strides = [1, 1, 1]} : vector<1x18x32xbf16> to vector<1x16x32xbf16>
    %13 = vector.extract_strided_slice %11 {offsets = [0, 1, 0], sizes = [1, 16, 32], strides = [1, 1, 1]} : vector<1x18x32xbf16> to vector<1x16x32xbf16>
    %14 = vector.extract_strided_slice %11 {offsets = [0, 2, 0], sizes = [1, 16, 32], strides = [1, 1, 1]} : vector<1x18x32xbf16> to vector<1x16x32xbf16>
    %15 = tpu.concatenate %12, %13, %14 in 2 : vector<1x16x32xbf16>, vector<1x16x32xbf16>, vector<1x16x32xbf16> -> vector<1x16x96xbf16>
    %16 = vector.shape_cast %15 : vector<1x16x96xbf16> to vector<16x96xbf16>
    %cst_17 = arith.constant dense<0.000000e+00> : vector<16x64xf32>
    %17 = tpu.matmul %16, %8, %cst_17 {dimension_numbers = #tpu.dot_dimension_numbers<[1], [0], [0], [1], [0, 0, 1, 1], [], []>} : vector<16x96xbf16>, vector<96x64xbf16>, vector<16x64xf32> -> vector<16x64xf32>
    %18 = vector.broadcast %7 : vector<1x64xf32> to vector<16x64xf32>
    %19 = arith.addf %17, %18 : vector<16x64xf32>
    %20 = vector.shape_cast %19 : vector<16x64xf32> to vector<1x16x64xf32>
    %21 = arith.mulf %20, %20 : vector<1x16x64xf32>
    %22 = arith.mulf %20, %21 : vector<1x16x64xf32>
    %cst_18 = arith.constant 4.471500e-02 : f32
    %23 = vector.broadcast %cst_18 : f32 to vector<1x16x64xf32>
    %24 = arith.mulf %23, %22 : vector<1x16x64xf32>
    %25 = arith.addf %20, %24 : vector<1x16x64xf32>
    %cst_19 = arith.constant 0.797884583 : f32
    %26 = vector.broadcast %cst_19 : f32 to vector<1x16x64xf32>
    %27 = arith.mulf %26, %25 : vector<1x16x64xf32>
    %28 = math.tanh %27 : vector<1x16x64xf32>
    %cst_20 = arith.constant 1.000000e+00 : f32
    %29 = vector.broadcast %cst_20 : f32 to vector<1x16x64xf32>
    %30 = arith.addf %29, %28 : vector<1x16x64xf32>
    %cst_21 = arith.constant 5.000000e-01 : f32
    %31 = vector.broadcast %cst_21 : f32 to vector<1x16x64xf32>
    %32 = arith.mulf %31, %30 : vector<1x16x64xf32>
    %33 = arith.mulf %20, %32 : vector<1x16x64xf32>
    %c0_22 = arith.constant 0 : index
    %c0_23 = arith.constant 0 : index
    %34 = vector.load %arg5[%c0_22, %c0_23] : memref<192x32xbf16, #tpu.memory_space<vmem>>, vector<192x32xbf16>
    %35 = arith.truncf %33 : vector<1x16x64xf32> to vector<1x16x64xbf16>
    %cst_24 = arith.constant 0.000000e+00 : bf16
    %36 = vector.broadcast %cst_24 : bf16 to vector<1x1x64xbf16>
    %37 = tpu.concatenate %36, %35, %36 in 1 : vector<1x1x64xbf16>, vector<1x16x64xbf16>, vector<1x1x64xbf16> -> vector<1x18x64xbf16>
    %38 = vector.extract_strided_slice %37 {offsets = [0, 0, 0], sizes = [1, 16, 64], strides = [1, 1, 1]} : vector<1x18x64xbf16> to vector<1x16x64xbf16>
    %39 = vector.extract_strided_slice %37 {offsets = [0, 1, 0], sizes = [1, 16, 64], strides = [1, 1, 1]} : vector<1x18x64xbf16> to vector<1x16x64xbf16>
    %40 = vector.extract_strided_slice %37 {offsets = [0, 2, 0], sizes = [1, 16, 64], strides = [1, 1, 1]} : vector<1x18x64xbf16> to vector<1x16x64xbf16>
    %41 = tpu.concatenate %38, %39, %40 in 2 : vector<1x16x64xbf16>, vector<1x16x64xbf16>, vector<1x16x64xbf16> -> vector<1x16x192xbf16>
    %42 = vector.shape_cast %41 : vector<1x16x192xbf16> to vector<16x192xbf16>
    %cst_25 = arith.constant dense<0.000000e+00> : vector<16x32xf32>
    %43 = tpu.matmul %42, %34, %cst_25 {dimension_numbers = #tpu.dot_dimension_numbers<[1], [0], [0], [1], [0, 0, 1, 1], [], []>} : vector<16x192xbf16>, vector<192x32xbf16>, vector<16x32xf32> -> vector<16x32xf32>
    %44 = vector.broadcast %5 : vector<1x32xf32> to vector<16x32xf32>
    %45 = arith.addf %43, %44 : vector<16x32xf32>
    %46 = vector.shape_cast %45 : vector<16x32xf32> to vector<1x16x32xf32>
    %47 = vector.shape_cast %3 : vector<1x32xf32> to vector<1x1x32xf32>
    %48 = vector.broadcast %1 : vector<1x16x1xf32> to vector<1x16x32xf32>
    %49 = vector.broadcast %47 : vector<1x1x32xf32> to vector<1x16x32xf32>
    %50 = arith.mulf %48, %49 : vector<1x16x32xf32>
    %51 = vector.shape_cast %4 : vector<1x32xf32> to vector<1x1x32xf32>
    %52 = vector.broadcast %51 : vector<1x1x32xf32> to vector<1x16x32xf32>
    %53 = arith.addf %50, %52 : vector<1x16x32xf32>
    %c0_26 = arith.constant 0 : index
    %c0_27 = arith.constant 0 : index
    %54 = vector.load %arg6[%c0_26, %c0_27] : memref<32x32xbf16, #tpu.memory_space<vmem>>, vector<32x32xbf16>
    %55 = vector.shape_cast %2 : vector<1x16x32xf32> to vector<16x32xf32>
    %56 = arith.truncf %55 : vector<16x32xf32> to vector<16x32xbf16>
    %cst_28 = arith.constant dense<0.000000e+00> : vector<16x32xf32>
    %57 = tpu.matmul %56, %54, %cst_28 {dimension_numbers = #tpu.dot_dimension_numbers<[1], [0], [0], [1], [0, 0, 1, 1], [], []>} : vector<16x32xbf16>, vector<32x32xbf16>, vector<16x32xf32> -> vector<16x32xf32>
    %58 = vector.broadcast %6 : vector<1x32xf32> to vector<16x32xf32>
    %59 = arith.addf %57, %58 : vector<16x32xf32>
    %60 = vector.shape_cast %59 : vector<16x32xf32> to vector<1x16x32xf32>
    %61 = arith.addf %60, %46 : vector<1x16x32xf32>
    %62 = arith.addf %61, %53 : vector<1x16x32xf32>
    %c4 = arith.constant 4 : index
    %c0_29 = arith.constant 0 : index
    %63 = vector.load %arg10[%c4, %c0_29] : memref<10x32xf32, #tpu.memory_space<vmem>>, vector<1x32xf32>
    %c6 = arith.constant 6 : index
    %c0_30 = arith.constant 0 : index
    %64 = vector.load %arg10[%c6, %c0_30] : memref<10x32xf32, #tpu.memory_space<vmem>>, vector<1x32xf32>
    %c8 = arith.constant 8 : index
    %c0_31 = arith.constant 0 : index
    %65 = vector.load %arg10[%c8, %c0_31] : memref<10x32xf32, #tpu.memory_space<vmem>>, vector<1x32xf32>
    %c0_32 = arith.constant 0 : index
    %c0_33 = arith.constant 0 : index
    %66 = vector.load %arg12[%c0_32, %c0_33] : memref<2x128xf32, #tpu.memory_space<vmem>>, vector<1x128xf32>
    %c1_34 = arith.constant 1 : index
    %c0_35 = arith.constant 0 : index
    %67 = vector.load %arg11[%c1_34, %c0_35] : memref<3x64xf32, #tpu.memory_space<vmem>>, vector<1x64xf32>
    %c0_36 = arith.constant 0 : index
    %c0_37 = arith.constant 0 : index
    %68 = vector.load %arg7[%c0_36, %c0_37] : memref<192x128xbf16, #tpu.memory_space<vmem>>, vector<96x128xbf16>
    %c0_38 = arith.constant 0 : index
    %c0_39 = arith.constant 0 : index
    %69 = vector.load %arg8[%c0_38, %c0_39] : memref<128x32xbf16, #tpu.memory_space<vmem>>, vector<64x32xbf16>
    %c0_40 = arith.constant 0 : index
    %c0_41 = arith.constant 0 : index
    %70 = vector.load %arg9[%c0_40, %c0_41] : memref<64x64xf32, #tpu.memory_space<vmem>>, vector<32x64xf32>
    %cst_42 = arith.constant dense<0.000000e+00> : vector<1x16xf32>
    %71 = vector.multi_reduction <add>, %62, %cst_42 [2] : vector<1x16x32xf32> to vector<1x16xf32>
    %72 = vector.shape_cast %71 : vector<1x16xf32> to vector<1x16x1xf32>
    %cst_43 = arith.constant 3.200000e+01 : f32
    %73 = vector.broadcast %cst_43 : f32 to vector<1x16x1xf32>
    %74 = arith.divf %72, %73 : vector<1x16x1xf32>
    %75 = vector.broadcast %74 : vector<1x16x1xf32> to vector<1x16x32xf32>
    %76 = arith.subf %62, %75 : vector<1x16x32xf32>
    %77 = arith.mulf %76, %76 : vector<1x16x32xf32>
    %cst_44 = arith.constant dense<0.000000e+00> : vector<1x16xf32>
    %78 = vector.multi_reduction <add>, %77, %cst_44 [2] : vector<1x16x32xf32> to vector<1x16xf32>
    %79 = vector.shape_cast %78 : vector<1x16xf32> to vector<1x16x1xf32>
    %cst_45 = arith.constant 3.200000e+01 : f32
    %80 = vector.broadcast %cst_45 : f32 to vector<1x16x1xf32>
    %81 = arith.divf %79, %80 : vector<1x16x1xf32>
    %82 = vector.broadcast %74 : vector<1x16x1xf32> to vector<1x16x32xf32>
    %83 = arith.subf %62, %82 : vector<1x16x32xf32>
    %cst_46 = arith.constant 9.99999974E-6 : f32
    %84 = vector.broadcast %cst_46 : f32 to vector<1x16x1xf32>
    %85 = arith.addf %81, %84 : vector<1x16x1xf32>
    %86 = math.rsqrt %85 : vector<1x16x1xf32>
    %87 = vector.broadcast %86 : vector<1x16x1xf32> to vector<1x16x32xf32>
    %88 = arith.mulf %83, %87 : vector<1x16x32xf32>
    %89 = vector.shape_cast %63 : vector<1x32xf32> to vector<1x1x32xf32>
    %90 = vector.broadcast %89 : vector<1x1x32xf32> to vector<1x16x32xf32>
    %91 = arith.mulf %88, %90 : vector<1x16x32xf32>
    %92 = vector.shape_cast %64 : vector<1x32xf32> to vector<1x1x32xf32>
    %93 = vector.broadcast %92 : vector<1x1x32xf32> to vector<1x16x32xf32>
    %94 = arith.addf %91, %93 : vector<1x16x32xf32>
    %95 = arith.truncf %94 : vector<1x16x32xf32> to vector<1x16x32xbf16>
    %cst_47 = arith.constant 0.000000e+00 : bf16
    %96 = vector.broadcast %cst_47 : bf16 to vector<1x1x32xbf16>
    %97 = tpu.concatenate %96, %95, %96 in 1 : vector<1x1x32xbf16>, vector<1x16x32xbf16>, vector<1x1x32xbf16> -> vector<1x18x32xbf16>
    %98 = vector.extract_strided_slice %97 {offsets = [0, 0, 0], sizes = [1, 16, 32], strides = [1, 1, 1]} : vector<1x18x32xbf16> to vector<1x16x32xbf16>
    %99 = vector.extract_strided_slice %97 {offsets = [0, 1, 0], sizes = [1, 16, 32], strides = [1, 1, 1]} : vector<1x18x32xbf16> to vector<1x16x32xbf16>
    %100 = vector.extract_strided_slice %97 {offsets = [0, 2, 0], sizes = [1, 16, 32], strides = [1, 1, 1]} : vector<1x18x32xbf16> to vector<1x16x32xbf16>
    %101 = tpu.concatenate %98, %99, %100 in 2 : vector<1x16x32xbf16>, vector<1x16x32xbf16>, vector<1x16x32xbf16> -> vector<1x16x96xbf16>
    %102 = vector.shape_cast %101 : vector<1x16x96xbf16> to vector<16x96xbf16>
    %cst_48 = arith.constant dense<0.000000e+00> : vector<16x128xf32>
    %103 = tpu.matmul %102, %68, %cst_48 {dimension_numbers = #tpu.dot_dimension_numbers<[1], [0], [0], [1], [0, 0, 1, 1], [], []>} : vector<16x96xbf16>, vector<96x128xbf16>, vector<16x128xf32> -> vector<16x128xf32>
    %104 = vector.broadcast %66 : vector<1x128xf32> to vector<16x128xf32>
    %105 = arith.addf %103, %104 : vector<16x128xf32>
    %106 = vector.shape_cast %105 : vector<16x128xf32> to vector<1x16x128xf32>
    %107 = vector.extract_strided_slice %106 {offsets = [0, 0, 0], sizes = [1, 16, 64], strides = [1, 1, 1]} : vector<1x16x128xf32> to vector<1x16x64xf32>
    %108 = vector.extract_strided_slice %106 {offsets = [0, 0, 64], sizes = [1, 16, 64], strides = [1, 1, 1]} : vector<1x16x128xf32> to vector<1x16x64xf32>
    %109 = arith.negf %108 : vector<1x16x64xf32>
    %110 = math.exp %109 : vector<1x16x64xf32>
    %cst_49 = arith.constant 1.000000e+00 : f32
    %111 = vector.broadcast %cst_49 : f32 to vector<1x16x64xf32>
    %112 = arith.addf %111, %110 : vector<1x16x64xf32>
    %113 = arith.divf %111, %112 : vector<1x16x64xf32>
    %114 = arith.mulf %107, %113 : vector<1x16x64xf32>
    %cst_50 = arith.constant 0.000000e+00 : f32
    %115 = vector.broadcast %cst_50 : f32 to vector<1x15x64xf32>
    %cst_51 = arith.constant 0.000000e+00 : f32
    %116 = vector.broadcast %cst_51 : f32 to vector<1x17x64xf32>
    %117 = tpu.concatenate %115, %114, %116 in 1 : vector<1x15x64xf32>, vector<1x16x64xf32>, vector<1x17x64xf32> -> vector<1x48x64xf32>
    %118 = vector.extract_strided_slice %117 {offsets = [0, 0, 0], sizes = [1, 40, 64], strides = [1, 1, 1]} : vector<1x48x64xf32> to vector<1x40x64xf32>
    %119 = vector.extract_strided_slice %117 {offsets = [0, 1, 0], sizes = [1, 40, 64], strides = [1, 1, 1]} : vector<1x48x64xf32> to vector<1x40x64xf32>
    %120 = vector.extract_strided_slice %117 {offsets = [0, 2, 0], sizes = [1, 40, 64], strides = [1, 1, 1]} : vector<1x48x64xf32> to vector<1x40x64xf32>
    %121 = vector.extract_strided_slice %117 {offsets = [0, 3, 0], sizes = [1, 40, 64], strides = [1, 1, 1]} : vector<1x48x64xf32> to vector<1x40x64xf32>
    %122 = vector.extract_strided_slice %117 {offsets = [0, 4, 0], sizes = [1, 40, 64], strides = [1, 1, 1]} : vector<1x48x64xf32> to vector<1x40x64xf32>
    %123 = vector.extract_strided_slice %117 {offsets = [0, 5, 0], sizes = [1, 40, 64], strides = [1, 1, 1]} : vector<1x48x64xf32> to vector<1x40x64xf32>
    %124 = vector.extract_strided_slice %117 {offsets = [0, 6, 0], sizes = [1, 40, 64], strides = [1, 1, 1]} : vector<1x48x64xf32> to vector<1x40x64xf32>
    %125 = vector.extract_strided_slice %117 {offsets = [0, 7, 0], sizes = [1, 40, 64], strides = [1, 1, 1]} : vector<1x48x64xf32> to vector<1x40x64xf32>
    %126 = vector.shape_cast %67 : vector<1x64xf32> to vector<1x1x64xf32>
    %127 = vector.broadcast %126 : vector<1x1x64xf32> to vector<1x16x64xf32>
    %128 = vector.extract_strided_slice %118 {offsets = [0, 0, 0], sizes = [1, 16, 64], strides = [1, 1, 1]} : vector<1x40x64xf32> to vector<1x16x64xf32>
    %129 = vector.extract_strided_slice %70 {offsets = [0, 0], sizes = [1, 64], strides = [1, 1]} : vector<32x64xf32> to vector<1x64xf32>
    %130 = vector.shape_cast %129 : vector<1x64xf32> to vector<1x1x64xf32>
    %131 = vector.broadcast %130 : vector<1x1x64xf32> to vector<1x16x64xf32>
    %132 = arith.mulf %128, %131 : vector<1x16x64xf32>
    %133 = vector.extract_strided_slice %119 {offsets = [0, 0, 0], sizes = [1, 16, 64], strides = [1, 1, 1]} : vector<1x40x64xf32> to vector<1x16x64xf32>
    %134 = vector.extract_strided_slice %70 {offsets = [1, 0], sizes = [1, 64], strides = [1, 1]} : vector<32x64xf32> to vector<1x64xf32>
    %135 = vector.shape_cast %134 : vector<1x64xf32> to vector<1x1x64xf32>
    %136 = vector.broadcast %135 : vector<1x1x64xf32> to vector<1x16x64xf32>
    %137 = arith.mulf %133, %136 : vector<1x16x64xf32>
    %138 = arith.addf %132, %137 : vector<1x16x64xf32>
    %139 = vector.extract_strided_slice %120 {offsets = [0, 0, 0], sizes = [1, 16, 64], strides = [1, 1, 1]} : vector<1x40x64xf32> to vector<1x16x64xf32>
    %140 = vector.extract_strided_slice %70 {offsets = [2, 0], sizes = [1, 64], strides = [1, 1]} : vector<32x64xf32> to vector<1x64xf32>
    %141 = vector.shape_cast %140 : vector<1x64xf32> to vector<1x1x64xf32>
    %142 = vector.broadcast %141 : vector<1x1x64xf32> to vector<1x16x64xf32>
    %143 = arith.mulf %139, %142 : vector<1x16x64xf32>
    %144 = arith.addf %138, %143 : vector<1x16x64xf32>
    %145 = vector.extract_strided_slice %121 {offsets = [0, 0, 0], sizes = [1, 16, 64], strides = [1, 1, 1]} : vector<1x40x64xf32> to vector<1x16x64xf32>
    %146 = vector.extract_strided_slice %70 {offsets = [3, 0], sizes = [1, 64], strides = [1, 1]} : vector<32x64xf32> to vector<1x64xf32>
    %147 = vector.shape_cast %146 : vector<1x64xf32> to vector<1x1x64xf32>
    %148 = vector.broadcast %147 : vector<1x1x64xf32> to vector<1x16x64xf32>
    %149 = arith.mulf %145, %148 : vector<1x16x64xf32>
    %150 = arith.addf %144, %149 : vector<1x16x64xf32>
    %151 = vector.extract_strided_slice %122 {offsets = [0, 0, 0], sizes = [1, 16, 64], strides = [1, 1, 1]} : vector<1x40x64xf32> to vector<1x16x64xf32>
    %152 = vector.extract_strided_slice %70 {offsets = [4, 0], sizes = [1, 64], strides = [1, 1]} : vector<32x64xf32> to vector<1x64xf32>
    %153 = vector.shape_cast %152 : vector<1x64xf32> to vector<1x1x64xf32>
    %154 = vector.broadcast %153 : vector<1x1x64xf32> to vector<1x16x64xf32>
    %155 = arith.mulf %151, %154 : vector<1x16x64xf32>
    %156 = arith.addf %150, %155 : vector<1x16x64xf32>
    %157 = vector.extract_strided_slice %123 {offsets = [0, 0, 0], sizes = [1, 16, 64], strides = [1, 1, 1]} : vector<1x40x64xf32> to vector<1x16x64xf32>
    %158 = vector.extract_strided_slice %70 {offsets = [5, 0], sizes = [1, 64], strides = [1, 1]} : vector<32x64xf32> to vector<1x64xf32>
    %159 = vector.shape_cast %158 : vector<1x64xf32> to vector<1x1x64xf32>
    %160 = vector.broadcast %159 : vector<1x1x64xf32> to vector<1x16x64xf32>
    %161 = arith.mulf %157, %160 : vector<1x16x64xf32>
    %162 = arith.addf %156, %161 : vector<1x16x64xf32>
    %163 = vector.extract_strided_slice %124 {offsets = [0, 0, 0], sizes = [1, 16, 64], strides = [1, 1, 1]} : vector<1x40x64xf32> to vector<1x16x64xf32>
    %164 = vector.extract_strided_slice %70 {offsets = [6, 0], sizes = [1, 64], strides = [1, 1]} : vector<32x64xf32> to vector<1x64xf32>
    %165 = vector.shape_cast %164 : vector<1x64xf32> to vector<1x1x64xf32>
    %166 = vector.broadcast %165 : vector<1x1x64xf32> to vector<1x16x64xf32>
    %167 = arith.mulf %163, %166 : vector<1x16x64xf32>
    %168 = arith.addf %162, %167 : vector<1x16x64xf32>
    %169 = vector.extract_strided_slice %125 {offsets = [0, 0, 0], sizes = [1, 16, 64], strides = [1, 1, 1]} : vector<1x40x64xf32> to vector<1x16x64xf32>
    %170 = vector.extract_strided_slice %70 {offsets = [7, 0], sizes = [1, 64], strides = [1, 1]} : vector<32x64xf32> to vector<1x64xf32>
    %171 = vector.shape_cast %170 : vector<1x64xf32> to vector<1x1x64xf32>
    %172 = vector.broadcast %171 : vector<1x1x64xf32> to vector<1x16x64xf32>
    %173 = arith.mulf %169, %172 : vector<1x16x64xf32>
    %174 = arith.addf %168, %173 : vector<1x16x64xf32>
    %175 = arith.addf %127, %174 : vector<1x16x64xf32>
    %176 = vector.extract_strided_slice %118 {offsets = [0, 8, 0], sizes = [1, 16, 64], strides = [1, 1, 1]} : vector<1x40x64xf32> to vector<1x16x64xf32>
    %177 = vector.extract_strided_slice %70 {offsets = [8, 0], sizes = [1, 64], strides = [1, 1]} : vector<32x64xf32> to vector<1x64xf32>
    %178 = vector.shape_cast %177 : vector<1x64xf32> to vector<1x1x64xf32>
    %179 = vector.broadcast %178 : vector<1x1x64xf32> to vector<1x16x64xf32>
    %180 = arith.mulf %176, %179 : vector<1x16x64xf32>
    %181 = vector.extract_strided_slice %119 {offsets = [0, 8, 0], sizes = [1, 16, 64], strides = [1, 1, 1]} : vector<1x40x64xf32> to vector<1x16x64xf32>
    %182 = vector.extract_strided_slice %70 {offsets = [9, 0], sizes = [1, 64], strides = [1, 1]} : vector<32x64xf32> to vector<1x64xf32>
    %183 = vector.shape_cast %182 : vector<1x64xf32> to vector<1x1x64xf32>
    %184 = vector.broadcast %183 : vector<1x1x64xf32> to vector<1x16x64xf32>
    %185 = arith.mulf %181, %184 : vector<1x16x64xf32>
    %186 = arith.addf %180, %185 : vector<1x16x64xf32>
    %187 = vector.extract_strided_slice %120 {offsets = [0, 8, 0], sizes = [1, 16, 64], strides = [1, 1, 1]} : vector<1x40x64xf32> to vector<1x16x64xf32>
    %188 = vector.extract_strided_slice %70 {offsets = [10, 0], sizes = [1, 64], strides = [1, 1]} : vector<32x64xf32> to vector<1x64xf32>
    %189 = vector.shape_cast %188 : vector<1x64xf32> to vector<1x1x64xf32>
    %190 = vector.broadcast %189 : vector<1x1x64xf32> to vector<1x16x64xf32>
    %191 = arith.mulf %187, %190 : vector<1x16x64xf32>
    %192 = arith.addf %186, %191 : vector<1x16x64xf32>
    %193 = vector.extract_strided_slice %121 {offsets = [0, 8, 0], sizes = [1, 16, 64], strides = [1, 1, 1]} : vector<1x40x64xf32> to vector<1x16x64xf32>
    %194 = vector.extract_strided_slice %70 {offsets = [11, 0], sizes = [1, 64], strides = [1, 1]} : vector<32x64xf32> to vector<1x64xf32>
    %195 = vector.shape_cast %194 : vector<1x64xf32> to vector<1x1x64xf32>
    %196 = vector.broadcast %195 : vector<1x1x64xf32> to vector<1x16x64xf32>
    %197 = arith.mulf %193, %196 : vector<1x16x64xf32>
    %198 = arith.addf %192, %197 : vector<1x16x64xf32>
    %199 = vector.extract_strided_slice %122 {offsets = [0, 8, 0], sizes = [1, 16, 64], strides = [1, 1, 1]} : vector<1x40x64xf32> to vector<1x16x64xf32>
    %200 = vector.extract_strided_slice %70 {offsets = [12, 0], sizes = [1, 64], strides = [1, 1]} : vector<32x64xf32> to vector<1x64xf32>
    %201 = vector.shape_cast %200 : vector<1x64xf32> to vector<1x1x64xf32>
    %202 = vector.broadcast %201 : vector<1x1x64xf32> to vector<1x16x64xf32>
    %203 = arith.mulf %199, %202 : vector<1x16x64xf32>
    %204 = arith.addf %198, %203 : vector<1x16x64xf32>
    %205 = vector.extract_strided_slice %123 {offsets = [0, 8, 0], sizes = [1, 16, 64], strides = [1, 1, 1]} : vector<1x40x64xf32> to vector<1x16x64xf32>
    %206 = vector.extract_strided_slice %70 {offsets = [13, 0], sizes = [1, 64], strides = [1, 1]} : vector<32x64xf32> to vector<1x64xf32>
    %207 = vector.shape_cast %206 : vector<1x64xf32> to vector<1x1x64xf32>
    %208 = vector.broadcast %207 : vector<1x1x64xf32> to vector<1x16x64xf32>
    %209 = arith.mulf %205, %208 : vector<1x16x64xf32>
    %210 = arith.addf %204, %209 : vector<1x16x64xf32>
    %211 = vector.extract_strided_slice %124 {offsets = [0, 8, 0], sizes = [1, 16, 64], strides = [1, 1, 1]} : vector<1x40x64xf32> to vector<1x16x64xf32>
    %212 = vector.extract_strided_slice %70 {offsets = [14, 0], sizes = [1, 64], strides = [1, 1]} : vector<32x64xf32> to vector<1x64xf32>
    %213 = vector.shape_cast %212 : vector<1x64xf32> to vector<1x1x64xf32>
    %214 = vector.broadcast %213 : vector<1x1x64xf32> to vector<1x16x64xf32>
    %215 = arith.mulf %211, %214 : vector<1x16x64xf32>
    %216 = arith.addf %210, %215 : vector<1x16x64xf32>
    %217 = vector.extract_strided_slice %125 {offsets = [0, 8, 0], sizes = [1, 16, 64], strides = [1, 1, 1]} : vector<1x40x64xf32> to vector<1x16x64xf32>
    %218 = vector.extract_strided_slice %70 {offsets = [15, 0], sizes = [1, 64], strides = [1, 1]} : vector<32x64xf32> to vector<1x64xf32>
    %219 = vector.shape_cast %218 : vector<1x64xf32> to vector<1x1x64xf32>
    %220 = vector.broadcast %219 : vector<1x1x64xf32> to vector<1x16x64xf32>
    %221 = arith.mulf %217, %220 : vector<1x16x64xf32>
    %222 = arith.addf %216, %221 : vector<1x16x64xf32>
    %223 = arith.addf %175, %222 : vector<1x16x64xf32>
    %224 = vector.extract_strided_slice %118 {offsets = [0, 16, 0], sizes = [1, 16, 64], strides = [1, 1, 1]} : vector<1x40x64xf32> to vector<1x16x64xf32>
    %225 = vector.extract_strided_slice %70 {offsets = [16, 0], sizes = [1, 64], strides = [1, 1]} : vector<32x64xf32> to vector<1x64xf32>
    %226 = vector.shape_cast %225 : vector<1x64xf32> to vector<1x1x64xf32>
    %227 = vector.broadcast %226 : vector<1x1x64xf32> to vector<1x16x64xf32>
    %228 = arith.mulf %224, %227 : vector<1x16x64xf32>
    %229 = vector.extract_strided_slice %119 {offsets = [0, 16, 0], sizes = [1, 16, 64], strides = [1, 1, 1]} : vector<1x40x64xf32> to vector<1x16x64xf32>
    %230 = vector.extract_strided_slice %70 {offsets = [17, 0], sizes = [1, 64], strides = [1, 1]} : vector<32x64xf32> to vector<1x64xf32>
    %231 = vector.shape_cast %230 : vector<1x64xf32> to vector<1x1x64xf32>
    %232 = vector.broadcast %231 : vector<1x1x64xf32> to vector<1x16x64xf32>
    %233 = arith.mulf %229, %232 : vector<1x16x64xf32>
    %234 = arith.addf %228, %233 : vector<1x16x64xf32>
    %235 = vector.extract_strided_slice %120 {offsets = [0, 16, 0], sizes = [1, 16, 64], strides = [1, 1, 1]} : vector<1x40x64xf32> to vector<1x16x64xf32>
    %236 = vector.extract_strided_slice %70 {offsets = [18, 0], sizes = [1, 64], strides = [1, 1]} : vector<32x64xf32> to vector<1x64xf32>
    %237 = vector.shape_cast %236 : vector<1x64xf32> to vector<1x1x64xf32>
    %238 = vector.broadcast %237 : vector<1x1x64xf32> to vector<1x16x64xf32>
    %239 = arith.mulf %235, %238 : vector<1x16x64xf32>
    %240 = arith.addf %234, %239 : vector<1x16x64xf32>
    %241 = vector.extract_strided_slice %121 {offsets = [0, 16, 0], sizes = [1, 16, 64], strides = [1, 1, 1]} : vector<1x40x64xf32> to vector<1x16x64xf32>
    %242 = vector.extract_strided_slice %70 {offsets = [19, 0], sizes = [1, 64], strides = [1, 1]} : vector<32x64xf32> to vector<1x64xf32>
    %243 = vector.shape_cast %242 : vector<1x64xf32> to vector<1x1x64xf32>
    %244 = vector.broadcast %243 : vector<1x1x64xf32> to vector<1x16x64xf32>
    %245 = arith.mulf %241, %244 : vector<1x16x64xf32>
    %246 = arith.addf %240, %245 : vector<1x16x64xf32>
    %247 = vector.extract_strided_slice %122 {offsets = [0, 16, 0], sizes = [1, 16, 64], strides = [1, 1, 1]} : vector<1x40x64xf32> to vector<1x16x64xf32>
    %248 = vector.extract_strided_slice %70 {offsets = [20, 0], sizes = [1, 64], strides = [1, 1]} : vector<32x64xf32> to vector<1x64xf32>
    %249 = vector.shape_cast %248 : vector<1x64xf32> to vector<1x1x64xf32>
    %250 = vector.broadcast %249 : vector<1x1x64xf32> to vector<1x16x64xf32>
    %251 = arith.mulf %247, %250 : vector<1x16x64xf32>
    %252 = arith.addf %246, %251 : vector<1x16x64xf32>
    %253 = vector.extract_strided_slice %123 {offsets = [0, 16, 0], sizes = [1, 16, 64], strides = [1, 1, 1]} : vector<1x40x64xf32> to vector<1x16x64xf32>
    %254 = vector.extract_strided_slice %70 {offsets = [21, 0], sizes = [1, 64], strides = [1, 1]} : vector<32x64xf32> to vector<1x64xf32>
    %255 = vector.shape_cast %254 : vector<1x64xf32> to vector<1x1x64xf32>
    %256 = vector.broadcast %255 : vector<1x1x64xf32> to vector<1x16x64xf32>
    %257 = arith.mulf %253, %256 : vector<1x16x64xf32>
    %258 = arith.addf %252, %257 : vector<1x16x64xf32>
    %259 = vector.extract_strided_slice %124 {offsets = [0, 16, 0], sizes = [1, 16, 64], strides = [1, 1, 1]} : vector<1x40x64xf32> to vector<1x16x64xf32>
    %260 = vector.extract_strided_slice %70 {offsets = [22, 0], sizes = [1, 64], strides = [1, 1]} : vector<32x64xf32> to vector<1x64xf32>
    %261 = vector.shape_cast %260 : vector<1x64xf32> to vector<1x1x64xf32>
    %262 = vector.broadcast %261 : vector<1x1x64xf32> to vector<1x16x64xf32>
    %263 = arith.mulf %259, %262 : vector<1x16x64xf32>
    %264 = arith.addf %258, %263 : vector<1x16x64xf32>
    %265 = vector.extract_strided_slice %125 {offsets = [0, 16, 0], sizes = [1, 16, 64], strides = [1, 1, 1]} : vector<1x40x64xf32> to vector<1x16x64xf32>
    %266 = vector.extract_strided_slice %70 {offsets = [23, 0], sizes = [1, 64], strides = [1, 1]} : vector<32x64xf32> to vector<1x64xf32>
    %267 = vector.shape_cast %266 : vector<1x64xf32> to vector<1x1x64xf32>
    %268 = vector.broadcast %267 : vector<1x1x64xf32> to vector<1x16x64xf32>
    %269 = arith.mulf %265, %268 : vector<1x16x64xf32>
    %270 = arith.addf %264, %269 : vector<1x16x64xf32>
    %271 = arith.addf %223, %270 : vector<1x16x64xf32>
    %272 = vector.extract_strided_slice %118 {offsets = [0, 24, 0], sizes = [1, 16, 64], strides = [1, 1, 1]} : vector<1x40x64xf32> to vector<1x16x64xf32>
    %273 = vector.extract_strided_slice %70 {offsets = [24, 0], sizes = [1, 64], strides = [1, 1]} : vector<32x64xf32> to vector<1x64xf32>
    %274 = vector.shape_cast %273 : vector<1x64xf32> to vector<1x1x64xf32>
    %275 = vector.broadcast %274 : vector<1x1x64xf32> to vector<1x16x64xf32>
    %276 = arith.mulf %272, %275 : vector<1x16x64xf32>
    %277 = vector.extract_strided_slice %119 {offsets = [0, 24, 0], sizes = [1, 16, 64], strides = [1, 1, 1]} : vector<1x40x64xf32> to vector<1x16x64xf32>
    %278 = vector.extract_strided_slice %70 {offsets = [25, 0], sizes = [1, 64], strides = [1, 1]} : vector<32x64xf32> to vector<1x64xf32>
    %279 = vector.shape_cast %278 : vector<1x64xf32> to vector<1x1x64xf32>
    %280 = vector.broadcast %279 : vector<1x1x64xf32> to vector<1x16x64xf32>
    %281 = arith.mulf %277, %280 : vector<1x16x64xf32>
    %282 = arith.addf %276, %281 : vector<1x16x64xf32>
    %283 = vector.extract_strided_slice %120 {offsets = [0, 24, 0], sizes = [1, 16, 64], strides = [1, 1, 1]} : vector<1x40x64xf32> to vector<1x16x64xf32>
    %284 = vector.extract_strided_slice %70 {offsets = [26, 0], sizes = [1, 64], strides = [1, 1]} : vector<32x64xf32> to vector<1x64xf32>
    %285 = vector.shape_cast %284 : vector<1x64xf32> to vector<1x1x64xf32>
    %286 = vector.broadcast %285 : vector<1x1x64xf32> to vector<1x16x64xf32>
    %287 = arith.mulf %283, %286 : vector<1x16x64xf32>
    %288 = arith.addf %282, %287 : vector<1x16x64xf32>
    %289 = vector.extract_strided_slice %121 {offsets = [0, 24, 0], sizes = [1, 16, 64], strides = [1, 1, 1]} : vector<1x40x64xf32> to vector<1x16x64xf32>
    %290 = vector.extract_strided_slice %70 {offsets = [27, 0], sizes = [1, 64], strides = [1, 1]} : vector<32x64xf32> to vector<1x64xf32>
    %291 = vector.shape_cast %290 : vector<1x64xf32> to vector<1x1x64xf32>
    %292 = vector.broadcast %291 : vector<1x1x64xf32> to vector<1x16x64xf32>
    %293 = arith.mulf %289, %292 : vector<1x16x64xf32>
    %294 = arith.addf %288, %293 : vector<1x16x64xf32>
    %295 = vector.extract_strided_slice %122 {offsets = [0, 24, 0], sizes = [1, 16, 64], strides = [1, 1, 1]} : vector<1x40x64xf32> to vector<1x16x64xf32>
    %296 = vector.extract_strided_slice %70 {offsets = [28, 0], sizes = [1, 64], strides = [1, 1]} : vector<32x64xf32> to vector<1x64xf32>
    %297 = vector.shape_cast %296 : vector<1x64xf32> to vector<1x1x64xf32>
    %298 = vector.broadcast %297 : vector<1x1x64xf32> to vector<1x16x64xf32>
    %299 = arith.mulf %295, %298 : vector<1x16x64xf32>
    %300 = arith.addf %294, %299 : vector<1x16x64xf32>
    %301 = vector.extract_strided_slice %123 {offsets = [0, 24, 0], sizes = [1, 16, 64], strides = [1, 1, 1]} : vector<1x40x64xf32> to vector<1x16x64xf32>
    %302 = vector.extract_strided_slice %70 {offsets = [29, 0], sizes = [1, 64], strides = [1, 1]} : vector<32x64xf32> to vector<1x64xf32>
    %303 = vector.shape_cast %302 : vector<1x64xf32> to vector<1x1x64xf32>
    %304 = vector.broadcast %303 : vector<1x1x64xf32> to vector<1x16x64xf32>
    %305 = arith.mulf %301, %304 : vector<1x16x64xf32>
    %306 = arith.addf %300, %305 : vector<1x16x64xf32>
    %307 = vector.extract_strided_slice %124 {offsets = [0, 24, 0], sizes = [1, 16, 64], strides = [1, 1, 1]} : vector<1x40x64xf32> to vector<1x16x64xf32>
    %308 = vector.extract_strided_slice %70 {offsets = [30, 0], sizes = [1, 64], strides = [1, 1]} : vector<32x64xf32> to vector<1x64xf32>
    %309 = vector.shape_cast %308 : vector<1x64xf32> to vector<1x1x64xf32>
    %310 = vector.broadcast %309 : vector<1x1x64xf32> to vector<1x16x64xf32>
    %311 = arith.mulf %307, %310 : vector<1x16x64xf32>
    %312 = arith.addf %306, %311 : vector<1x16x64xf32>
    %313 = arith.addf %271, %312 : vector<1x16x64xf32>
    %314 = arith.mulf %313, %313 : vector<1x16x64xf32>
    %315 = arith.mulf %313, %314 : vector<1x16x64xf32>
    %cst_52 = arith.constant 4.471500e-02 : f32
    %316 = vector.broadcast %cst_52 : f32 to vector<1x16x64xf32>
    %317 = arith.mulf %316, %315 : vector<1x16x64xf32>
    %318 = arith.addf %313, %317 : vector<1x16x64xf32>
    %cst_53 = arith.constant 0.797884583 : f32
    %319 = vector.broadcast %cst_53 : f32 to vector<1x16x64xf32>
    %320 = arith.mulf %319, %318 : vector<1x16x64xf32>
    %321 = math.tanh %320 : vector<1x16x64xf32>
    %cst_54 = arith.constant 1.000000e+00 : f32
    %322 = vector.broadcast %cst_54 : f32 to vector<1x16x64xf32>
    %323 = arith.addf %322, %321 : vector<1x16x64xf32>
    %cst_55 = arith.constant 5.000000e-01 : f32
    %324 = vector.broadcast %cst_55 : f32 to vector<1x16x64xf32>
    %325 = arith.mulf %324, %323 : vector<1x16x64xf32>
    %326 = arith.mulf %313, %325 : vector<1x16x64xf32>
    %327 = vector.shape_cast %326 : vector<1x16x64xf32> to vector<16x64xf32>
    %328 = arith.truncf %327 : vector<16x64xf32> to vector<16x64xbf16>
    %cst_56 = arith.constant dense<0.000000e+00> : vector<16x32xf32>
    %329 = tpu.matmul %328, %69, %cst_56 {dimension_numbers = #tpu.dot_dimension_numbers<[1], [0], [0], [1], [0, 0, 1, 1], [], []>} : vector<16x64xbf16>, vector<64x32xbf16>, vector<16x32xf32> -> vector<16x32xf32>
    %330 = vector.broadcast %65 : vector<1x32xf32> to vector<16x32xf32>
    %331 = arith.addf %329, %330 : vector<16x32xf32>
    %332 = vector.shape_cast %331 : vector<16x32xf32> to vector<1x16x32xf32>
    %333 = arith.addf %62, %332 : vector<1x16x32xf32>
    %c5 = arith.constant 5 : index
    %c0_57 = arith.constant 0 : index
    %334 = vector.load %arg10[%c5, %c0_57] : memref<10x32xf32, #tpu.memory_space<vmem>>, vector<1x32xf32>
    %c7 = arith.constant 7 : index
    %c0_58 = arith.constant 0 : index
    %335 = vector.load %arg10[%c7, %c0_58] : memref<10x32xf32, #tpu.memory_space<vmem>>, vector<1x32xf32>
    %c9 = arith.constant 9 : index
    %c0_59 = arith.constant 0 : index
    %336 = vector.load %arg10[%c9, %c0_59] : memref<10x32xf32, #tpu.memory_space<vmem>>, vector<1x32xf32>
    %c1_60 = arith.constant 1 : index
    %c0_61 = arith.constant 0 : index
    %337 = vector.load %arg12[%c1_60, %c0_61] : memref<2x128xf32, #tpu.memory_space<vmem>>, vector<1x128xf32>
    %c2_62 = arith.constant 2 : index
    %c0_63 = arith.constant 0 : index
    %338 = vector.load %arg11[%c2_62, %c0_63] : memref<3x64xf32, #tpu.memory_space<vmem>>, vector<1x64xf32>
    %c96 = arith.constant 96 : index
    %c0_64 = arith.constant 0 : index
    %339 = vector.load %arg7[%c96, %c0_64] : memref<192x128xbf16, #tpu.memory_space<vmem>>, vector<96x128xbf16>
    %c64 = arith.constant 64 : index
    %c0_65 = arith.constant 0 : index
    %340 = vector.load %arg8[%c64, %c0_65] : memref<128x32xbf16, #tpu.memory_space<vmem>>, vector<64x32xbf16>
    %c32 = arith.constant 32 : index
    %c0_66 = arith.constant 0 : index
    %341 = vector.load %arg9[%c32, %c0_66] : memref<64x64xf32, #tpu.memory_space<vmem>>, vector<32x64xf32>
    %cst_67 = arith.constant dense<0.000000e+00> : vector<1x16xf32>
    %342 = vector.multi_reduction <add>, %333, %cst_67 [2] : vector<1x16x32xf32> to vector<1x16xf32>
    %343 = vector.shape_cast %342 : vector<1x16xf32> to vector<1x16x1xf32>
    %cst_68 = arith.constant 3.200000e+01 : f32
    %344 = vector.broadcast %cst_68 : f32 to vector<1x16x1xf32>
    %345 = arith.divf %343, %344 : vector<1x16x1xf32>
    %346 = vector.broadcast %345 : vector<1x16x1xf32> to vector<1x16x32xf32>
    %347 = arith.subf %333, %346 : vector<1x16x32xf32>
    %348 = arith.mulf %347, %347 : vector<1x16x32xf32>
    %cst_69 = arith.constant dense<0.000000e+00> : vector<1x16xf32>
    %349 = vector.multi_reduction <add>, %348, %cst_69 [2] : vector<1x16x32xf32> to vector<1x16xf32>
    %350 = vector.shape_cast %349 : vector<1x16xf32> to vector<1x16x1xf32>
    %cst_70 = arith.constant 3.200000e+01 : f32
    %351 = vector.broadcast %cst_70 : f32 to vector<1x16x1xf32>
    %352 = arith.divf %350, %351 : vector<1x16x1xf32>
    %353 = vector.broadcast %345 : vector<1x16x1xf32> to vector<1x16x32xf32>
    %354 = arith.subf %333, %353 : vector<1x16x32xf32>
    %cst_71 = arith.constant 9.99999974E-6 : f32
    %355 = vector.broadcast %cst_71 : f32 to vector<1x16x1xf32>
    %356 = arith.addf %352, %355 : vector<1x16x1xf32>
    %357 = math.rsqrt %356 : vector<1x16x1xf32>
    %358 = vector.broadcast %357 : vector<1x16x1xf32> to vector<1x16x32xf32>
    %359 = arith.mulf %354, %358 : vector<1x16x32xf32>
    %360 = vector.shape_cast %334 : vector<1x32xf32> to vector<1x1x32xf32>
    %361 = vector.broadcast %360 : vector<1x1x32xf32> to vector<1x16x32xf32>
    %362 = arith.mulf %359, %361 : vector<1x16x32xf32>
    %363 = vector.shape_cast %335 : vector<1x32xf32> to vector<1x1x32xf32>
    %364 = vector.broadcast %363 : vector<1x1x32xf32> to vector<1x16x32xf32>
    %365 = arith.addf %362, %364 : vector<1x16x32xf32>
    %366 = arith.truncf %365 : vector<1x16x32xf32> to vector<1x16x32xbf16>
    %cst_72 = arith.constant 0.000000e+00 : bf16
    %367 = vector.broadcast %cst_72 : bf16 to vector<1x1x32xbf16>
    %368 = tpu.concatenate %367, %366, %367 in 1 : vector<1x1x32xbf16>, vector<1x16x32xbf16>, vector<1x1x32xbf16> -> vector<1x18x32xbf16>
    %369 = vector.extract_strided_slice %368 {offsets = [0, 0, 0], sizes = [1, 16, 32], strides = [1, 1, 1]} : vector<1x18x32xbf16> to vector<1x16x32xbf16>
    %370 = vector.extract_strided_slice %368 {offsets = [0, 1, 0], sizes = [1, 16, 32], strides = [1, 1, 1]} : vector<1x18x32xbf16> to vector<1x16x32xbf16>
    %371 = vector.extract_strided_slice %368 {offsets = [0, 2, 0], sizes = [1, 16, 32], strides = [1, 1, 1]} : vector<1x18x32xbf16> to vector<1x16x32xbf16>
    %372 = tpu.concatenate %369, %370, %371 in 2 : vector<1x16x32xbf16>, vector<1x16x32xbf16>, vector<1x16x32xbf16> -> vector<1x16x96xbf16>
    %373 = vector.shape_cast %372 : vector<1x16x96xbf16> to vector<16x96xbf16>
    %cst_73 = arith.constant dense<0.000000e+00> : vector<16x128xf32>
    %374 = tpu.matmul %373, %339, %cst_73 {dimension_numbers = #tpu.dot_dimension_numbers<[1], [0], [0], [1], [0, 0, 1, 1], [], []>} : vector<16x96xbf16>, vector<96x128xbf16>, vector<16x128xf32> -> vector<16x128xf32>
    %375 = vector.broadcast %337 : vector<1x128xf32> to vector<16x128xf32>
    %376 = arith.addf %374, %375 : vector<16x128xf32>
    %377 = vector.shape_cast %376 : vector<16x128xf32> to vector<1x16x128xf32>
    %378 = vector.extract_strided_slice %377 {offsets = [0, 0, 0], sizes = [1, 16, 64], strides = [1, 1, 1]} : vector<1x16x128xf32> to vector<1x16x64xf32>
    %379 = vector.extract_strided_slice %377 {offsets = [0, 0, 64], sizes = [1, 16, 64], strides = [1, 1, 1]} : vector<1x16x128xf32> to vector<1x16x64xf32>
    %380 = arith.negf %379 : vector<1x16x64xf32>
    %381 = math.exp %380 : vector<1x16x64xf32>
    %cst_74 = arith.constant 1.000000e+00 : f32
    %382 = vector.broadcast %cst_74 : f32 to vector<1x16x64xf32>
    %383 = arith.addf %382, %381 : vector<1x16x64xf32>
    %384 = arith.divf %382, %383 : vector<1x16x64xf32>
    %385 = arith.mulf %378, %384 : vector<1x16x64xf32>
    %cst_75 = arith.constant 0.000000e+00 : f32
    %386 = vector.broadcast %cst_75 : f32 to vector<1x15x64xf32>
    %cst_76 = arith.constant 0.000000e+00 : f32
    %387 = vector.broadcast %cst_76 : f32 to vector<1x17x64xf32>
    %388 = tpu.concatenate %386, %385, %387 in 1 : vector<1x15x64xf32>, vector<1x16x64xf32>, vector<1x17x64xf32> -> vector<1x48x64xf32>
    %389 = vector.extract_strided_slice %388 {offsets = [0, 0, 0], sizes = [1, 40, 64], strides = [1, 1, 1]} : vector<1x48x64xf32> to vector<1x40x64xf32>
    %390 = vector.extract_strided_slice %388 {offsets = [0, 1, 0], sizes = [1, 40, 64], strides = [1, 1, 1]} : vector<1x48x64xf32> to vector<1x40x64xf32>
    %391 = vector.extract_strided_slice %388 {offsets = [0, 2, 0], sizes = [1, 40, 64], strides = [1, 1, 1]} : vector<1x48x64xf32> to vector<1x40x64xf32>
    %392 = vector.extract_strided_slice %388 {offsets = [0, 3, 0], sizes = [1, 40, 64], strides = [1, 1, 1]} : vector<1x48x64xf32> to vector<1x40x64xf32>
    %393 = vector.extract_strided_slice %388 {offsets = [0, 4, 0], sizes = [1, 40, 64], strides = [1, 1, 1]} : vector<1x48x64xf32> to vector<1x40x64xf32>
    %394 = vector.extract_strided_slice %388 {offsets = [0, 5, 0], sizes = [1, 40, 64], strides = [1, 1, 1]} : vector<1x48x64xf32> to vector<1x40x64xf32>
    %395 = vector.extract_strided_slice %388 {offsets = [0, 6, 0], sizes = [1, 40, 64], strides = [1, 1, 1]} : vector<1x48x64xf32> to vector<1x40x64xf32>
    %396 = vector.extract_strided_slice %388 {offsets = [0, 7, 0], sizes = [1, 40, 64], strides = [1, 1, 1]} : vector<1x48x64xf32> to vector<1x40x64xf32>
    %397 = vector.shape_cast %338 : vector<1x64xf32> to vector<1x1x64xf32>
    %398 = vector.broadcast %397 : vector<1x1x64xf32> to vector<1x16x64xf32>
    %399 = vector.extract_strided_slice %389 {offsets = [0, 0, 0], sizes = [1, 16, 64], strides = [1, 1, 1]} : vector<1x40x64xf32> to vector<1x16x64xf32>
    %400 = vector.extract_strided_slice %341 {offsets = [0, 0], sizes = [1, 64], strides = [1, 1]} : vector<32x64xf32> to vector<1x64xf32>
    %401 = vector.shape_cast %400 : vector<1x64xf32> to vector<1x1x64xf32>
    %402 = vector.broadcast %401 : vector<1x1x64xf32> to vector<1x16x64xf32>
    %403 = arith.mulf %399, %402 : vector<1x16x64xf32>
    %404 = vector.extract_strided_slice %390 {offsets = [0, 0, 0], sizes = [1, 16, 64], strides = [1, 1, 1]} : vector<1x40x64xf32> to vector<1x16x64xf32>
    %405 = vector.extract_strided_slice %341 {offsets = [1, 0], sizes = [1, 64], strides = [1, 1]} : vector<32x64xf32> to vector<1x64xf32>
    %406 = vector.shape_cast %405 : vector<1x64xf32> to vector<1x1x64xf32>
    %407 = vector.broadcast %406 : vector<1x1x64xf32> to vector<1x16x64xf32>
    %408 = arith.mulf %404, %407 : vector<1x16x64xf32>
    %409 = arith.addf %403, %408 : vector<1x16x64xf32>
    %410 = vector.extract_strided_slice %391 {offsets = [0, 0, 0], sizes = [1, 16, 64], strides = [1, 1, 1]} : vector<1x40x64xf32> to vector<1x16x64xf32>
    %411 = vector.extract_strided_slice %341 {offsets = [2, 0], sizes = [1, 64], strides = [1, 1]} : vector<32x64xf32> to vector<1x64xf32>
    %412 = vector.shape_cast %411 : vector<1x64xf32> to vector<1x1x64xf32>
    %413 = vector.broadcast %412 : vector<1x1x64xf32> to vector<1x16x64xf32>
    %414 = arith.mulf %410, %413 : vector<1x16x64xf32>
    %415 = arith.addf %409, %414 : vector<1x16x64xf32>
    %416 = vector.extract_strided_slice %392 {offsets = [0, 0, 0], sizes = [1, 16, 64], strides = [1, 1, 1]} : vector<1x40x64xf32> to vector<1x16x64xf32>
    %417 = vector.extract_strided_slice %341 {offsets = [3, 0], sizes = [1, 64], strides = [1, 1]} : vector<32x64xf32> to vector<1x64xf32>
    %418 = vector.shape_cast %417 : vector<1x64xf32> to vector<1x1x64xf32>
    %419 = vector.broadcast %418 : vector<1x1x64xf32> to vector<1x16x64xf32>
    %420 = arith.mulf %416, %419 : vector<1x16x64xf32>
    %421 = arith.addf %415, %420 : vector<1x16x64xf32>
    %422 = vector.extract_strided_slice %393 {offsets = [0, 0, 0], sizes = [1, 16, 64], strides = [1, 1, 1]} : vector<1x40x64xf32> to vector<1x16x64xf32>
    %423 = vector.extract_strided_slice %341 {offsets = [4, 0], sizes = [1, 64], strides = [1, 1]} : vector<32x64xf32> to vector<1x64xf32>
    %424 = vector.shape_cast %423 : vector<1x64xf32> to vector<1x1x64xf32>
    %425 = vector.broadcast %424 : vector<1x1x64xf32> to vector<1x16x64xf32>
    %426 = arith.mulf %422, %425 : vector<1x16x64xf32>
    %427 = arith.addf %421, %426 : vector<1x16x64xf32>
    %428 = vector.extract_strided_slice %394 {offsets = [0, 0, 0], sizes = [1, 16, 64], strides = [1, 1, 1]} : vector<1x40x64xf32> to vector<1x16x64xf32>
    %429 = vector.extract_strided_slice %341 {offsets = [5, 0], sizes = [1, 64], strides = [1, 1]} : vector<32x64xf32> to vector<1x64xf32>
    %430 = vector.shape_cast %429 : vector<1x64xf32> to vector<1x1x64xf32>
    %431 = vector.broadcast %430 : vector<1x1x64xf32> to vector<1x16x64xf32>
    %432 = arith.mulf %428, %431 : vector<1x16x64xf32>
    %433 = arith.addf %427, %432 : vector<1x16x64xf32>
    %434 = vector.extract_strided_slice %395 {offsets = [0, 0, 0], sizes = [1, 16, 64], strides = [1, 1, 1]} : vector<1x40x64xf32> to vector<1x16x64xf32>
    %435 = vector.extract_strided_slice %341 {offsets = [6, 0], sizes = [1, 64], strides = [1, 1]} : vector<32x64xf32> to vector<1x64xf32>
    %436 = vector.shape_cast %435 : vector<1x64xf32> to vector<1x1x64xf32>
    %437 = vector.broadcast %436 : vector<1x1x64xf32> to vector<1x16x64xf32>
    %438 = arith.mulf %434, %437 : vector<1x16x64xf32>
    %439 = arith.addf %433, %438 : vector<1x16x64xf32>
    %440 = vector.extract_strided_slice %396 {offsets = [0, 0, 0], sizes = [1, 16, 64], strides = [1, 1, 1]} : vector<1x40x64xf32> to vector<1x16x64xf32>
    %441 = vector.extract_strided_slice %341 {offsets = [7, 0], sizes = [1, 64], strides = [1, 1]} : vector<32x64xf32> to vector<1x64xf32>
    %442 = vector.shape_cast %441 : vector<1x64xf32> to vector<1x1x64xf32>
    %443 = vector.broadcast %442 : vector<1x1x64xf32> to vector<1x16x64xf32>
    %444 = arith.mulf %440, %443 : vector<1x16x64xf32>
    %445 = arith.addf %439, %444 : vector<1x16x64xf32>
    %446 = arith.addf %398, %445 : vector<1x16x64xf32>
    %447 = vector.extract_strided_slice %389 {offsets = [0, 8, 0], sizes = [1, 16, 64], strides = [1, 1, 1]} : vector<1x40x64xf32> to vector<1x16x64xf32>
    %448 = vector.extract_strided_slice %341 {offsets = [8, 0], sizes = [1, 64], strides = [1, 1]} : vector<32x64xf32> to vector<1x64xf32>
    %449 = vector.shape_cast %448 : vector<1x64xf32> to vector<1x1x64xf32>
    %450 = vector.broadcast %449 : vector<1x1x64xf32> to vector<1x16x64xf32>
    %451 = arith.mulf %447, %450 : vector<1x16x64xf32>
    %452 = vector.extract_strided_slice %390 {offsets = [0, 8, 0], sizes = [1, 16, 64], strides = [1, 1, 1]} : vector<1x40x64xf32> to vector<1x16x64xf32>
    %453 = vector.extract_strided_slice %341 {offsets = [9, 0], sizes = [1, 64], strides = [1, 1]} : vector<32x64xf32> to vector<1x64xf32>
    %454 = vector.shape_cast %453 : vector<1x64xf32> to vector<1x1x64xf32>
    %455 = vector.broadcast %454 : vector<1x1x64xf32> to vector<1x16x64xf32>
    %456 = arith.mulf %452, %455 : vector<1x16x64xf32>
    %457 = arith.addf %451, %456 : vector<1x16x64xf32>
    %458 = vector.extract_strided_slice %391 {offsets = [0, 8, 0], sizes = [1, 16, 64], strides = [1, 1, 1]} : vector<1x40x64xf32> to vector<1x16x64xf32>
    %459 = vector.extract_strided_slice %341 {offsets = [10, 0], sizes = [1, 64], strides = [1, 1]} : vector<32x64xf32> to vector<1x64xf32>
    %460 = vector.shape_cast %459 : vector<1x64xf32> to vector<1x1x64xf32>
    %461 = vector.broadcast %460 : vector<1x1x64xf32> to vector<1x16x64xf32>
    %462 = arith.mulf %458, %461 : vector<1x16x64xf32>
    %463 = arith.addf %457, %462 : vector<1x16x64xf32>
    %464 = vector.extract_strided_slice %392 {offsets = [0, 8, 0], sizes = [1, 16, 64], strides = [1, 1, 1]} : vector<1x40x64xf32> to vector<1x16x64xf32>
    %465 = vector.extract_strided_slice %341 {offsets = [11, 0], sizes = [1, 64], strides = [1, 1]} : vector<32x64xf32> to vector<1x64xf32>
    %466 = vector.shape_cast %465 : vector<1x64xf32> to vector<1x1x64xf32>
    %467 = vector.broadcast %466 : vector<1x1x64xf32> to vector<1x16x64xf32>
    %468 = arith.mulf %464, %467 : vector<1x16x64xf32>
    %469 = arith.addf %463, %468 : vector<1x16x64xf32>
    %470 = vector.extract_strided_slice %393 {offsets = [0, 8, 0], sizes = [1, 16, 64], strides = [1, 1, 1]} : vector<1x40x64xf32> to vector<1x16x64xf32>
    %471 = vector.extract_strided_slice %341 {offsets = [12, 0], sizes = [1, 64], strides = [1, 1]} : vector<32x64xf32> to vector<1x64xf32>
    %472 = vector.shape_cast %471 : vector<1x64xf32> to vector<1x1x64xf32>
    %473 = vector.broadcast %472 : vector<1x1x64xf32> to vector<1x16x64xf32>
    %474 = arith.mulf %470, %473 : vector<1x16x64xf32>
    %475 = arith.addf %469, %474 : vector<1x16x64xf32>
    %476 = vector.extract_strided_slice %394 {offsets = [0, 8, 0], sizes = [1, 16, 64], strides = [1, 1, 1]} : vector<1x40x64xf32> to vector<1x16x64xf32>
    %477 = vector.extract_strided_slice %341 {offsets = [13, 0], sizes = [1, 64], strides = [1, 1]} : vector<32x64xf32> to vector<1x64xf32>
    %478 = vector.shape_cast %477 : vector<1x64xf32> to vector<1x1x64xf32>
    %479 = vector.broadcast %478 : vector<1x1x64xf32> to vector<1x16x64xf32>
    %480 = arith.mulf %476, %479 : vector<1x16x64xf32>
    %481 = arith.addf %475, %480 : vector<1x16x64xf32>
    %482 = vector.extract_strided_slice %395 {offsets = [0, 8, 0], sizes = [1, 16, 64], strides = [1, 1, 1]} : vector<1x40x64xf32> to vector<1x16x64xf32>
    %483 = vector.extract_strided_slice %341 {offsets = [14, 0], sizes = [1, 64], strides = [1, 1]} : vector<32x64xf32> to vector<1x64xf32>
    %484 = vector.shape_cast %483 : vector<1x64xf32> to vector<1x1x64xf32>
    %485 = vector.broadcast %484 : vector<1x1x64xf32> to vector<1x16x64xf32>
    %486 = arith.mulf %482, %485 : vector<1x16x64xf32>
    %487 = arith.addf %481, %486 : vector<1x16x64xf32>
    %488 = vector.extract_strided_slice %396 {offsets = [0, 8, 0], sizes = [1, 16, 64], strides = [1, 1, 1]} : vector<1x40x64xf32> to vector<1x16x64xf32>
    %489 = vector.extract_strided_slice %341 {offsets = [15, 0], sizes = [1, 64], strides = [1, 1]} : vector<32x64xf32> to vector<1x64xf32>
    %490 = vector.shape_cast %489 : vector<1x64xf32> to vector<1x1x64xf32>
    %491 = vector.broadcast %490 : vector<1x1x64xf32> to vector<1x16x64xf32>
    %492 = arith.mulf %488, %491 : vector<1x16x64xf32>
    %493 = arith.addf %487, %492 : vector<1x16x64xf32>
    %494 = arith.addf %446, %493 : vector<1x16x64xf32>
    %495 = vector.extract_strided_slice %389 {offsets = [0, 16, 0], sizes = [1, 16, 64], strides = [1, 1, 1]} : vector<1x40x64xf32> to vector<1x16x64xf32>
    %496 = vector.extract_strided_slice %341 {offsets = [16, 0], sizes = [1, 64], strides = [1, 1]} : vector<32x64xf32> to vector<1x64xf32>
    %497 = vector.shape_cast %496 : vector<1x64xf32> to vector<1x1x64xf32>
    %498 = vector.broadcast %497 : vector<1x1x64xf32> to vector<1x16x64xf32>
    %499 = arith.mulf %495, %498 : vector<1x16x64xf32>
    %500 = vector.extract_strided_slice %390 {offsets = [0, 16, 0], sizes = [1, 16, 64], strides = [1, 1, 1]} : vector<1x40x64xf32> to vector<1x16x64xf32>
    %501 = vector.extract_strided_slice %341 {offsets = [17, 0], sizes = [1, 64], strides = [1, 1]} : vector<32x64xf32> to vector<1x64xf32>
    %502 = vector.shape_cast %501 : vector<1x64xf32> to vector<1x1x64xf32>
    %503 = vector.broadcast %502 : vector<1x1x64xf32> to vector<1x16x64xf32>
    %504 = arith.mulf %500, %503 : vector<1x16x64xf32>
    %505 = arith.addf %499, %504 : vector<1x16x64xf32>
    %506 = vector.extract_strided_slice %391 {offsets = [0, 16, 0], sizes = [1, 16, 64], strides = [1, 1, 1]} : vector<1x40x64xf32> to vector<1x16x64xf32>
    %507 = vector.extract_strided_slice %341 {offsets = [18, 0], sizes = [1, 64], strides = [1, 1]} : vector<32x64xf32> to vector<1x64xf32>
    %508 = vector.shape_cast %507 : vector<1x64xf32> to vector<1x1x64xf32>
    %509 = vector.broadcast %508 : vector<1x1x64xf32> to vector<1x16x64xf32>
    %510 = arith.mulf %506, %509 : vector<1x16x64xf32>
    %511 = arith.addf %505, %510 : vector<1x16x64xf32>
    %512 = vector.extract_strided_slice %392 {offsets = [0, 16, 0], sizes = [1, 16, 64], strides = [1, 1, 1]} : vector<1x40x64xf32> to vector<1x16x64xf32>
    %513 = vector.extract_strided_slice %341 {offsets = [19, 0], sizes = [1, 64], strides = [1, 1]} : vector<32x64xf32> to vector<1x64xf32>
    %514 = vector.shape_cast %513 : vector<1x64xf32> to vector<1x1x64xf32>
    %515 = vector.broadcast %514 : vector<1x1x64xf32> to vector<1x16x64xf32>
    %516 = arith.mulf %512, %515 : vector<1x16x64xf32>
    %517 = arith.addf %511, %516 : vector<1x16x64xf32>
    %518 = vector.extract_strided_slice %393 {offsets = [0, 16, 0], sizes = [1, 16, 64], strides = [1, 1, 1]} : vector<1x40x64xf32> to vector<1x16x64xf32>
    %519 = vector.extract_strided_slice %341 {offsets = [20, 0], sizes = [1, 64], strides = [1, 1]} : vector<32x64xf32> to vector<1x64xf32>
    %520 = vector.shape_cast %519 : vector<1x64xf32> to vector<1x1x64xf32>
    %521 = vector.broadcast %520 : vector<1x1x64xf32> to vector<1x16x64xf32>
    %522 = arith.mulf %518, %521 : vector<1x16x64xf32>
    %523 = arith.addf %517, %522 : vector<1x16x64xf32>
    %524 = vector.extract_strided_slice %394 {offsets = [0, 16, 0], sizes = [1, 16, 64], strides = [1, 1, 1]} : vector<1x40x64xf32> to vector<1x16x64xf32>
    %525 = vector.extract_strided_slice %341 {offsets = [21, 0], sizes = [1, 64], strides = [1, 1]} : vector<32x64xf32> to vector<1x64xf32>
    %526 = vector.shape_cast %525 : vector<1x64xf32> to vector<1x1x64xf32>
    %527 = vector.broadcast %526 : vector<1x1x64xf32> to vector<1x16x64xf32>
    %528 = arith.mulf %524, %527 : vector<1x16x64xf32>
    %529 = arith.addf %523, %528 : vector<1x16x64xf32>
    %530 = vector.extract_strided_slice %395 {offsets = [0, 16, 0], sizes = [1, 16, 64], strides = [1, 1, 1]} : vector<1x40x64xf32> to vector<1x16x64xf32>
    %531 = vector.extract_strided_slice %341 {offsets = [22, 0], sizes = [1, 64], strides = [1, 1]} : vector<32x64xf32> to vector<1x64xf32>
    %532 = vector.shape_cast %531 : vector<1x64xf32> to vector<1x1x64xf32>
    %533 = vector.broadcast %532 : vector<1x1x64xf32> to vector<1x16x64xf32>
    %534 = arith.mulf %530, %533 : vector<1x16x64xf32>
    %535 = arith.addf %529, %534 : vector<1x16x64xf32>
    %536 = vector.extract_strided_slice %396 {offsets = [0, 16, 0], sizes = [1, 16, 64], strides = [1, 1, 1]} : vector<1x40x64xf32> to vector<1x16x64xf32>
    %537 = vector.extract_strided_slice %341 {offsets = [23, 0], sizes = [1, 64], strides = [1, 1]} : vector<32x64xf32> to vector<1x64xf32>
    %538 = vector.shape_cast %537 : vector<1x64xf32> to vector<1x1x64xf32>
    %539 = vector.broadcast %538 : vector<1x1x64xf32> to vector<1x16x64xf32>
    %540 = arith.mulf %536, %539 : vector<1x16x64xf32>
    %541 = arith.addf %535, %540 : vector<1x16x64xf32>
    %542 = arith.addf %494, %541 : vector<1x16x64xf32>
    %543 = vector.extract_strided_slice %389 {offsets = [0, 24, 0], sizes = [1, 16, 64], strides = [1, 1, 1]} : vector<1x40x64xf32> to vector<1x16x64xf32>
    %544 = vector.extract_strided_slice %341 {offsets = [24, 0], sizes = [1, 64], strides = [1, 1]} : vector<32x64xf32> to vector<1x64xf32>
    %545 = vector.shape_cast %544 : vector<1x64xf32> to vector<1x1x64xf32>
    %546 = vector.broadcast %545 : vector<1x1x64xf32> to vector<1x16x64xf32>
    %547 = arith.mulf %543, %546 : vector<1x16x64xf32>
    %548 = vector.extract_strided_slice %390 {offsets = [0, 24, 0], sizes = [1, 16, 64], strides = [1, 1, 1]} : vector<1x40x64xf32> to vector<1x16x64xf32>
    %549 = vector.extract_strided_slice %341 {offsets = [25, 0], sizes = [1, 64], strides = [1, 1]} : vector<32x64xf32> to vector<1x64xf32>
    %550 = vector.shape_cast %549 : vector<1x64xf32> to vector<1x1x64xf32>
    %551 = vector.broadcast %550 : vector<1x1x64xf32> to vector<1x16x64xf32>
    %552 = arith.mulf %548, %551 : vector<1x16x64xf32>
    %553 = arith.addf %547, %552 : vector<1x16x64xf32>
    %554 = vector.extract_strided_slice %391 {offsets = [0, 24, 0], sizes = [1, 16, 64], strides = [1, 1, 1]} : vector<1x40x64xf32> to vector<1x16x64xf32>
    %555 = vector.extract_strided_slice %341 {offsets = [26, 0], sizes = [1, 64], strides = [1, 1]} : vector<32x64xf32> to vector<1x64xf32>
    %556 = vector.shape_cast %555 : vector<1x64xf32> to vector<1x1x64xf32>
    %557 = vector.broadcast %556 : vector<1x1x64xf32> to vector<1x16x64xf32>
    %558 = arith.mulf %554, %557 : vector<1x16x64xf32>
    %559 = arith.addf %553, %558 : vector<1x16x64xf32>
    %560 = vector.extract_strided_slice %392 {offsets = [0, 24, 0], sizes = [1, 16, 64], strides = [1, 1, 1]} : vector<1x40x64xf32> to vector<1x16x64xf32>
    %561 = vector.extract_strided_slice %341 {offsets = [27, 0], sizes = [1, 64], strides = [1, 1]} : vector<32x64xf32> to vector<1x64xf32>
    %562 = vector.shape_cast %561 : vector<1x64xf32> to vector<1x1x64xf32>
    %563 = vector.broadcast %562 : vector<1x1x64xf32> to vector<1x16x64xf32>
    %564 = arith.mulf %560, %563 : vector<1x16x64xf32>
    %565 = arith.addf %559, %564 : vector<1x16x64xf32>
    %566 = vector.extract_strided_slice %393 {offsets = [0, 24, 0], sizes = [1, 16, 64], strides = [1, 1, 1]} : vector<1x40x64xf32> to vector<1x16x64xf32>
    %567 = vector.extract_strided_slice %341 {offsets = [28, 0], sizes = [1, 64], strides = [1, 1]} : vector<32x64xf32> to vector<1x64xf32>
    %568 = vector.shape_cast %567 : vector<1x64xf32> to vector<1x1x64xf32>
    %569 = vector.broadcast %568 : vector<1x1x64xf32> to vector<1x16x64xf32>
    %570 = arith.mulf %566, %569 : vector<1x16x64xf32>
    %571 = arith.addf %565, %570 : vector<1x16x64xf32>
    %572 = vector.extract_strided_slice %394 {offsets = [0, 24, 0], sizes = [1, 16, 64], strides = [1, 1, 1]} : vector<1x40x64xf32> to vector<1x16x64xf32>
    %573 = vector.extract_strided_slice %341 {offsets = [29, 0], sizes = [1, 64], strides = [1, 1]} : vector<32x64xf32> to vector<1x64xf32>
    %574 = vector.shape_cast %573 : vector<1x64xf32> to vector<1x1x64xf32>
    %575 = vector.broadcast %574 : vector<1x1x64xf32> to vector<1x16x64xf32>
    %576 = arith.mulf %572, %575 : vector<1x16x64xf32>
    %577 = arith.addf %571, %576 : vector<1x16x64xf32>
    %578 = vector.extract_strided_slice %395 {offsets = [0, 24, 0], sizes = [1, 16, 64], strides = [1, 1, 1]} : vector<1x40x64xf32> to vector<1x16x64xf32>
    %579 = vector.extract_strided_slice %341 {offsets = [30, 0], sizes = [1, 64], strides = [1, 1]} : vector<32x64xf32> to vector<1x64xf32>
    %580 = vector.shape_cast %579 : vector<1x64xf32> to vector<1x1x64xf32>
    %581 = vector.broadcast %580 : vector<1x1x64xf32> to vector<1x16x64xf32>
    %582 = arith.mulf %578, %581 : vector<1x16x64xf32>
    %583 = arith.addf %577, %582 : vector<1x16x64xf32>
    %584 = arith.addf %542, %583 : vector<1x16x64xf32>
    %585 = arith.mulf %584, %584 : vector<1x16x64xf32>
    %586 = arith.mulf %584, %585 : vector<1x16x64xf32>
    %cst_77 = arith.constant 4.471500e-02 : f32
    %587 = vector.broadcast %cst_77 : f32 to vector<1x16x64xf32>
    %588 = arith.mulf %587, %586 : vector<1x16x64xf32>
    %589 = arith.addf %584, %588 : vector<1x16x64xf32>
    %cst_78 = arith.constant 0.797884583 : f32
    %590 = vector.broadcast %cst_78 : f32 to vector<1x16x64xf32>
    %591 = arith.mulf %590, %589 : vector<1x16x64xf32>
    %592 = math.tanh %591 : vector<1x16x64xf32>
    %cst_79 = arith.constant 1.000000e+00 : f32
    %593 = vector.broadcast %cst_79 : f32 to vector<1x16x64xf32>
    %594 = arith.addf %593, %592 : vector<1x16x64xf32>
    %cst_80 = arith.constant 5.000000e-01 : f32
    %595 = vector.broadcast %cst_80 : f32 to vector<1x16x64xf32>
    %596 = arith.mulf %595, %594 : vector<1x16x64xf32>
    %597 = arith.mulf %584, %596 : vector<1x16x64xf32>
    %598 = vector.shape_cast %597 : vector<1x16x64xf32> to vector<16x64xf32>
    %599 = arith.truncf %598 : vector<16x64xf32> to vector<16x64xbf16>
    %cst_81 = arith.constant dense<0.000000e+00> : vector<16x32xf32>
    %600 = tpu.matmul %599, %340, %cst_81 {dimension_numbers = #tpu.dot_dimension_numbers<[1], [0], [0], [1], [0, 0, 1, 1], [], []>} : vector<16x64xbf16>, vector<64x32xbf16>, vector<16x32xf32> -> vector<16x32xf32>
    %601 = vector.broadcast %336 : vector<1x32xf32> to vector<16x32xf32>
    %602 = arith.addf %600, %601 : vector<16x32xf32>
    %603 = vector.shape_cast %602 : vector<16x32xf32> to vector<1x16x32xf32>
    %604 = arith.addf %333, %603 : vector<1x16x32xf32>
    %c0_82 = arith.constant 0 : index
    %c0_83 = arith.constant 0 : index
    %c0_84 = arith.constant 0 : index
    %605 = vector.load %arg13[%c0_82, %c0_83, %c0_84] : memref<1x16x32xf32, #tpu.memory_space<vmem>>, vector<1x16x32xf32>
    tpu.vector_store %arg13[%c0_82, %c0_83, %c0_84], %604 {strides = array<i32>} : memref<1x16x32xf32, #tpu.memory_space<vmem>>, vector<1x16x32xf32>,
    return
  }
  func.func @transform_0(%arg0: i32) -> (i32, i32, i32) {
    %c0_i32 = arith.constant 0 : i32
    %c0_i32_0 = arith.constant 0 : i32
    %c0_i32_1 = arith.constant 0 : i32
    return %arg0, %c0_i32, %c0_i32_0 : i32, i32, i32
  }
  func.func @transform_1(%arg0: i32) -> (i32, i32, i32) {
    %c0_i32 = arith.constant 0 : i32
    %c0_i32_0 = arith.constant 0 : i32
    %c0_i32_1 = arith.constant 0 : i32
    return %arg0, %c0_i32, %c0_i32_0 : i32, i32, i32
  }
  func.func @transform_2(%arg0: i32) -> (i32, i32, i32) {
    %c0_i32 = arith.constant 0 : i32
    %c0_i32_0 = arith.constant 0 : i32
    %c0_i32_1 = arith.constant 0 : i32
    return %arg0, %c0_i32, %c0_i32_0 : i32, i32, i32
  }
  func.func @transform_3(%arg0: i32) -> (i32, i32) {
    %c0_i32 = arith.constant 0 : i32
    %c0_i32_0 = arith.constant 0 : i32
    %c0_i32_1 = arith.constant 0 : i32
    return %c0_i32, %c0_i32_0 : i32, i32
  }
  func.func @transform_4(%arg0: i32) -> (i32, i32) {
    %c0_i32 = arith.constant 0 : i32
    %c0_i32_0 = arith.constant 0 : i32
    %c0_i32_1 = arith.constant 0 : i32
    return %c0_i32, %c0_i32_0 : i32, i32
  }
  func.func @transform_5(%arg0: i32) -> (i32, i32) {
    %c0_i32 = arith.constant 0 : i32
    %c0_i32_0 = arith.constant 0 : i32
    %c0_i32_1 = arith.constant 0 : i32
    return %c0_i32, %c0_i32_0 : i32, i32
  }
  func.func @transform_6(%arg0: i32) -> (i32, i32) {
    %c0_i32 = arith.constant 0 : i32
    %c0_i32_0 = arith.constant 0 : i32
    %c0_i32_1 = arith.constant 0 : i32
    return %c0_i32, %c0_i32_0 : i32, i32
  }
  func.func @transform_7(%arg0: i32) -> (i32, i32) {
    %c0_i32 = arith.constant 0 : i32
    %c0_i32_0 = arith.constant 0 : i32
    %c0_i32_1 = arith.constant 0 : i32
    return %c0_i32, %c0_i32_0 : i32, i32
  }
  func.func @transform_8(%arg0: i32) -> (i32, i32) {
    %c0_i32 = arith.constant 0 : i32
    %c0_i32_0 = arith.constant 0 : i32
    %c0_i32_1 = arith.constant 0 : i32
    return %c0_i32, %c0_i32_0 : i32, i32
  }
  func.func @transform_9(%arg0: i32) -> (i32, i32) {
    %c0_i32 = arith.constant 0 : i32
    %c0_i32_0 = arith.constant 0 : i32
    %c0_i32_1 = arith.constant 0 : i32
    return %c0_i32, %c0_i32_0 : i32, i32
  }
  func.func @transform_10(%arg0: i32) -> (i32, i32) {
    %c0_i32 = arith.constant 0 : i32
    %c0_i32_0 = arith.constant 0 : i32
    %c0_i32_1 = arith.constant 0 : i32
    return %c0_i32, %c0_i32_0 : i32, i32
  }
  func.func @transform_11(%arg0: i32) -> (i32, i32) {
    %c0_i32 = arith.constant 0 : i32
    %c0_i32_0 = arith.constant 0 : i32
    %c0_i32_1 = arith.constant 0 : i32
    return %c0_i32, %c0_i32_0 : i32, i32
  }
  func.func @transform_12(%arg0: i32) -> (i32, i32, i32) {
    %c0_i32 = arith.constant 0 : i32
    %c0_i32_0 = arith.constant 0 : i32
    %c0_i32_1 = arith.constant 0 : i32
    return %arg0, %c0_i32, %c0_i32_0 : i32, i32, i32
  }
}

</mosaic_0001>

<llo_original>
// kernel: tpu_custom_call.1
$region0: #{tpu_custom_call.1}
  #allocation0 [shape = 'u32[]', space=smem, size = 0x4, offset = 0x4, fixed_abs, tag = 'smem constant byte address 0x4 - core index']
  #allocation1 [shape = 'u32[72,128]{1,0:T(1,128)}', space=vmem, size = 0x9000, scoped, tag = 'internal scratch']
  %s0 = inlined_call_operand.vmem [shape: f32[2,16,32], index: 0, kind: input, shape index: {}]
  %s1 = inlined_call_operand.vmem [shape: f32[2,16,1], index: 1, kind: input, shape index: {}]
  %s2 = inlined_call_operand.vmem [shape: f32[2,16,32], index: 2, kind: input, shape index: {}]
  %s3 = inlined_call_operand.vmem [shape: bf16[96,64], index: 3, kind: input, shape index: {}]
  %s4 = inlined_call_operand.vmem [shape: bf16[192,32], index: 4, kind: input, shape index: {}]
  %s5 = inlined_call_operand.vmem [shape: bf16[32,32], index: 5, kind: input, shape index: {}]
  %s6 = inlined_call_operand.vmem [shape: bf16[192,128], index: 6, kind: input, shape index: {}]
  %s7 = inlined_call_operand.vmem [shape: bf16[128,32], index: 7, kind: input, shape index: {}]
  %s8 = inlined_call_operand.vmem [shape: f32[64,64], index: 8, kind: input, shape index: {}]
  %s9 = inlined_call_operand.hbm [shape: f32[10,32], index: 9, kind: input, shape index: {}]
  %s10 = inlined_call_operand.vmem [shape: f32[3,64], index: 10, kind: input, shape index: {}]
  %s11 = inlined_call_operand.vmem [shape: f32[2,128], index: 11, kind: input, shape index: {}]
  %s12 = inlined_call_operand.hbm [shape: f32[2,16,32], index: 12, kind: output, shape index: {}]
  %s13 = sld [smem:[#allocation0]]
  $region85: #{tpu_custom_call.1} parent=0
    _
  %s15 = ssub.s32 1, %s13
  %s16 = scalar_select 0, %s15, %s13
  $region1: #{tpu_custom_call.1} parent=0
    #allocation2 [shape = 'u8[8192]{0}', space=vmem, size = 0x2000, scoped, tag = 'input window, operand 9, single buffered']
    #allocation3 [shape = 's32[2]{0}', space=sflag, size = 0x8, scoped, tag = 'scoped memory for tpu_custom_call.1']
    #allocation4 [shape = 's32[2]{0}', space=sflag, size = 0x8, scoped, tag = 'scoped memory for tpu_custom_call.1']
    #allocation5 [shape = 'u8[16384]{0}', space=vmem, size = 0x4000, scoped, tag = 'output window, operand 0']
    %17 = vsyncpa [#allocation3], 0
    %18 = vsyncpa [#allocation4], 0
    %s19 = scalar_lea.sflag [#allocation4], 1
    %20 = vsyncpa %s19, 0
    loop: start=0, step=1, limit=4
    $region2: #{tpu_custom_call.1} parent=1 // loop_pre_header
      _
    $region3: #{tpu_custom_call.1} parent=1 // loop_header
      %s22 = sphi 0, %s26
      %p23 = scmp.ge.s32.totalorder %s22, 4
      %s32 = sphi 0, %s34
      %s35 = sphi 0, %s32
      %s36 = sphi 0, %s35
      %s52 = sphi 0, %s36
      %s58 = sphi 0, %s60
      %s61 = sphi 0, %s58
      %s62 = sphi 0, %s61
      %s78 = sphi 0, %s62
      %s84 = sphi 0, %s86
      %s87 = sphi 0, %s84
      %s88 = sphi 0, %s87
      %s104 = sphi 0, %s88
      %s108 = sphi 0, %s108
      %s110 = sphi 0, %s108
      %s111 = sphi 0, %s110
      %s125 = sphi 0, %s111
      %s129 = sphi 0, %s129
      %s131 = sphi 0, %s129
      %s132 = sphi 0, %s131
      %s146 = sphi 0, %s132
      %s150 = sphi 0, %s150
      %s152 = sphi 0, %s150
      %s153 = sphi 0, %s152
      %s167 = sphi 0, %s153
      %s171 = sphi 0, %s171
      %s173 = sphi 0, %s171
      %s174 = sphi 0, %s173
      %s188 = sphi 0, %s174
      %s192 = sphi 0, %s192
      %s194 = sphi 0, %s192
      %s195 = sphi 0, %s194
      %s209 = sphi 0, %s195
      %s213 = sphi 0, %s213
      %s215 = sphi 0, %s213
      %s216 = sphi 0, %s215
      %s230 = sphi 0, %s216
      %s234 = sphi 0, %s234
      %s236 = sphi 0, %s234
      %s237 = sphi 0, %s236
      %s251 = sphi 0, %s237
      %s255 = sphi 0, %s255
      %s257 = sphi 0, %s255
      %s258 = sphi 0, %s257
      %s272 = sphi 0, %s258
      %s276 = sphi 0, %s276
      %s278 = sphi 0, %s276
      %s279 = sphi 0, %s278
      %s293 = sphi 0, %s279
      %s299 = sphi 0, %s301
      %s302 = sphi 0, %s299
      %s303 = sphi 0, %s302
      %s319 = sphi 0, %s303
    $region4: #{tpu_custom_call.1} parent=1 // loop_header_branch
      %25 = sbr.rel (%p23) target = $region8
    $region5: #{tpu_custom_call.1} parent=1 // loop_body
      %s27 = ssub.s32 %s22, 1
      %s28 = ssub.s32 %s22, 2
      %s29 = sadd.s32 %s22, 1
      %s30 = ssub.s32 %s22, %s29
      %p31 = scmp.eq.s32.totalorder %s30, 0
      %s33 = sadd.s32 %s32, 1
      %s34 = scalar_select %p31, %s32, %s33
      %p37 = pneg %p31
      %p38 = scmp.eq.s32.totalorder %s22, 1
      %p39 = por %p37, %p38
      %p40 = scmp.ne.s32.totalorder %s32, %s35
      %p41 = scmp.eq.s32.totalorder %s22, 0
      %p42 = por %p40, %p41
      %p43 = scmp.ne.s32.totalorder %s32, %s35
      %p44 = scmp.eq.s32.totalorder %s27, 1
      %p45 = por %p43, %p44
      %p46 = scmp.ne.s32.totalorder %s35, %s36
      %p47 = scmp.eq.s32.totalorder %s27, 0
      %p48 = por %p46, %p47
      %p49 = scmp.ne.s32.totalorder %s35, %s36
      %p50 = scmp.eq.s32.totalorder %s28, 1
      %p51 = por %p49, %p50
      %p53 = scmp.ne.s32.totalorder %s36, %s52
      %p54 = scmp.eq.s32.totalorder %s28, 0
      %p55 = por %p53, %p54
      %s56 = ssub.s32 %s22, %s29
      %p57 = scmp.eq.s32.totalorder %s56, 0
      %s59 = sadd.s32 %s58, 1
      %s60 = scalar_select %p57, %s58, %s59
      %p63 = pneg %p57
      %p64 = scmp.eq.s32.totalorder %s22, 1
      %p65 = por %p63, %p64
      %p66 = scmp.ne.s32.totalorder %s58, %s61
      %p67 = scmp.eq.s32.totalorder %s22, 0
      %p68 = por %p66, %p67
      %p69 = scmp.ne.s32.totalorder %s58, %s61
      %p70 = scmp.eq.s32.totalorder %s27, 1
      %p71 = por %p69, %p70
      %p72 = scmp.ne.s32.totalorder %s61, %s62
      %p73 = scmp.eq.s32.totalorder %s27, 0
      %p74 = por %p72, %p73
      %p75 = scmp.ne.s32.totalorder %s61, %s62
      %p76 = scmp.eq.s32.totalorder %s28, 1
      %p77 = por %p75, %p76
      %p79 = scmp.ne.s32.totalorder %s62, %s78
      %p80 = scmp.eq.s32.totalorder %s28, 0
      %p81 = por %p79, %p80
      %s82 = ssub.s32 %s22, %s29
      %p83 = scmp.eq.s32.totalorder %s82, 0
      %s85 = sadd.s32 %s84, 1
      %s86 = scalar_select %p83, %s84, %s85
      %p89 = pneg %p83
      %p90 = scmp.eq.s32.totalorder %s22, 1
      %p91 = por %p89, %p90
      %p92 = scmp.ne.s32.totalorder %s84, %s87
      %p93 = scmp.eq.s32.totalorder %s22, 0
      %p94 = por %p92, %p93
      %p95 = scmp.ne.s32.totalorder %s84, %s87
      %p96 = scmp.eq.s32.totalorder %s27, 1
      %p97 = por %p95, %p96
      %p98 = scmp.ne.s32.totalorder %s87, %s88
      %p99 = scmp.eq.s32.totalorder %s27, 0
      %p100 = por %p98, %p99
      %p101 = scmp.ne.s32.totalorder %s87, %s88
      %p102 = scmp.eq.s32.totalorder %s28, 1
      %p103 = por %p101, %p102
      %p105 = scmp.ne.s32.totalorder %s88, %s104
      %p106 = scmp.eq.s32.totalorder %s28, 0
      %p107 = por %p105, %p106
      %s109 = sadd.s32 %s108, 1
      %p112 = scmp.eq.s32.totalorder %s22, 1
      %p113 = scmp.ne.s32.totalorder %s108, %s110
      %p114 = scmp.eq.s32.totalorder %s22, 0
      %p115 = por %p113, %p114
      %p116 = scmp.ne.s32.totalorder %s108, %s110
      %p117 = scmp.eq.s32.totalorder %s27, 1
      %p118 = por %p116, %p117
      %p119 = scmp.ne.s32.totalorder %s110, %s111
      %p120 = scmp.eq.s32.totalorder %s27, 0
      %p121 = por %p119, %p120
      %p122 = scmp.ne.s32.totalorder %s110, %s111
      %p123 = scmp.eq.s32.totalorder %s28, 1
      %p124 = por %p122, %p123
      %p126 = scmp.ne.s32.totalorder %s111, %s125
      %p127 = scmp.eq.s32.totalorder %s28, 0
      %p128 = por %p126, %p127
      %s130 = sadd.s32 %s129, 1
      %p133 = scmp.eq.s32.totalorder %s22, 1
      %p134 = scmp.ne.s32.totalorder %s129, %s131
      %p135 = scmp.eq.s32.totalorder %s22, 0
      %p136 = por %p134, %p135
      %p137 = scmp.ne.s32.totalorder %s129, %s131
      %p138 = scmp.eq.s32.totalorder %s27, 1
      %p139 = por %p137, %p138
      %p140 = scmp.ne.s32.totalorder %s131, %s132
      %p141 = scmp.eq.s32.totalorder %s27, 0
      %p142 = por %p140, %p141
      %p143 = scmp.ne.s32.totalorder %s131, %s132
      %p144 = scmp.eq.s32.totalorder %s28, 1
      %p145 = por %p143, %p144
      %p147 = scmp.ne.s32.totalorder %s132, %s146
      %p148 = scmp.eq.s32.totalorder %s28, 0
      %p149 = por %p147, %p148
      %s151 = sadd.s32 %s150, 1
      %p154 = scmp.eq.s32.totalorder %s22, 1
      %p155 = scmp.ne.s32.totalorder %s150, %s152
      %p156 = scmp.eq.s32.totalorder %s22, 0
      %p157 = por %p155, %p156
      %p158 = scmp.ne.s32.totalorder %s150, %s152
      %p159 = scmp.eq.s32.totalorder %s27, 1
      %p160 = por %p158, %p159
      %p161 = scmp.ne.s32.totalorder %s152, %s153
      %p162 = scmp.eq.s32.totalorder %s27, 0
      %p163 = por %p161, %p162
      %p164 = scmp.ne.s32.totalorder %s152, %s153
      %p165 = scmp.eq.s32.totalorder %s28, 1
      %p166 = por %p164, %p165
      %p168 = scmp.ne.s32.totalorder %s153, %s167
      %p169 = scmp.eq.s32.totalorder %s28, 0
      %p170 = por %p168, %p169
      %s172 = sadd.s32 %s171, 1
      %p175 = scmp.eq.s32.totalorder %s22, 1
      %p176 = scmp.ne.s32.totalorder %s171, %s173
      %p177 = scmp.eq.s32.totalorder %s22, 0
      %p178 = por %p176, %p177
      %p179 = scmp.ne.s32.totalorder %s171, %s173
      %p180 = scmp.eq.s32.totalorder %s27, 1
      %p181 = por %p179, %p180
      %p182 = scmp.ne.s32.totalorder %s173, %s174
      %p183 = scmp.eq.s32.totalorder %s27, 0
      %p184 = por %p182, %p183
      %p185 = scmp.ne.s32.totalorder %s173, %s174
      %p186 = scmp.eq.s32.totalorder %s28, 1
      %p187 = por %p185, %p186
      %p189 = scmp.ne.s32.totalorder %s174, %s188
      %p190 = scmp.eq.s32.totalorder %s28, 0
      %p191 = por %p189, %p190
      %s193 = sadd.s32 %s192, 1
      %p196 = scmp.eq.s32.totalorder %s22, 1
      %p197 = scmp.ne.s32.totalorder %s192, %s194
      %p198 = scmp.eq.s32.totalorder %s22, 0
      %p199 = por %p197, %p198
      %p200 = scmp.ne.s32.totalorder %s192, %s194
      %p201 = scmp.eq.s32.totalorder %s27, 1
      %p202 = por %p200, %p201
      %p203 = scmp.ne.s32.totalorder %s194, %s195
      %p204 = scmp.eq.s32.totalorder %s27, 0
      %p205 = por %p203, %p204
      %p206 = scmp.ne.s32.totalorder %s194, %s195
      %p207 = scmp.eq.s32.totalorder %s28, 1
      %p208 = por %p206, %p207
      %p210 = scmp.ne.s32.totalorder %s195, %s209
      %p211 = scmp.eq.s32.totalorder %s28, 0
      %p212 = por %p210, %p211
      %s214 = sadd.s32 %s213, 1
      %p217 = scmp.eq.s32.totalorder %s22, 1
      %p218 = scmp.ne.s32.totalorder %s213, %s215
      %p219 = scmp.eq.s32.totalorder %s22, 0
      %p220 = por %p218, %p219
      %p221 = scmp.ne.s32.totalorder %s213, %s215
      %p222 = scmp.eq.s32.totalorder %s27, 1
      %p223 = por %p221, %p222
      %p224 = scmp.ne.s32.totalorder %s215, %s216
      %p225 = scmp.eq.s32.totalorder %s27, 0
      %p226 = por %p224, %p225
      %p227 = scmp.ne.s32.totalorder %s215, %s216
      %p228 = scmp.eq.s32.totalorder %s28, 1
      %p229 = por %p227, %p228
      %p231 = scmp.ne.s32.totalorder %s216, %s230
      %p232 = scmp.eq.s32.totalorder %s28, 0
      %p233 = por %p231, %p232
      %s235 = sadd.s32 %s234, 1
      %p238 = scmp.eq.s32.totalorder %s22, 1
      %p239 = scmp.ne.s32.totalorder %s234, %s236
      %p240 = scmp.eq.s32.totalorder %s22, 0
      %p241 = por %p239, %p240
      %p242 = scmp.ne.s32.totalorder %s234, %s236
      %p243 = scmp.eq.s32.totalorder %s27, 1
      %p244 = por %p242, %p243
      %p245 = scmp.ne.s32.totalorder %s236, %s237
      %p246 = scmp.eq.s32.totalorder %s27, 0
      %p247 = por %p245, %p246
      %p248 = scmp.ne.s32.totalorder %s236, %s237
      %p249 = scmp.eq.s32.totalorder %s28, 1
      %p250 = por %p248, %p249
      %p252 = scmp.ne.s32.totalorder %s237, %s251
      %p253 = scmp.eq.s32.totalorder %s28, 0
      %p254 = por %p252, %p253
      %s256 = sadd.s32 %s255, 1
      %p259 = scmp.eq.s32.totalorder %s22, 1
      %p260 = scmp.ne.s32.totalorder %s255, %s257
      %p261 = scmp.eq.s32.totalorder %s22, 0
      %p262 = por %p260, %p261
      %p263 = scmp.ne.s32.totalorder %s255, %s257
      %p264 = scmp.eq.s32.totalorder %s27, 1
      %p265 = por %p263, %p264
      %p266 = scmp.ne.s32.totalorder %s257, %s258
      %p267 = scmp.eq.s32.totalorder %s27, 0
      %p268 = por %p266, %p267
      %p269 = scmp.ne.s32.totalorder %s257, %s258
      %p270 = scmp.eq.s32.totalorder %s28, 1
      %p271 = por %p269, %p270
      %p273 = scmp.ne.s32.totalorder %s258, %s272
      %p274 = scmp.eq.s32.totalorder %s28, 0
      %p275 = por %p273, %p274
      %s277 = sadd.s32 %s276, 1
      %p280 = scmp.eq.s32.totalorder %s22, 1
      %p281 = scmp.ne.s32.totalorder %s276, %s278
      %p282 = scmp.eq.s32.totalorder %s22, 0
      %p283 = por %p281, %p282
      %p284 = scmp.ne.s32.totalorder %s276, %s278
      %p285 = scmp.eq.s32.totalorder %s27, 1
      %p286 = por %p284, %p285
      %p287 = scmp.ne.s32.totalorder %s278, %s279
      %p288 = scmp.eq.s32.totalorder %s27, 0
      %p289 = por %p287, %p288
      %p290 = scmp.ne.s32.totalorder %s278, %s279
      %p291 = scmp.eq.s32.totalorder %s28, 1
      %p292 = por %p290, %p291
      %p294 = scmp.ne.s32.totalorder %s279, %s293
      %p295 = scmp.eq.s32.totalorder %s28, 0
      %p296 = por %p294, %p295
      %s297 = ssub.s32 %s22, %s29
      %p298 = scmp.eq.s32.totalorder %s297, 0
      %s300 = sadd.s32 %s299, 1
      %s301 = scalar_select %p298, %s299, %s300
      %p304 = pneg %p298
      %p305 = scmp.eq.s32.totalorder %s22, 1
      %p306 = por %p304, %p305
      %p307 = scmp.ne.s32.totalorder %s299, %s302
      %p308 = scmp.eq.s32.totalorder %s22, 0
      %p309 = por %p307, %p308
      %p310 = scmp.ne.s32.totalorder %s299, %s302
      %p311 = scmp.eq.s32.totalorder %s27, 1
      %p312 = por %p310, %p311
      %p313 = scmp.ne.s32.totalorder %s302, %s303
      %p314 = scmp.eq.s32.totalorder %s27, 0
      %p315 = por %p313, %p314
      %p316 = scmp.ne.s32.totalorder %s302, %s303
      %p317 = scmp.eq.s32.totalorder %s28, 1
      %p318 = por %p316, %p317
      %p320 = scmp.ne.s32.totalorder %s303, %s319
      %p321 = scmp.eq.s32.totalorder %s28, 0
      %p322 = por %p320, %p321
      %p323 = scmp.le.s32.totalorder 1, %s22
      %p324 = scmp.lt.s32.totalorder %s22, 3
      %p325 = pnand %p323, %p324
      %p326 = pneg %p325
      // Predicated region
      $region9: #{tpu_custom_call.1} parent=5 // pred_check
        _
      $region10: #{tpu_custom_call.1} parent=5 // pred_check_branch
        %328 = sbr.rel (%p325) target = $region12
      $region11: #{tpu_custom_call.1} parent=5 // pred_region
        %s329 = ssub.s32 %s22, 1
        // Predicated region
        $region13: #{tpu_custom_call.1} parent=11 // pred_check
          %p330 = pneg %p121
        $region14: #{tpu_custom_call.1} parent=11 // pred_check_branch
          %332 = sbr.rel (%p330) target = $region16
        $region15: #{tpu_custom_call.1} parent=11 // pred_region
          _
        $region16: #{tpu_custom_call.1} parent=11 // pred_fallthru
          _
        // Predicated region
        $region17: #{tpu_custom_call.1} parent=11 // pred_check
          %p333 = pneg %p142
        $region18: #{tpu_custom_call.1} parent=11 // pred_check_branch
          %335 = sbr.rel (%p333) target = $region20
        $region19: #{tpu_custom_call.1} parent=11 // pred_region
          _
        $region20: #{tpu_custom_call.1} parent=11 // pred_fallthru
          _
        // Predicated region
        $region21: #{tpu_custom_call.1} parent=11 // pred_check
          %p336 = pneg %p163
        $region22: #{tpu_custom_call.1} parent=11 // pred_check_branch
          %338 = sbr.rel (%p336) target = $region24
        $region23: #{tpu_custom_call.1} parent=11 // pred_region
          _
        $region24: #{tpu_custom_call.1} parent=11 // pred_fallthru
          _
        // Predicated region
        $region25: #{tpu_custom_call.1} parent=11 // pred_check
          %p339 = pneg %p184
        $region26: #{tpu_custom_call.1} parent=11 // pred_check_branch
          %341 = sbr.rel (%p339) target = $region28
        $region27: #{tpu_custom_call.1} parent=11 // pred_region
          _
        $region28: #{tpu_custom_call.1} parent=11 // pred_fallthru
          _
        // Predicated region
        $region29: #{tpu_custom_call.1} parent=11 // pred_check
          %p342 = pneg %p205
        $region30: #{tpu_custom_call.1} parent=11 // pred_check_branch
          %344 = sbr.rel (%p342) target = $region32
        $region31: #{tpu_custom_call.1} parent=11 // pred_region
          _
        $region32: #{tpu_custom_call.1} parent=11 // pred_fallthru
          _
        // Predicated region
        $region33: #{tpu_custom_call.1} parent=11 // pred_check
          %p345 = pneg %p226
        $region34: #{tpu_custom_call.1} parent=11 // pred_check_branch
          %347 = sbr.rel (%p345) target = $region36
        $region35: #{tpu_custom_call.1} parent=11 // pred_region
          _
        $region36: #{tpu_custom_call.1} parent=11 // pred_fallthru
          _
        // Predicated region
        $region37: #{tpu_custom_call.1} parent=11 // pred_check
          %p348 = pneg %p247
        $region38: #{tpu_custom_call.1} parent=11 // pred_check_branch
          %350 = sbr.rel (%p348) target = $region40
        $region39: #{tpu_custom_call.1} parent=11 // pred_region
          %352 = vsyncadd [#allocation3], 0
          %s353 = sshll.u32 %s9, 4
          %s354 = int_to_ptr.hbm [resolvable:$true] %s353
          %s355 = sshll.u32 [#allocation2], 4
          %s356 = int_to_ptr.vmem [resolvable:$true] %s355
          %361 = dma.hbm_to_vmem [thread:$0]  %s354, 256, %s356, [#allocation3], 128, 128, 8
        $region40: #{tpu_custom_call.1} parent=11 // pred_fallthru
          _
        // Predicated region
        $region41: #{tpu_custom_call.1} parent=11 // pred_check
          %p362 = pneg %p268
        $region42: #{tpu_custom_call.1} parent=11 // pred_check_branch
          %364 = sbr.rel (%p362) target = $region44
        $region43: #{tpu_custom_call.1} parent=11 // pred_region
          _
        $region44: #{tpu_custom_call.1} parent=11 // pred_fallthru
          _
        // Predicated region
        $region45: #{tpu_custom_call.1} parent=11 // pred_check
          %p365 = pneg %p289
        $region46: #{tpu_custom_call.1} parent=11 // pred_check_branch
          %367 = sbr.rel (%p365) target = $region48
        $region47: #{tpu_custom_call.1} parent=11 // pred_region
          _
        $region48: #{tpu_custom_call.1} parent=11 // pred_fallthru
          _
      $region12: #{tpu_custom_call.1} parent=5 // pred_fallthru
        _
      %p368 = scmp.lt.s32.totalorder %s22, 2
      // Predicated region
      $region49: #{tpu_custom_call.1} parent=5 // pred_check
        %p369 = pneg %p368
      $region50: #{tpu_custom_call.1} parent=5 // pred_check_branch
        %371 = sbr.rel (%p369) target = $region52
      $region51: #{tpu_custom_call.1} parent=5 // pred_region
        // Predicated region
        $region53: #{tpu_custom_call.1} parent=51 // pred_check
          %p372 = pneg %p42
        $region54: #{tpu_custom_call.1} parent=51 // pred_check_branch
          %374 = sbr.rel (%p372) target = $region56
        $region55: #{tpu_custom_call.1} parent=51 // pred_region
          %p375 = scmp.lt.s32.totalorder %s22, 1
          %s376 = scalar_select %p375, %s22, 1
          %s377 = smul.addr %s376, 2
          %s378 = smul.addr %s377, 8
          %s379 = scalar_lea.vmem %s0, %s378
        $region56: #{tpu_custom_call.1} parent=51 // pred_fallthru
          _
        // Predicated region
        $region57: #{tpu_custom_call.1} parent=51 // pred_check
          %p380 = pneg %p68
        $region58: #{tpu_custom_call.1} parent=51 // pred_check_branch
          %382 = sbr.rel (%p380) target = $region60
        $region59: #{tpu_custom_call.1} parent=51 // pred_region
          %p383 = scmp.lt.s32.totalorder %s22, 1
          %s384 = scalar_select %p383, %s22, 1
          %s385 = smul.addr %s384, 2
          %s386 = smul.addr %s385, 8
          %s387 = scalar_lea.vmem %s1, %s386
        $region60: #{tpu_custom_call.1} parent=51 // pred_fallthru
          _
        // Predicated region
        $region61: #{tpu_custom_call.1} parent=51 // pred_check
          %p388 = pneg %p94
        $region62: #{tpu_custom_call.1} parent=51 // pred_check_branch
          %390 = sbr.rel (%p388) target = $region64
        $region63: #{tpu_custom_call.1} parent=51 // pred_region
          %p391 = scmp.lt.s32.totalorder %s22, 1
          %s392 = scalar_select %p391, %s22, 1
          %s393 = smul.addr %s392, 2
          %s394 = smul.addr %s393, 8
          %s395 = scalar_lea.vmem %s2, %s394
        $region64: #{tpu_custom_call.1} parent=51 // pred_fallthru
          _
      $region52: #{tpu_custom_call.1} parent=5 // pred_fallthru
        _
      %p396 = scmp.le.s32.totalorder 1, %s22
      %p397 = scmp.lt.s32.totalorder %s22, 3
      %p398 = pnand %p396, %p397
      %p399 = pneg %p398
      // Predicated region
      $region65: #{tpu_custom_call.1} parent=5 // pred_check
        _
      $region66: #{tpu_custom_call.1} parent=5 // pred_check_branch
        %401 = sbr.rel (%p398) target = $region68
      $region67: #{tpu_custom_call.1} parent=5 // pred_region
        %s402 = ssub.s32 %s22, 1
        // Predicated region
        $region69: #{tpu_custom_call.1} parent=67 // pred_check
          %p403 = pneg %p247
        $region70: #{tpu_custom_call.1} parent=67 // pred_check_branch
          %405 = sbr.rel (%p403) target = $region72
        $region71: #{tpu_custom_call.1} parent=67 // pred_region
          %407 = dma.done [#allocation3], 256
        $region72: #{tpu_custom_call.1} parent=67 // pred_fallthru
          _
        %p408 = scmp.lt.s32.totalorder %s27, 1
        %s409 = scalar_select %p408, %s27, 1
        %s410 = smul.addr %s409, 2
        %s411 = smul.addr %s410, 8
        %s412 = scalar_lea.vmem %s0, %s411
        %p413 = pneg %p48
        %p414 = pneg %p45
        %p415 = scmp.lt.s32.totalorder %s27, 1
        %s416 = scalar_select %p415, %s27, 1
        %s417 = smul.addr %s416, 2
        %s418 = smul.addr %s417, 8
        %s419 = scalar_lea.vmem %s1, %s418
        %p420 = pneg %p74
        %p421 = pneg %p71
        %p422 = scmp.lt.s32.totalorder %s27, 1
        %s423 = scalar_select %p422, %s27, 1
        %s424 = smul.addr %s423, 2
        %s425 = smul.addr %s424, 8
        %s426 = scalar_lea.vmem %s2, %s425
        %p427 = pneg %p100
        %p428 = pneg %p97
        %p429 = pneg %p121
        %p430 = pneg %p118
        %p431 = pneg %p142
        %p432 = pneg %p139
        %p433 = pneg %p163
        %p434 = pneg %p160
        %p435 = pneg %p184
        %p436 = pneg %p181
        %p437 = pneg %p205
        %p438 = pneg %p202
        %p439 = pneg %p226
        %p440 = pneg %p223
        %p441 = pneg %p247
        %p442 = pneg %p244
        %p443 = pneg %p268
        %p444 = pneg %p265
        %p445 = pneg %p289
        %p446 = pneg %p286
        %p447 = pneg %p315
        %p448 = pneg %p312
        %s449 = sand.u32 %s302, 1
        %s450 = scalar_lea.sflag [#allocation4], %s449
        %s451 = sand.u32 %s302, 1
        %s452 = smul.addr %s451, 16
        %s453 = scalar_lea.vmem [#allocation5], %s452
        %p454 = scmp.lt.s32.totalorder %s27, 1
        %s455 = scalar_select %p454, %s27, 1
        %s456 = smul.addr %s455, 2
        %s457 = smul.addr %s456, 8
        %s458 = scalar_lea.vmem %s0, %s457
        %p459 = scmp.lt.s32.totalorder %s27, 1
        %s460 = scalar_select %p459, %s27, 1
        %s461 = smul.addr %s460, 2
        %s462 = smul.addr %s461, 8
        %s463 = scalar_lea.vmem %s1, %s462
        %p464 = scmp.lt.s32.totalorder %s27, 1
        %s465 = scalar_select %p464, %s27, 1
        %s466 = smul.addr %s465, 2
        %s467 = smul.addr %s466, 8
        %s468 = scalar_lea.vmem %s2, %s467
        %v470 = vld [vmem:[%s458] sm:$0xff]
        %v471 = vld [vmem:[%s458 + $0x8] sm:$0xff]
        %v472 = vld [vmem:[%s463] sm:$0xff]
        %v473 = vld [vmem:[%s463 + $0x8] sm:$0xff]
        %v474 = vld [vmem:[%s468] sm:$0xff]
        %v475 = vld [vmem:[%s468 + $0x8] sm:$0xff]
        %v476 = vld [vmem:[#allocation2] sm:$0x1]
        %v477 = vld [vmem:[#allocation2 + $0x1] sm:$0x1]
        %v478 = vld [vmem:[#allocation2 + $0x2] sm:$0x1]
        %v479 = vld [vmem:[#allocation2 + $0x3] sm:$0x1]
        %v480 = vld [vmem:[%s10] sm:$0x1]
        %v481 = vld [vmem:[%s3] sm:$0xf]
        %v482 = vld [vmem:[%s3 + $0x4] sm:$0xf]
        %v483 = vld [vmem:[%s3 + $0x8] sm:$0xf]
        %v484 = vld [vmem:[%s3 + $0xc] sm:$0xf]
        %v485 = vld [vmem:[%s3 + $0x10] sm:$0xf]
        %v486 = vld [vmem:[%s3 + $0x14] sm:$0xf]
        %v487 = vld [vmem:[%s3 + $0x18] sm:$0xf]
        %v488 = vld [vmem:[%s3 + $0x1c] sm:$0xf]
        %v489 = vld [vmem:[%s3 + $0x20] sm:$0xf]
        %v490 = vld [vmem:[%s3 + $0x24] sm:$0xf]
        %v491 = vld [vmem:[%s3 + $0x28] sm:$0xf]
        %v492 = vld [vmem:[%s3 + $0x2c] sm:$0xf]
        %v493 = vpack.c.bf16 %v470, %v470
        %v494 = vpack.c.bf16 %v471, %v471
        %v497 = vunpack.c.l.b16 %v493
        %v498 = vunpack.c.l.b16 %v494
        %v499 = vpack.c.b16 %v498, %v497
        %v501 = vshrl.u32 %v499, 16
        %v503 = vrot.slane %v501, 7
        %v504 = vshll.u32 %v499, 16
        %v506 = vor.u32 %v503, %v504
        %vm509 = vcmask 1040384
        %vm510 = vsmask.f32 256
        %vm511 = vmand %vm509, %vm510
        %v512 = vsel %vm511, 0, %v506
        %v513 = vsel %vm511, %v503, 0
        %vm514 = vsmask.f32 7424
        %v516 = vshrl.u32 %v512, 16
        %v518 = vshll.u32 %v512, 16
        %v520 = vrot.slane %v518, 1
        %v521 = vor.u32 %v516, %v520
        %v523 = vshll.u32 %v513, 16
        %v525 = vrot.slane %v523, 1
        %v526 = vsel %vm514, %v521, %v525
        %527 = vrot.lane.b32.xlu0 %v526, 32
        %v528 = vpop.permute.xlu0 %527
        %vm531 = vcmask 1046528
        %v532 = vrot.slane %v512, 1
        %v533 = vrot.slane %v513, 1
        %v534 = vsel %vm531, %v532, %v533
        %535 = vrot.lane.b32.xlu0 %v534, 64
        %v536 = vpop.permute.xlu0 %535
        %vm537 = vcmask 261120
        %v539 = vsel %vm537, %v512, %v528
        %vm540 = vcmask 523264
        %v542 = vsel %vm540, %v539, %v536
        %v543 = vperm.slane %v480, 0
        %v556 = vunpack.c.l.b16 %v481
        %v557 = vunpack.c.l.b16 %v482
        %v558 = vunpack.c.l.b16 %v483
        %v559 = vunpack.c.l.b16 %v484
        %v560 = vunpack.c.l.b16 %v485
        %v561 = vunpack.c.l.b16 %v486
        %v562 = vunpack.c.l.b16 %v487
        %v563 = vunpack.c.l.b16 %v488
        %v564 = vunpack.c.l.b16 %v489
        %v565 = vunpack.c.l.b16 %v490
        %v566 = vunpack.c.l.b16 %v491
        %v567 = vunpack.c.l.b16 %v492
        %v568 = vpack.c.b16 %v557, %v556
        %v569 = vpack.c.b16 %v559, %v558
        %v570 = vpack.c.b16 %v561, %v560
        %v571 = vpack.c.b16 %v563, %v562
        %v572 = vpack.c.b16 %v565, %v564
        %v573 = vpack.c.b16 %v567, %v566
        %vm580 = vcmask 785408
        %v581 = vsel %vm580, %v542, 0
        %583 = vmatpush.bf16.msra.mxu0 0
        %584 = vmatpush.bf16.msra.mxu0 0
        %585 = vmatpush.bf16.msra.mxu0 %v573
        %586 = vmatpush.bf16.msra.mxu0 %v572
        %587 = vmatpush.bf16.msra.mxu0 %v571
        %588 = vmatpush.bf16.msra.mxu0 %v570
        %589 = vmatpush.bf16.msra.mxu0 %v569
        %590 = vmatpush.bf16.msra.mxu0 %v568
        %591 = vmatmul.bf16.gmra.mxu0 %v581
        %v592 = vpop.f32.mrf.mxu0
        %v593 = vadd.f32 %v543, %v592
        %v594 = vpop.f32.mrf.mxu0
        %v595 = vadd.f32 %v543, %v594
        %596 = vdwg.mxu0
        %v597 = vmul.f32 %v593, %v593
        %v598 = vmul.f32 %v595, %v595
        %v599 = vmul.f32 %v593, %v597
        %v600 = vmul.f32 %v595, %v598
        %v601 = vmul.f32 %v599, 0.044715
        %v602 = vmul.f32 %v600, 0.044715
        %v603 = vadd.f32 %v593, %v601
        %v604 = vadd.f32 %v595, %v602
        %v605 = vmul.f32 %v603, 0.7978846
        %v606 = vmul.f32 %v604, 0.7978846
        %v607 = vtanh.pop %v605
        %v608 = vtanh.pop %v606
        %v609 = vadd.f32 %v607, 1.0
        %v610 = vadd.f32 %v608, 1.0
        %v611 = vmul.f32 %v609, 0.5
        %v612 = vmul.f32 %v610, 0.5
        %v613 = vmul.f32 %v593, %v611
        %v614 = vmul.f32 %v595, %v612
        %v615 = vld [vmem:[%s4] sm:$0xf]
        %v616 = vld [vmem:[%s4 + $0x4] sm:$0xf]
        %v617 = vld [vmem:[%s4 + $0x8] sm:$0xf]
        %v618 = vld [vmem:[%s4 + $0xc] sm:$0xf]
        %v619 = vld [vmem:[%s4 + $0x10] sm:$0xf]
        %v620 = vld [vmem:[%s4 + $0x14] sm:$0xf]
        %v621 = vld [vmem:[%s4 + $0x18] sm:$0xf]
        %v622 = vld [vmem:[%s4 + $0x1c] sm:$0xf]
        %v623 = vld [vmem:[%s4 + $0x20] sm:$0xf]
        %v624 = vld [vmem:[%s4 + $0x24] sm:$0xf]
        %v625 = vld [vmem:[%s4 + $0x28] sm:$0xf]
        %v626 = vld [vmem:[%s4 + $0x2c] sm:$0xf]
        %v627 = vld [vmem:[%s4 + $0x30] sm:$0xf]
        %v628 = vld [vmem:[%s4 + $0x34] sm:$0xf]
        %v629 = vld [vmem:[%s4 + $0x38] sm:$0xf]
        %v630 = vld [vmem:[%s4 + $0x3c] sm:$0xf]
        %v631 = vld [vmem:[%s4 + $0x40] sm:$0xf]
        %v632 = vld [vmem:[%s4 + $0x44] sm:$0xf]
        %v633 = vld [vmem:[%s4 + $0x48] sm:$0xf]
        %v634 = vld [vmem:[%s4 + $0x4c] sm:$0xf]
        %v635 = vld [vmem:[%s4 + $0x50] sm:$0xf]
        %v636 = vld [vmem:[%s4 + $0x54] sm:$0xf]
        %v637 = vld [vmem:[%s4 + $0x58] sm:$0xf]
        %v638 = vld [vmem:[%s4 + $0x5c] sm:$0xf]
        %v639 = vpack.c.bf16 %v613, %v613
        %v640 = vpack.c.bf16 %v614, %v614
        %v643 = vunpack.c.l.b16 %v639
        %v644 = vunpack.c.l.b16 %v640
        %v645 = vpack.c.b16 %v644, %v643
        %v647 = vshrl.u32 %v645, 16
        %v649 = vrot.slane %v647, 7
        %v650 = vshll.u32 %v645, 16
        %v652 = vor.u32 %v649, %v650
        %v655 = vsel %vm511, 0, %v652
        %v656 = vsel %vm511, %v649, 0
        %v658 = vshrl.u32 %v655, 16
        %v660 = vshll.u32 %v655, 16
        %v662 = vrot.slane %v660, 1
        %v663 = vor.u32 %v658, %v662
        %v665 = vshll.u32 %v656, 16
        %v667 = vrot.slane %v665, 1
        %v668 = vsel %vm514, %v663, %v667
        %669 = vrot.lane.b32.xlu0 %v668, 64
        %v670 = vpop.permute.xlu0 %669
        %v673 = vrot.slane %v655, 1
        %v674 = vrot.slane %v656, 1
        %v675 = vsel %vm531, %v673, %v674
        %v677 = vsel %vm540, %v655, %v670
        %v679 = vperm.slane %v478, 0
        %v704 = vunpack.c.l.b16 %v615
        %v705 = vunpack.c.l.b16 %v616
        %v706 = vunpack.c.l.b16 %v617
        %v707 = vunpack.c.l.b16 %v618
        %v708 = vunpack.c.l.b16 %v619
        %v709 = vunpack.c.l.b16 %v620
        %v710 = vunpack.c.l.b16 %v621
        %v711 = vunpack.c.l.b16 %v622
        %v712 = vunpack.c.l.b16 %v623
        %v713 = vunpack.c.l.b16 %v624
        %v714 = vunpack.c.l.b16 %v625
        %v715 = vunpack.c.l.b16 %v626
        %v716 = vunpack.c.l.b16 %v627
        %v717 = vunpack.c.l.b16 %v628
        %v718 = vunpack.c.l.b16 %v629
        %v719 = vunpack.c.l.b16 %v630
        %v720 = vunpack.c.l.b16 %v631
        %v721 = vunpack.c.l.b16 %v632
        %v722 = vunpack.c.l.b16 %v633
        %v723 = vunpack.c.l.b16 %v634
        %v724 = vunpack.c.l.b16 %v635
        %v725 = vunpack.c.l.b16 %v636
        %v726 = vunpack.c.l.b16 %v637
        %v727 = vunpack.c.l.b16 %v638
        %v728 = vpack.c.b16 %v705, %v704
        %v729 = vpack.c.b16 %v707, %v706
        %v730 = vpack.c.b16 %v709, %v708
        %v731 = vpack.c.b16 %v711, %v710
        %v732 = vpack.c.b16 %v713, %v712
        %v733 = vpack.c.b16 %v715, %v714
        %v734 = vpack.c.b16 %v717, %v716
        %v735 = vpack.c.b16 %v719, %v718
        %v736 = vpack.c.b16 %v721, %v720
        %v737 = vpack.c.b16 %v723, %v722
        %v738 = vpack.c.b16 %v725, %v724
        %v739 = vpack.c.b16 %v727, %v726
        %v753 = vsel %vm540, %v675, 0
        %755 = vmatpush.bf16.msra.mxu0 %v735
        %756 = vmatpush.bf16.msra.mxu0 %v734
        %757 = vmatpush.bf16.msra.mxu0 %v733
        %758 = vmatpush.bf16.msra.mxu0 %v732
        %759 = vmatpush.bf16.msra.mxu0 %v731
        %760 = vmatpush.bf16.msra.mxu0 %v730
        %761 = vmatpush.bf16.msra.mxu0 %v729
        %762 = vmatpush.bf16.msra.mxu0 %v728
        %763 = vmatmul.bf16.gmra.mxu0 %v677
        %v764 = vpop.f32.mrf.mxu0
        %v765 = vadd.f32 %v679, %v764
        %v766 = vpop.f32.mrf.mxu0
        %v767 = vadd.f32 %v679, %v766
        %768 = vdwg.mxu0
        %769 = vmatpush.bf16.msra.mxu0 0
        %770 = vmatpush.bf16.msra.mxu0 0
        %771 = vmatpush.bf16.msra.mxu0 0
        %772 = vmatpush.bf16.msra.mxu0 0
        %773 = vmatpush.bf16.msra.mxu0 %v739
        %774 = vmatpush.bf16.msra.mxu0 %v738
        %775 = vmatpush.bf16.msra.mxu0 %v737
        %776 = vmatpush.bf16.msra.mxu0 %v736
        %777 = vmatmul.bf16.gmra.mxu0 %v753
        %v778 = vpop.f32.mrf.mxu0
        %v779 = vadd.f32 %v765, %v778
        %v780 = vpop.f32.mrf.mxu0
        %v781 = vadd.f32 %v767, %v780
        %782 = vdwg.mxu0
        %784 = vset.pattern.permute.xlu0 0
        %785 = vperm.xlu0 %784, %v472
        %v786 = vpop.permute.xlu0 %785
        %789 = vset.pattern.permute.xlu0 0
        %790 = vperm.xlu0 %789, %v473
        %v791 = vpop.permute.xlu0 %790
        %v793 = vperm.slane %v476, 0
        %v794 = vmul.f32 %v786, %v793
        %v795 = vmul.f32 %v791, %v793
        %v796 = vperm.slane %v477, 0
        %v797 = vadd.f32 %v794, %v796
        %v798 = vadd.f32 %v795, %v796
        %v799 = vld [vmem:[%s5] sm:$0xf]
        %v800 = vld [vmem:[%s5 + $0x4] sm:$0xf]
        %v801 = vld [vmem:[%s5 + $0x8] sm:$0xf]
        %v802 = vld [vmem:[%s5 + $0xc] sm:$0xf]
        %v803 = vpack.c.bf16 %v475, %v474
        %v804 = vperm.slane %v479, 0
        %v809 = vunpack.c.l.b16 %v799
        %v810 = vunpack.c.l.b16 %v800
        %v811 = vunpack.c.l.b16 %v801
        %v812 = vunpack.c.l.b16 %v802
        %v813 = vpack.c.b16 %v810, %v809
        %v814 = vpack.c.b16 %v812, %v811
        %v818 = vsel %vm537, %v803, 0
        %820 = vmatpush.bf16.msra.mxu0 0
        %821 = vmatpush.bf16.msra.mxu0 0
        %822 = vmatpush.bf16.msra.mxu0 0
        %823 = vmatpush.bf16.msra.mxu0 0
        %824 = vmatpush.bf16.msra.mxu0 0
        %825 = vmatpush.bf16.msra.mxu0 0
        %826 = vmatpush.bf16.msra.mxu0 %v814
        %827 = vmatpush.bf16.msra.mxu0 %v813
        %828 = vmatmul.bf16.gmra.mxu0 %v818
        %v829 = vpop.f32.mrf.mxu0
        %v830 = vadd.f32 %v804, %v829
        %v831 = vpop.f32.mrf.mxu0
        %v832 = vadd.f32 %v804, %v831
        %833 = vdwg.mxu0
        %v834 = vadd.f32 %v830, %v779
        %v835 = vadd.f32 %v832, %v781
        %v836 = vadd.f32 %v834, %v797
        %v837 = vadd.f32 %v835, %v798
        %v838 = vld [vmem:[#allocation2 + $0x4] sm:$0x1]
        %v839 = vld [vmem:[#allocation2 + $0x6] sm:$0x1]
        %v840 = vld [vmem:[#allocation2 + $0x8] sm:$0x1]
        %v841 = vld [vmem:[%s11] sm:$0x1]
        %v842 = vld [vmem:[%s10 + $0x1] sm:$0x1]
        %v843 = vld [vmem:[%s6] sm:$0xf]
        %v844 = vld [vmem:[%s6 + $0x4] sm:$0xf]
        %v845 = vld [vmem:[%s6 + $0x8] sm:$0xf]
        %v846 = vld [vmem:[%s6 + $0xc] sm:$0xf]
        %v847 = vld [vmem:[%s6 + $0x10] sm:$0xf]
        %v848 = vld [vmem:[%s6 + $0x14] sm:$0xf]
        %v849 = vld [vmem:[%s6 + $0x18] sm:$0xf]
        %v850 = vld [vmem:[%s6 + $0x1c] sm:$0xf]
        %v851 = vld [vmem:[%s6 + $0x20] sm:$0xf]
        %v852 = vld [vmem:[%s6 + $0x24] sm:$0xf]
        %v853 = vld [vmem:[%s6 + $0x28] sm:$0xf]
        %v854 = vld [vmem:[%s6 + $0x2c] sm:$0xf]
        %v855 = vld [vmem:[%s7] sm:$0xf]
        %v856 = vld [vmem:[%s7 + $0x4] sm:$0xf]
        %v857 = vld [vmem:[%s7 + $0x8] sm:$0xf]
        %v858 = vld [vmem:[%s7 + $0xc] sm:$0xf]
        %v859 = vld [vmem:[%s7 + $0x10] sm:$0xf]
        %v860 = vld [vmem:[%s7 + $0x14] sm:$0xf]
        %v861 = vld [vmem:[%s7 + $0x18] sm:$0xf]
        %v862 = vld [vmem:[%s7 + $0x1c] sm:$0xf]
        %v863 = vld [vmem:[%s8] sm:$0xff]
        %v864 = vld [vmem:[%s8 + $0x8] sm:$0xff]
        %v865 = vld [vmem:[%s8 + $0x10] sm:$0xff]
        %v866 = vld [vmem:[%s8 + $0x18] sm:$0xff]
        %v867 = vsel %vm537, %v836, 0.0
        %868 = vadd.xlane.f32.xlu0 %v867
        %v869 = vpop.xlane.xlu0 %868
        %v870 = vsel %vm537, %v837, 0.0
        %871 = vadd.xlane.f32.xlu0 %v870
        %v872 = vpop.xlane.xlu0 %871
        %v873 = vrcp.pop 32.0
        %v874 = vmul.f32 32.0, %v873
        %v875 = vsub.f32 1.0, %v874
        %v876 = vmul.f32 %v873, %v875
        %v877 = vadd.f32 %v873, %v876
        %vm878 = vweird.f32 %v873
        %v879 = vsel %vm878, %v873, %v877
        %v880 = vmul.f32 %v869, %v879
        %v881 = vmul.f32 %v872, %v879
        %v882 = vsub.f32 %v836, %v880
        %v883 = vsub.f32 %v837, %v881
        %v884 = vmul.f32 %v882, %v882
        %v885 = vmul.f32 %v883, %v883
        %v886 = vsel %vm537, %v884, 0.0
        %887 = vadd.xlane.f32.xlu0 %v886
        %v888 = vpop.xlane.xlu0 %887
        %v889 = vsel %vm537, %v885, 0.0
        %890 = vadd.xlane.f32.xlu0 %v889
        %v891 = vpop.xlane.xlu0 %890
        %v892 = vmul.f32 %v888, %v879
        %v893 = vmul.f32 %v891, %v879
        %v894 = vadd.f32 %v892, 1e-05
        %v895 = vadd.f32 %v893, 1e-05
        %v896 = vrsqrt.pop %v894
        %v897 = vmul.f32 %v896, %v894
        %v898 = vmul.f32 %v897, %v896
        %v899 = vmul.f32 0.5, %v898
        %v900 = vsub.f32 1.5, %v899
        %v901 = vmul.f32 %v896, %v900
        %vm902 = vweird.f32 %v894
        %vm903 = vweird.f32 %v896
        %vm904 = vmor %vm902, %vm903
        %v905 = vsel %vm904, %v896, %v901
        %v906 = vrsqrt.pop %v895
        %v907 = vmul.f32 %v906, %v895
        %v908 = vmul.f32 %v907, %v906
        %v909 = vmul.f32 0.5, %v908
        %v910 = vsub.f32 1.5, %v909
        %v911 = vmul.f32 %v906, %v910
        %vm912 = vweird.f32 %v895
        %vm913 = vweird.f32 %v906
        %vm914 = vmor %vm912, %vm913
        %v915 = vsel %vm914, %v906, %v911
        %v916 = vmul.f32 %v882, %v905
        %v917 = vmul.f32 %v883, %v915
        %v918 = vperm.slane %v838, 0
        %v919 = vmul.f32 %v916, %v918
        %v920 = vmul.f32 %v917, %v918
        %v921 = vperm.slane %v839, 0
        %v922 = vadd.f32 %v919, %v921
        %v923 = vadd.f32 %v920, %v921
        %v924 = vpack.c.bf16 %v922, %v922
        %v925 = vpack.c.bf16 %v923, %v923
        %v928 = vunpack.c.l.b16 %v924
        %v929 = vunpack.c.l.b16 %v925
        %v930 = vpack.c.b16 %v929, %v928
        %v932 = vshrl.u32 %v930, 16
        %v934 = vrot.slane %v932, 7
        %v935 = vshll.u32 %v930, 16
        %v937 = vor.u32 %v934, %v935
        %v940 = vsel %vm511, 0, %v937
        %v941 = vsel %vm511, %v934, 0
        %v943 = vshrl.u32 %v940, 16
        %v945 = vshll.u32 %v940, 16
        %v947 = vrot.slane %v945, 1
        %v948 = vor.u32 %v943, %v947
        %v950 = vshll.u32 %v941, 16
        %v952 = vrot.slane %v950, 1
        %v953 = vsel %vm514, %v948, %v952
        %954 = vrot.lane.b32.xlu0 %v953, 32
        %v955 = vpop.permute.xlu0 %954
        %v958 = vrot.slane %v940, 1
        %v959 = vrot.slane %v941, 1
        %v960 = vsel %vm531, %v958, %v959
        %961 = vrot.lane.b32.xlu0 %v960, 64
        %v962 = vpop.permute.xlu0 %961
        %v964 = vsel %vm537, %v940, %v955
        %v966 = vsel %vm540, %v964, %v962
        %v967 = vperm.slane %v841, 0
        %v980 = vunpack.c.l.b16 %v843
        %v981 = vunpack.c.l.b16 %v844
        %v982 = vunpack.c.l.b16 %v845
        %v983 = vunpack.c.l.b16 %v846
        %v984 = vunpack.c.l.b16 %v847
        %v985 = vunpack.c.l.b16 %v848
        %v986 = vunpack.c.l.b16 %v849
        %v987 = vunpack.c.l.b16 %v850
        %v988 = vunpack.c.l.b16 %v851
        %v989 = vunpack.c.l.b16 %v852
        %v990 = vunpack.c.l.b16 %v853
        %v991 = vunpack.c.l.b16 %v854
        %v992 = vpack.c.b16 %v981, %v980
        %v993 = vpack.c.b16 %v983, %v982
        %v994 = vpack.c.b16 %v985, %v984
        %v995 = vpack.c.b16 %v987, %v986
        %v996 = vpack.c.b16 %v989, %v988
        %v997 = vpack.c.b16 %v991, %v990
        %v1004 = vsel %vm580, %v966, 0
        %1006 = vmatpush.bf16.msra.mxu0 0
        %1007 = vmatpush.bf16.msra.mxu0 0
        %1008 = vmatpush.bf16.msra.mxu0 %v997
        %1009 = vmatpush.bf16.msra.mxu0 %v996
        %1010 = vmatpush.bf16.msra.mxu0 %v995
        %1011 = vmatpush.bf16.msra.mxu0 %v994
        %1012 = vmatpush.bf16.msra.mxu0 %v993
        %1013 = vmatpush.bf16.msra.mxu0 %v992
        %1014 = vmatmul.bf16.gmra.mxu0 %v1004
        %v1015 = vpop.f32.mrf.mxu0
        %v1016 = vadd.f32 %v967, %v1015
        %v1017 = vpop.f32.mrf.mxu0
        %v1018 = vadd.f32 %v967, %v1017
        %1019 = vdwg.mxu0
        %v1020 = vxor.u32 %v1016, 2147483648
        %v1021 = vxor.u32 %v1018, 2147483648
        %v1022 = vmul.f32 %v1020, 1.442695
        %v1023 = vpow.pop %v1022
        %v1024 = vmul.f32 %v1021, 1.442695
        %v1025 = vpow.pop %v1024
        %v1026 = vadd.f32 %v1023, 1.0
        %v1027 = vadd.f32 %v1025, 1.0
        %v1028 = vrcp.pop %v1026
        %v1029 = vmul.f32 %v1026, %v1028
        %v1030 = vsub.f32 1.0, %v1029
        %v1031 = vmul.f32 %v1028, %v1030
        %v1032 = vadd.f32 %v1028, %v1031
        %vm1033 = vweird.f32 %v1026
        %vm1034 = vweird.f32 %v1028
        %vm1035 = vmor %vm1033, %vm1034
        %v1036 = vsel %vm1035, %v1028, %v1032
        %v1037 = vand.u32 2147483647, %v1026
        %vm1038 = vcmp.eq.f32.partialorder %v1037, 8.507059e+37
        %v1039 = vand.u32 %v1026, 2147483648
        %v1040 = vor.u32 1.1754944e-38, %v1039
        %v1041 = vsel %vm1038, %v1040, %v1036
        %v1042 = vmul.f32 1.0, %v1041
        %v1043 = vrcp.pop %v1027
        %v1044 = vmul.f32 %v1027, %v1043
        %v1045 = vsub.f32 1.0, %v1044
        %v1046 = vmul.f32 %v1043, %v1045
        %v1047 = vadd.f32 %v1043, %v1046
        %vm1048 = vweird.f32 %v1027
        %vm1049 = vweird.f32 %v1043
        %vm1050 = vmor %vm1048, %vm1049
        %v1051 = vsel %vm1050, %v1043, %v1047
        %v1052 = vand.u32 2147483647, %v1027
        %vm1053 = vcmp.eq.f32.partialorder %v1052, 8.507059e+37
        %v1054 = vand.u32 %v1027, 2147483648
        %v1055 = vor.u32 1.1754944e-38, %v1054
        %v1056 = vsel %vm1053, %v1055, %v1051
        %v1057 = vmul.f32 1.0, %v1056
        %1060 = vrot.lane.b32.xlu0 %v1042, 64
        %v1061 = vpop.permute.xlu0 %1060
        %1062 = vrot.lane.b32.xlu0 %v1057, 64
        %v1063 = vpop.permute.xlu0 %1062
        %v1066 = vmul.f32 %v1016, %v1061
        %v1067 = vmul.f32 %v1018, %v1063
        %vm1070 = vcmask 1046528
        %v1071 = vrot.slane %v1066, 1
        %v1072 = vrot.slane %v1067, 1
        %v1073 = vsel %vm1070, %v1071, %v1072
        %v1077 = vsel %vm1070, 0.0, %v1071
        %v1078 = vsel %vm1070, %v1072, 0.0
        %v1079 = vperm.slane %v842, 0
        %v1080 = vperm.slane %v863, 0
        %v1081 = vmul.f32 %v1080, 0.0
        %v1082 = vmul.f32 %v1077, %v1080
        %v1083 = vperm.slane %v863, 1
        %v1084 = vmul.f32 %v1083, 0.0
        %v1085 = vmul.f32 %v1077, %v1083
        %v1086 = vmul.f32 %v1073, %v1083
        %v1090 = vrot.slane %v1084, 1
        %v1091 = vrot.slane %v1085, 1
        %v1092 = vsel %vm1070, %v1090, %v1091
        %v1093 = vrot.slane %v1086, 1
        %v1094 = vsel %vm1070, %v1091, %v1093
        %v1097 = vadd.f32 %v1081, %v1092
        %v1098 = vadd.f32 %v1082, %v1094
        %v1099 = vperm.slane %v863, 2
        %v1100 = vmul.f32 %v1099, 0.0
        %v1101 = vmul.f32 %v1077, %v1099
        %v1102 = vmul.f32 %v1073, %v1099
        %vm1106 = vcmask 1045504
        %v1107 = vrot.slane %v1100, 2
        %v1108 = vrot.slane %v1101, 2
        %v1109 = vsel %vm1106, %v1107, %v1108
        %v1110 = vrot.slane %v1102, 2
        %v1111 = vsel %vm1106, %v1108, %v1110
        %v1114 = vadd.f32 %v1097, %v1109
        %v1115 = vadd.f32 %v1098, %v1111
        %v1116 = vperm.slane %v863, 3
        %v1117 = vmul.f32 %v1116, 0.0
        %v1118 = vmul.f32 %v1077, %v1116
        %v1119 = vmul.f32 %v1073, %v1116
        %vm1123 = vcmask 1044480
        %v1124 = vrot.slane %v1117, 3
        %v1125 = vrot.slane %v1118, 3
        %v1126 = vsel %vm1123, %v1124, %v1125
        %v1127 = vrot.slane %v1119, 3
        %v1128 = vsel %vm1123, %v1125, %v1127
        %v1131 = vadd.f32 %v1114, %v1126
        %v1132 = vadd.f32 %v1115, %v1128
        %v1133 = vperm.slane %v863, 4
        %v1134 = vmul.f32 %v1133, 0.0
        %v1135 = vmul.f32 %v1077, %v1133
        %v1136 = vmul.f32 %v1073, %v1133
        %vm1140 = vcmask 1043456
        %v1141 = vrot.slane %v1134, 4
        %v1142 = vrot.slane %v1135, 4
        %v1143 = vsel %vm1140, %v1141, %v1142
        %v1144 = vrot.slane %v1136, 4
        %v1145 = vsel %vm1140, %v1142, %v1144
        %v1148 = vadd.f32 %v1131, %v1143
        %v1149 = vadd.f32 %v1132, %v1145
        %v1150 = vperm.slane %v863, 5
        %v1151 = vmul.f32 %v1150, 0.0
        %v1152 = vmul.f32 %v1077, %v1150
        %v1153 = vmul.f32 %v1073, %v1150
        %vm1157 = vcmask 1042432
        %v1158 = vrot.slane %v1151, 5
        %v1159 = vrot.slane %v1152, 5
        %v1160 = vsel %vm1157, %v1158, %v1159
        %v1161 = vrot.slane %v1153, 5
        %v1162 = vsel %vm1157, %v1159, %v1161
        %v1165 = vadd.f32 %v1148, %v1160
        %v1166 = vadd.f32 %v1149, %v1162
        %v1167 = vperm.slane %v863, 6
        %v1168 = vmul.f32 %v1167, 0.0
        %v1169 = vmul.f32 %v1077, %v1167
        %v1170 = vmul.f32 %v1073, %v1167
        %vm1174 = vcmask 1041408
        %v1175 = vrot.slane %v1168, 6
        %v1176 = vrot.slane %v1169, 6
        %v1177 = vsel %vm1174, %v1175, %v1176
        %v1178 = vrot.slane %v1170, 6
        %v1179 = vsel %vm1174, %v1176, %v1178
        %v1182 = vadd.f32 %v1165, %v1177
        %v1183 = vadd.f32 %v1166, %v1179
        %v1184 = vperm.slane %v863, 7
        %v1185 = vmul.f32 %v1184, 0.0
        %v1186 = vmul.f32 %v1077, %v1184
        %v1187 = vmul.f32 %v1073, %v1184
        %vm1191 = vcmask 1040384
        %v1192 = vrot.slane %v1185, 7
        %v1193 = vrot.slane %v1186, 7
        %v1194 = vsel %vm1191, %v1192, %v1193
        %v1195 = vrot.slane %v1187, 7
        %v1196 = vsel %vm1191, %v1193, %v1195
        %v1199 = vadd.f32 %v1182, %v1194
        %v1200 = vadd.f32 %v1183, %v1196
        %v1201 = vadd.f32 %v1079, %v1199
        %v1202 = vadd.f32 %v1079, %v1200
        %v1203 = vperm.slane %v864, 0
        %v1204 = vmul.f32 %v1077, %v1203
        %v1205 = vmul.f32 %v1073, %v1203
        %v1206 = vperm.slane %v864, 1
        %v1207 = vmul.f32 %v1077, %v1206
        %v1208 = vmul.f32 %v1073, %v1206
        %v1209 = vmul.f32 %v1078, %v1206
        %v1213 = vrot.slane %v1207, 1
        %v1214 = vrot.slane %v1208, 1
        %v1215 = vsel %vm1070, %v1213, %v1214
        %v1216 = vrot.slane %v1209, 1
        %v1217 = vsel %vm1070, %v1214, %v1216
        %v1220 = vadd.f32 %v1204, %v1215
        %v1221 = vadd.f32 %v1205, %v1217
        %v1222 = vperm.slane %v864, 2
        %v1223 = vmul.f32 %v1077, %v1222
        %v1224 = vmul.f32 %v1073, %v1222
        %v1225 = vmul.f32 %v1078, %v1222
        %v1229 = vrot.slane %v1223, 2
        %v1230 = vrot.slane %v1224, 2
        %v1231 = vsel %vm1106, %v1229, %v1230
        %v1232 = vrot.slane %v1225, 2
        %v1233 = vsel %vm1106, %v1230, %v1232
        %v1236 = vadd.f32 %v1220, %v1231
        %v1237 = vadd.f32 %v1221, %v1233
        %v1238 = vperm.slane %v864, 3
        %v1239 = vmul.f32 %v1077, %v1238
        %v1240 = vmul.f32 %v1073, %v1238
        %v1241 = vmul.f32 %v1078, %v1238
        %v1245 = vrot.slane %v1239, 3
        %v1246 = vrot.slane %v1240, 3
        %v1247 = vsel %vm1123, %v1245, %v1246
        %v1248 = vrot.slane %v1241, 3
        %v1249 = vsel %vm1123, %v1246, %v1248
        %v1252 = vadd.f32 %v1236, %v1247
        %v1253 = vadd.f32 %v1237, %v1249
        %v1254 = vperm.slane %v864, 4
        %v1255 = vmul.f32 %v1077, %v1254
        %v1256 = vmul.f32 %v1073, %v1254
        %v1257 = vmul.f32 %v1078, %v1254
        %v1261 = vrot.slane %v1255, 4
        %v1262 = vrot.slane %v1256, 4
        %v1263 = vsel %vm1140, %v1261, %v1262
        %v1264 = vrot.slane %v1257, 4
        %v1265 = vsel %vm1140, %v1262, %v1264
        %v1268 = vadd.f32 %v1252, %v1263
        %v1269 = vadd.f32 %v1253, %v1265
        %v1270 = vperm.slane %v864, 5
        %v1271 = vmul.f32 %v1077, %v1270
        %v1272 = vmul.f32 %v1073, %v1270
        %v1273 = vmul.f32 %v1078, %v1270
        %v1277 = vrot.slane %v1271, 5
        %v1278 = vrot.slane %v1272, 5
        %v1279 = vsel %vm1157, %v1277, %v1278
        %v1280 = vrot.slane %v1273, 5
        %v1281 = vsel %vm1157, %v1278, %v1280
        %v1284 = vadd.f32 %v1268, %v1279
        %v1285 = vadd.f32 %v1269, %v1281
        %v1286 = vperm.slane %v864, 6
        %v1287 = vmul.f32 %v1077, %v1286
        %v1288 = vmul.f32 %v1073, %v1286
        %v1289 = vmul.f32 %v1078, %v1286
        %v1293 = vrot.slane %v1287, 6
        %v1294 = vrot.slane %v1288, 6
        %v1295 = vsel %vm1174, %v1293, %v1294
        %v1296 = vrot.slane %v1289, 6
        %v1297 = vsel %vm1174, %v1294, %v1296
        %v1300 = vadd.f32 %v1284, %v1295
        %v1301 = vadd.f32 %v1285, %v1297
        %v1302 = vperm.slane %v864, 7
        %v1303 = vmul.f32 %v1077, %v1302
        %v1304 = vmul.f32 %v1073, %v1302
        %v1305 = vmul.f32 %v1078, %v1302
        %v1309 = vrot.slane %v1303, 7
        %v1310 = vrot.slane %v1304, 7
        %v1311 = vsel %vm1191, %v1309, %v1310
        %v1312 = vrot.slane %v1305, 7
        %v1313 = vsel %vm1191, %v1310, %v1312
        %v1316 = vadd.f32 %v1300, %v1311
        %v1317 = vadd.f32 %v1301, %v1313
        %v1318 = vadd.f32 %v1201, %v1316
        %v1319 = vadd.f32 %v1202, %v1317
        %v1320 = vperm.slane %v865, 0
        %v1321 = vmul.f32 %v1073, %v1320
        %v1322 = vmul.f32 %v1078, %v1320
        %v1323 = vperm.slane %v865, 1
        %v1324 = vmul.f32 %v1073, %v1323
        %v1325 = vmul.f32 %v1078, %v1323
        %v1326 = vmul.f32 %v1323, 0.0
        %v1330 = vrot.slane %v1324, 1
        %v1331 = vrot.slane %v1325, 1
        %v1332 = vsel %vm1070, %v1330, %v1331
        %v1333 = vrot.slane %v1326, 1
        %v1334 = vsel %vm1070, %v1331, %v1333
        %v1337 = vadd.f32 %v1321, %v1332
        %v1338 = vadd.f32 %v1322, %v1334
        %v1339 = vperm.slane %v865, 2
        %v1340 = vmul.f32 %v1073, %v1339
        %v1341 = vmul.f32 %v1078, %v1339
        %v1342 = vmul.f32 %v1339, 0.0
        %v1346 = vrot.slane %v1340, 2
        %v1347 = vrot.slane %v1341, 2
        %v1348 = vsel %vm1106, %v1346, %v1347
        %v1349 = vrot.slane %v1342, 2
        %v1350 = vsel %vm1106, %v1347, %v1349
        %v1353 = vadd.f32 %v1337, %v1348
        %v1354 = vadd.f32 %v1338, %v1350
        %v1355 = vperm.slane %v865, 3
        %v1356 = vmul.f32 %v1073, %v1355
        %v1357 = vmul.f32 %v1078, %v1355
        %v1358 = vmul.f32 %v1355, 0.0
        %v1362 = vrot.slane %v1356, 3
        %v1363 = vrot.slane %v1357, 3
        %v1364 = vsel %vm1123, %v1362, %v1363
        %v1365 = vrot.slane %v1358, 3
        %v1366 = vsel %vm1123, %v1363, %v1365
        %v1369 = vadd.f32 %v1353, %v1364
        %v1370 = vadd.f32 %v1354, %v1366
        %v1371 = vperm.slane %v865, 4
        %v1372 = vmul.f32 %v1073, %v1371
        %v1373 = vmul.f32 %v1078, %v1371
        %v1374 = vmul.f32 %v1371, 0.0
        %v1378 = vrot.slane %v1372, 4
        %v1379 = vrot.slane %v1373, 4
        %v1380 = vsel %vm1140, %v1378, %v1379
        %v1381 = vrot.slane %v1374, 4
        %v1382 = vsel %vm1140, %v1379, %v1381
        %v1385 = vadd.f32 %v1369, %v1380
        %v1386 = vadd.f32 %v1370, %v1382
        %v1387 = vperm.slane %v865, 5
        %v1388 = vmul.f32 %v1073, %v1387
        %v1389 = vmul.f32 %v1078, %v1387
        %v1390 = vmul.f32 %v1387, 0.0
        %v1394 = vrot.slane %v1388, 5
        %v1395 = vrot.slane %v1389, 5
        %v1396 = vsel %vm1157, %v1394, %v1395
        %v1397 = vrot.slane %v1390, 5
        %v1398 = vsel %vm1157, %v1395, %v1397
        %v1401 = vadd.f32 %v1385, %v1396
        %v1402 = vadd.f32 %v1386, %v1398
        %v1403 = vperm.slane %v865, 6
        %v1404 = vmul.f32 %v1073, %v1403
        %v1405 = vmul.f32 %v1078, %v1403
        %v1406 = vmul.f32 %v1403, 0.0
        %v1410 = vrot.slane %v1404, 6
        %v1411 = vrot.slane %v1405, 6
        %v1412 = vsel %vm1174, %v1410, %v1411
        %v1413 = vrot.slane %v1406, 6
        %v1414 = vsel %vm1174, %v1411, %v1413
        %v1417 = vadd.f32 %v1401, %v1412
        %v1418 = vadd.f32 %v1402, %v1414
        %v1419 = vperm.slane %v865, 7
        %v1420 = vmul.f32 %v1073, %v1419
        %v1421 = vmul.f32 %v1078, %v1419
        %v1422 = vmul.f32 %v1419, 0.0
        %v1426 = vrot.slane %v1420, 7
        %v1427 = vrot.slane %v1421, 7
        %v1428 = vsel %vm1191, %v1426, %v1427
        %v1429 = vrot.slane %v1422, 7
        %v1430 = vsel %vm1191, %v1427, %v1429
        %v1433 = vadd.f32 %v1417, %v1428
        %v1434 = vadd.f32 %v1418, %v1430
        %v1435 = vadd.f32 %v1318, %v1433
        %v1436 = vadd.f32 %v1319, %v1434
        %v1437 = vperm.slane %v866, 0
        %v1438 = vmul.f32 %v1078, %v1437
        %v1439 = vmul.f32 %v1437, 0.0
        %v1440 = vperm.slane %v866, 1
        %v1441 = vmul.f32 %v1078, %v1440
        %v1442 = vmul.f32 %v1440, 0.0
        %v1445 = vrot.slane %v1441, 1
        %v1446 = vrot.slane %v1442, 1
        %v1447 = vsel %vm1070, %v1445, %v1446
        %v1448 = vsel %vm1070, %v1446, %v1446
        %v1451 = vadd.f32 %v1438, %v1447
        %v1452 = vadd.f32 %v1439, %v1448
        %v1453 = vperm.slane %v866, 2
        %v1454 = vmul.f32 %v1078, %v1453
        %v1455 = vmul.f32 %v1453, 0.0
        %v1458 = vrot.slane %v1454, 2
        %v1459 = vrot.slane %v1455, 2
        %v1460 = vsel %vm1106, %v1458, %v1459
        %v1461 = vsel %vm1106, %v1459, %v1459
        %v1464 = vadd.f32 %v1451, %v1460
        %v1465 = vadd.f32 %v1452, %v1461
        %v1466 = vperm.slane %v866, 3
        %v1467 = vmul.f32 %v1078, %v1466
        %v1468 = vmul.f32 %v1466, 0.0
        %v1471 = vrot.slane %v1467, 3
        %v1472 = vrot.slane %v1468, 3
        %v1473 = vsel %vm1123, %v1471, %v1472
        %v1474 = vsel %vm1123, %v1472, %v1472
        %v1477 = vadd.f32 %v1464, %v1473
        %v1478 = vadd.f32 %v1465, %v1474
        %v1479 = vperm.slane %v866, 4
        %v1480 = vmul.f32 %v1078, %v1479
        %v1481 = vmul.f32 %v1479, 0.0
        %v1484 = vrot.slane %v1480, 4
        %v1485 = vrot.slane %v1481, 4
        %v1486 = vsel %vm1140, %v1484, %v1485
        %v1487 = vsel %vm1140, %v1485, %v1485
        %v1490 = vadd.f32 %v1477, %v1486
        %v1491 = vadd.f32 %v1478, %v1487
        %v1492 = vperm.slane %v866, 5
        %v1493 = vmul.f32 %v1078, %v1492
        %v1494 = vmul.f32 %v1492, 0.0
        %v1497 = vrot.slane %v1493, 5
        %v1498 = vrot.slane %v1494, 5
        %v1499 = vsel %vm1157, %v1497, %v1498
        %v1500 = vsel %vm1157, %v1498, %v1498
        %v1503 = vadd.f32 %v1490, %v1499
        %v1504 = vadd.f32 %v1491, %v1500
        %v1505 = vperm.slane %v866, 6
        %v1506 = vmul.f32 %v1078, %v1505
        %v1507 = vmul.f32 %v1505, 0.0
        %v1510 = vrot.slane %v1506, 6
        %v1511 = vrot.slane %v1507, 6
        %v1512 = vsel %vm1174, %v1510, %v1511
        %v1513 = vsel %vm1174, %v1511, %v1511
        %v1516 = vadd.f32 %v1503, %v1512
        %v1517 = vadd.f32 %v1504, %v1513
        %v1518 = vadd.f32 %v1435, %v1516
        %v1519 = vadd.f32 %v1436, %v1517
        %v1520 = vmul.f32 %v1518, %v1518
        %v1521 = vmul.f32 %v1519, %v1519
        %v1522 = vmul.f32 %v1518, %v1520
        %v1523 = vmul.f32 %v1519, %v1521
        %v1524 = vmul.f32 %v1522, 0.044715
        %v1525 = vmul.f32 %v1523, 0.044715
        %v1526 = vadd.f32 %v1518, %v1524
        %v1527 = vadd.f32 %v1519, %v1525
        %v1528 = vmul.f32 %v1526, 0.7978846
        %v1529 = vmul.f32 %v1527, 0.7978846
        %v1530 = vtanh.pop %v1528
        %v1531 = vtanh.pop %v1529
        %v1532 = vadd.f32 %v1530, 1.0
        %v1533 = vadd.f32 %v1531, 1.0
        %v1534 = vmul.f32 %v1532, 0.5
        %v1535 = vmul.f32 %v1533, 0.5
        %v1536 = vmul.f32 %v1518, %v1534
        %v1537 = vmul.f32 %v1519, %v1535
        %v1538 = vpack.c.bf16 %v1537, %v1536
        %v1539 = vperm.slane %v840, 0
        %v1548 = vunpack.c.l.b16 %v855
        %v1549 = vunpack.c.l.b16 %v856
        %v1550 = vunpack.c.l.b16 %v857
        %v1551 = vunpack.c.l.b16 %v858
        %v1552 = vunpack.c.l.b16 %v859
        %v1553 = vunpack.c.l.b16 %v860
        %v1554 = vunpack.c.l.b16 %v861
        %v1555 = vunpack.c.l.b16 %v862
        %v1556 = vpack.c.b16 %v1549, %v1548
        %v1557 = vpack.c.b16 %v1551, %v1550
        %v1558 = vpack.c.b16 %v1553, %v1552
        %v1559 = vpack.c.b16 %v1555, %v1554
        %v1565 = vsel %vm540, %v1538, 0
        %1567 = vmatpush.bf16.msra.mxu0 0
        %1568 = vmatpush.bf16.msra.mxu0 0
        %1569 = vmatpush.bf16.msra.mxu0 0
        %1570 = vmatpush.bf16.msra.mxu0 0
        %1571 = vmatpush.bf16.msra.mxu0 %v1559
        %1572 = vmatpush.bf16.msra.mxu0 %v1558
        %1573 = vmatpush.bf16.msra.mxu0 %v1557
        %1574 = vmatpush.bf16.msra.mxu0 %v1556
        %1575 = vmatmul.bf16.gmra.mxu0 %v1565
        %v1576 = vpop.f32.mrf.mxu0
        %v1577 = vadd.f32 %v1539, %v1576
        %v1578 = vpop.f32.mrf.mxu0
        %v1579 = vadd.f32 %v1539, %v1578
        %1580 = vdwg.mxu0
        %v1581 = vadd.f32 %v836, %v1577
        %v1582 = vadd.f32 %v837, %v1579
        %v1583 = vld [vmem:[#allocation2 + $0x5] sm:$0x1]
        %v1584 = vld [vmem:[#allocation2 + $0x7] sm:$0x1]
        %v1585 = vld [vmem:[#allocation2 + $0x9] sm:$0x1]
        %v1586 = vld [vmem:[%s11 + $0x1] sm:$0x1]
        %v1587 = vld [vmem:[%s10 + $0x2] sm:$0x1]
        %v1588 = vld [vmem:[%s6 + $0x30] sm:$0xf]
        %v1589 = vld [vmem:[%s6 + $0x34] sm:$0xf]
        %v1590 = vld [vmem:[%s6 + $0x38] sm:$0xf]
        %v1591 = vld [vmem:[%s6 + $0x3c] sm:$0xf]
        %v1592 = vld [vmem:[%s6 + $0x40] sm:$0xf]
        %v1593 = vld [vmem:[%s6 + $0x44] sm:$0xf]
        %v1594 = vld [vmem:[%s6 + $0x48] sm:$0xf]
        %v1595 = vld [vmem:[%s6 + $0x4c] sm:$0xf]
        %v1596 = vld [vmem:[%s6 + $0x50] sm:$0xf]
        %v1597 = vld [vmem:[%s6 + $0x54] sm:$0xf]
        %v1598 = vld [vmem:[%s6 + $0x58] sm:$0xf]
        %v1599 = vld [vmem:[%s6 + $0x5c] sm:$0xf]
        %v1600 = vld [vmem:[%s7 + $0x20] sm:$0xf]
        %v1601 = vld [vmem:[%s7 + $0x24] sm:$0xf]
        %v1602 = vld [vmem:[%s7 + $0x28] sm:$0xf]
        %v1603 = vld [vmem:[%s7 + $0x2c] sm:$0xf]
        %v1604 = vld [vmem:[%s7 + $0x30] sm:$0xf]
        %v1605 = vld [vmem:[%s7 + $0x34] sm:$0xf]
        %v1606 = vld [vmem:[%s7 + $0x38] sm:$0xf]
        %v1607 = vld [vmem:[%s7 + $0x3c] sm:$0xf]
        %v1608 = vld [vmem:[%s8 + $0x20] sm:$0xff]
        %v1609 = vld [vmem:[%s8 + $0x28] sm:$0xff]
        %v1610 = vld [vmem:[%s8 + $0x30] sm:$0xff]
        %v1611 = vld [vmem:[%s8 + $0x38] sm:$0xff]
        %v1612 = vsel %vm537, %v1581, 0.0
        %1613 = vadd.xlane.f32.xlu0 %v1612
        %v1614 = vpop.xlane.xlu0 %1613
        %v1615 = vsel %vm537, %v1582, 0.0
        %1616 = vadd.xlane.f32.xlu0 %v1615
        %v1617 = vpop.xlane.xlu0 %1616
        %v1618 = vmul.f32 %v1614, %v879
        %v1619 = vmul.f32 %v1617, %v879
        %v1620 = vsub.f32 %v1581, %v1618
        %v1621 = vsub.f32 %v1582, %v1619
        %v1622 = vmul.f32 %v1620, %v1620
        %v1623 = vmul.f32 %v1621, %v1621
        %v1624 = vsel %vm537, %v1622, 0.0
        %1625 = vadd.xlane.f32.xlu0 %v1624
        %v1626 = vpop.xlane.xlu0 %1625
        %v1627 = vsel %vm537, %v1623, 0.0
        %1628 = vadd.xlane.f32.xlu0 %v1627
        %v1629 = vpop.xlane.xlu0 %1628
        %v1630 = vmul.f32 %v1626, %v879
        %v1631 = vmul.f32 %v1629, %v879
        %v1632 = vadd.f32 %v1630, 1e-05
        %v1633 = vadd.f32 %v1631, 1e-05
        %v1634 = vrsqrt.pop %v1632
        %v1635 = vmul.f32 %v1634, %v1632
        %v1636 = vmul.f32 %v1635, %v1634
        %v1637 = vmul.f32 0.5, %v1636
        %v1638 = vsub.f32 1.5, %v1637
        %v1639 = vmul.f32 %v1634, %v1638
        %vm1640 = vweird.f32 %v1632
        %vm1641 = vweird.f32 %v1634
        %vm1642 = vmor %vm1640, %vm1641
        %v1643 = vsel %vm1642, %v1634, %v1639
        %v1644 = vrsqrt.pop %v1633
        %v1645 = vmul.f32 %v1644, %v1633
        %v1646 = vmul.f32 %v1645, %v1644
        %v1647 = vmul.f32 0.5, %v1646
        %v1648 = vsub.f32 1.5, %v1647
        %v1649 = vmul.f32 %v1644, %v1648
        %vm1650 = vweird.f32 %v1633
        %vm1651 = vweird.f32 %v1644
        %vm1652 = vmor %vm1650, %vm1651
        %v1653 = vsel %vm1652, %v1644, %v1649
        %v1654 = vmul.f32 %v1620, %v1643
        %v1655 = vmul.f32 %v1621, %v1653
        %v1656 = vperm.slane %v1583, 0
        %v1657 = vmul.f32 %v1654, %v1656
        %v1658 = vmul.f32 %v1655, %v1656
        %v1659 = vperm.slane %v1584, 0
        %v1660 = vadd.f32 %v1657, %v1659
        %v1661 = vadd.f32 %v1658, %v1659
        %v1662 = vpack.c.bf16 %v1660, %v1660
        %v1663 = vpack.c.bf16 %v1661, %v1661
        %v1666 = vunpack.c.l.b16 %v1662
        %v1667 = vunpack.c.l.b16 %v1663
        %v1668 = vpack.c.b16 %v1667, %v1666
        %v1670 = vshrl.u32 %v1668, 16
        %v1672 = vrot.slane %v1670, 7
        %v1673 = vshll.u32 %v1668, 16
        %v1675 = vor.u32 %v1672, %v1673
        %v1678 = vsel %vm511, 0, %v1675
        %v1679 = vsel %vm511, %v1672, 0
        %v1681 = vshrl.u32 %v1678, 16
        %v1683 = vshll.u32 %v1678, 16
        %v1685 = vrot.slane %v1683, 1
        %v1686 = vor.u32 %v1681, %v1685
        %v1688 = vshll.u32 %v1679, 16
        %v1690 = vrot.slane %v1688, 1
        %v1691 = vsel %vm514, %v1686, %v1690
        %1692 = vrot.lane.b32.xlu0 %v1691, 32
        %v1693 = vpop.permute.xlu0 %1692
        %v1696 = vrot.slane %v1678, 1
        %v1697 = vrot.slane %v1679, 1
        %v1698 = vsel %vm531, %v1696, %v1697
        %1699 = vrot.lane.b32.xlu0 %v1698, 64
        %v1700 = vpop.permute.xlu0 %1699
        %v1702 = vsel %vm537, %v1678, %v1693
        %v1704 = vsel %vm540, %v1702, %v1700
        %v1705 = vperm.slane %v1586, 0
        %v1718 = vunpack.c.l.b16 %v1588
        %v1719 = vunpack.c.l.b16 %v1589
        %v1720 = vunpack.c.l.b16 %v1590
        %v1721 = vunpack.c.l.b16 %v1591
        %v1722 = vunpack.c.l.b16 %v1592
        %v1723 = vunpack.c.l.b16 %v1593
        %v1724 = vunpack.c.l.b16 %v1594
        %v1725 = vunpack.c.l.b16 %v1595
        %v1726 = vunpack.c.l.b16 %v1596
        %v1727 = vunpack.c.l.b16 %v1597
        %v1728 = vunpack.c.l.b16 %v1598
        %v1729 = vunpack.c.l.b16 %v1599
        %v1730 = vpack.c.b16 %v1719, %v1718
        %v1731 = vpack.c.b16 %v1721, %v1720
        %v1732 = vpack.c.b16 %v1723, %v1722
        %v1733 = vpack.c.b16 %v1725, %v1724
        %v1734 = vpack.c.b16 %v1727, %v1726
        %v1735 = vpack.c.b16 %v1729, %v1728
        %v1742 = vsel %vm580, %v1704, 0
        %1744 = vmatpush.bf16.msra.mxu0 0
        %1745 = vmatpush.bf16.msra.mxu0 0
        %1746 = vmatpush.bf16.msra.mxu0 %v1735
        %1747 = vmatpush.bf16.msra.mxu0 %v1734
        %1748 = vmatpush.bf16.msra.mxu0 %v1733
        %1749 = vmatpush.bf16.msra.mxu0 %v1732
        %1750 = vmatpush.bf16.msra.mxu0 %v1731
        %1751 = vmatpush.bf16.msra.mxu0 %v1730
        %1752 = vmatmul.bf16.gmra.mxu0 %v1742
        %v1753 = vpop.f32.mrf.mxu0
        %v1754 = vadd.f32 %v1705, %v1753
        %v1755 = vpop.f32.mrf.mxu0
        %v1756 = vadd.f32 %v1705, %v1755
        %1757 = vdwg.mxu0
        %v1758 = vxor.u32 %v1754, 2147483648
        %v1759 = vxor.u32 %v1756, 2147483648
        %v1760 = vmul.f32 %v1758, 1.442695
        %v1761 = vpow.pop %v1760
        %v1762 = vmul.f32 %v1759, 1.442695
        %v1763 = vpow.pop %v1762
        %v1764 = vadd.f32 %v1761, 1.0
        %v1765 = vadd.f32 %v1763, 1.0
        %v1766 = vrcp.pop %v1764
        %v1767 = vmul.f32 %v1764, %v1766
        %v1768 = vsub.f32 1.0, %v1767
        %v1769 = vmul.f32 %v1766, %v1768
        %v1770 = vadd.f32 %v1766, %v1769
        %vm1771 = vweird.f32 %v1764
        %vm1772 = vweird.f32 %v1766
        %vm1773 = vmor %vm1771, %vm1772
        %v1774 = vsel %vm1773, %v1766, %v1770
        %v1775 = vand.u32 2147483647, %v1764
        %vm1776 = vcmp.eq.f32.partialorder %v1775, 8.507059e+37
        %v1777 = vand.u32 %v1764, 2147483648
        %v1778 = vor.u32 1.1754944e-38, %v1777
        %v1779 = vsel %vm1776, %v1778, %v1774
        %v1780 = vmul.f32 1.0, %v1779
        %v1781 = vrcp.pop %v1765
        %v1782 = vmul.f32 %v1765, %v1781
        %v1783 = vsub.f32 1.0, %v1782
        %v1784 = vmul.f32 %v1781, %v1783
        %v1785 = vadd.f32 %v1781, %v1784
        %vm1786 = vweird.f32 %v1765
        %vm1787 = vweird.f32 %v1781
        %vm1788 = vmor %vm1786, %vm1787
        %v1789 = vsel %vm1788, %v1781, %v1785
        %v1790 = vand.u32 2147483647, %v1765
        %vm1791 = vcmp.eq.f32.partialorder %v1790, 8.507059e+37
        %v1792 = vand.u32 %v1765, 2147483648
        %v1793 = vor.u32 1.1754944e-38, %v1792
        %v1794 = vsel %vm1791, %v1793, %v1789
        %v1795 = vmul.f32 1.0, %v1794
        %1798 = vrot.lane.b32.xlu0 %v1780, 64
        %v1799 = vpop.permute.xlu0 %1798
        %1800 = vrot.lane.b32.xlu0 %v1795, 64
        %v1801 = vpop.permute.xlu0 %1800
        %v1804 = vmul.f32 %v1754, %v1799
        %v1805 = vmul.f32 %v1756, %v1801
        %v1808 = vrot.slane %v1804, 1
        %v1809 = vrot.slane %v1805, 1
        %v1810 = vsel %vm1070, %v1808, %v1809
        %v1814 = vsel %vm1070, 0.0, %v1808
        %v1815 = vsel %vm1070, %v1809, 0.0
        %v1816 = vperm.slane %v1587, 0
        %v1817 = vperm.slane %v1608, 0
        %v1818 = vmul.f32 %v1817, 0.0
        %v1819 = vmul.f32 %v1814, %v1817
        %v1820 = vperm.slane %v1608, 1
        %v1821 = vmul.f32 %v1820, 0.0
        %v1822 = vmul.f32 %v1814, %v1820
        %v1823 = vmul.f32 %v1810, %v1820
        %v1827 = vrot.slane %v1821, 1
        %v1828 = vrot.slane %v1822, 1
        %v1829 = vsel %vm1070, %v1827, %v1828
        %v1830 = vrot.slane %v1823, 1
        %v1831 = vsel %vm1070, %v1828, %v1830
        %v1834 = vadd.f32 %v1818, %v1829
        %v1835 = vadd.f32 %v1819, %v1831
        %v1836 = vperm.slane %v1608, 2
        %v1837 = vmul.f32 %v1836, 0.0
        %v1838 = vmul.f32 %v1814, %v1836
        %v1839 = vmul.f32 %v1810, %v1836
        %v1843 = vrot.slane %v1837, 2
        %v1844 = vrot.slane %v1838, 2
        %v1845 = vsel %vm1106, %v1843, %v1844
        %v1846 = vrot.slane %v1839, 2
        %v1847 = vsel %vm1106, %v1844, %v1846
        %v1850 = vadd.f32 %v1834, %v1845
        %v1851 = vadd.f32 %v1835, %v1847
        %v1852 = vperm.slane %v1608, 3
        %v1853 = vmul.f32 %v1852, 0.0
        %v1854 = vmul.f32 %v1814, %v1852
        %v1855 = vmul.f32 %v1810, %v1852
        %v1859 = vrot.slane %v1853, 3
        %v1860 = vrot.slane %v1854, 3
        %v1861 = vsel %vm1123, %v1859, %v1860
        %v1862 = vrot.slane %v1855, 3
        %v1863 = vsel %vm1123, %v1860, %v1862
        %v1866 = vadd.f32 %v1850, %v1861
        %v1867 = vadd.f32 %v1851, %v1863
        %v1868 = vperm.slane %v1608, 4
        %v1869 = vmul.f32 %v1868, 0.0
        %v1870 = vmul.f32 %v1814, %v1868
        %v1871 = vmul.f32 %v1810, %v1868
        %v1875 = vrot.slane %v1869, 4
        %v1876 = vrot.slane %v1870, 4
        %v1877 = vsel %vm1140, %v1875, %v1876
        %v1878 = vrot.slane %v1871, 4
        %v1879 = vsel %vm1140, %v1876, %v1878
        %v1882 = vadd.f32 %v1866, %v1877
        %v1883 = vadd.f32 %v1867, %v1879
        %v1884 = vperm.slane %v1608, 5
        %v1885 = vmul.f32 %v1884, 0.0
        %v1886 = vmul.f32 %v1814, %v1884
        %v1887 = vmul.f32 %v1810, %v1884
        %v1891 = vrot.slane %v1885, 5
        %v1892 = vrot.slane %v1886, 5
        %v1893 = vsel %vm1157, %v1891, %v1892
        %v1894 = vrot.slane %v1887, 5
        %v1895 = vsel %vm1157, %v1892, %v1894
        %v1898 = vadd.f32 %v1882, %v1893
        %v1899 = vadd.f32 %v1883, %v1895
        %v1900 = vperm.slane %v1608, 6
        %v1901 = vmul.f32 %v1900, 0.0
        %v1902 = vmul.f32 %v1814, %v1900
        %v1903 = vmul.f32 %v1810, %v1900
        %v1907 = vrot.slane %v1901, 6
        %v1908 = vrot.slane %v1902, 6
        %v1909 = vsel %vm1174, %v1907, %v1908
        %v1910 = vrot.slane %v1903, 6
        %v1911 = vsel %vm1174, %v1908, %v1910
        %v1914 = vadd.f32 %v1898, %v1909
        %v1915 = vadd.f32 %v1899, %v1911
        %v1916 = vperm.slane %v1608, 7
        %v1917 = vmul.f32 %v1916, 0.0
        %v1918 = vmul.f32 %v1814, %v1916
        %v1919 = vmul.f32 %v1810, %v1916
        %v1923 = vrot.slane %v1917, 7
        %v1924 = vrot.slane %v1918, 7
        %v1925 = vsel %vm1191, %v1923, %v1924
        %v1926 = vrot.slane %v1919, 7
        %v1927 = vsel %vm1191, %v1924, %v1926
        %v1930 = vadd.f32 %v1914, %v1925
        %v1931 = vadd.f32 %v1915, %v1927
        %v1932 = vadd.f32 %v1816, %v1930
        %v1933 = vadd.f32 %v1816, %v1931
        %v1934 = vperm.slane %v1609, 0
        %v1935 = vmul.f32 %v1814, %v1934
        %v1936 = vmul.f32 %v1810, %v1934
        %v1937 = vperm.slane %v1609, 1
        %v1938 = vmul.f32 %v1814, %v1937
        %v1939 = vmul.f32 %v1810, %v1937
        %v1940 = vmul.f32 %v1815, %v1937
        %v1944 = vrot.slane %v1938, 1
        %v1945 = vrot.slane %v1939, 1
        %v1946 = vsel %vm1070, %v1944, %v1945
        %v1947 = vrot.slane %v1940, 1
        %v1948 = vsel %vm1070, %v1945, %v1947
        %v1951 = vadd.f32 %v1935, %v1946
        %v1952 = vadd.f32 %v1936, %v1948
        %v1953 = vperm.slane %v1609, 2
        %v1954 = vmul.f32 %v1814, %v1953
        %v1955 = vmul.f32 %v1810, %v1953
        %v1956 = vmul.f32 %v1815, %v1953
        %v1960 = vrot.slane %v1954, 2
        %v1961 = vrot.slane %v1955, 2
        %v1962 = vsel %vm1106, %v1960, %v1961
        %v1963 = vrot.slane %v1956, 2
        %v1964 = vsel %vm1106, %v1961, %v1963
        %v1967 = vadd.f32 %v1951, %v1962
        %v1968 = vadd.f32 %v1952, %v1964
        %v1969 = vperm.slane %v1609, 3
        %v1970 = vmul.f32 %v1814, %v1969
        %v1971 = vmul.f32 %v1810, %v1969
        %v1972 = vmul.f32 %v1815, %v1969
        %v1976 = vrot.slane %v1970, 3
        %v1977 = vrot.slane %v1971, 3
        %v1978 = vsel %vm1123, %v1976, %v1977
        %v1979 = vrot.slane %v1972, 3
        %v1980 = vsel %vm1123, %v1977, %v1979
        %v1983 = vadd.f32 %v1967, %v1978
        %v1984 = vadd.f32 %v1968, %v1980
        %v1985 = vperm.slane %v1609, 4
        %v1986 = vmul.f32 %v1814, %v1985
        %v1987 = vmul.f32 %v1810, %v1985
        %v1988 = vmul.f32 %v1815, %v1985
        %v1992 = vrot.slane %v1986, 4
        %v1993 = vrot.slane %v1987, 4
        %v1994 = vsel %vm1140, %v1992, %v1993
        %v1995 = vrot.slane %v1988, 4
        %v1996 = vsel %vm1140, %v1993, %v1995
        %v1999 = vadd.f32 %v1983, %v1994
        %v2000 = vadd.f32 %v1984, %v1996
        %v2001 = vperm.slane %v1609, 5
        %v2002 = vmul.f32 %v1814, %v2001
        %v2003 = vmul.f32 %v1810, %v2001
        %v2004 = vmul.f32 %v1815, %v2001
        %v2008 = vrot.slane %v2002, 5
        %v2009 = vrot.slane %v2003, 5
        %v2010 = vsel %vm1157, %v2008, %v2009
        %v2011 = vrot.slane %v2004, 5
        %v2012 = vsel %vm1157, %v2009, %v2011
        %v2015 = vadd.f32 %v1999, %v2010
        %v2016 = vadd.f32 %v2000, %v2012
        %v2017 = vperm.slane %v1609, 6
        %v2018 = vmul.f32 %v1814, %v2017
        %v2019 = vmul.f32 %v1810, %v2017
        %v2020 = vmul.f32 %v1815, %v2017
        %v2024 = vrot.slane %v2018, 6
        %v2025 = vrot.slane %v2019, 6
        %v2026 = vsel %vm1174, %v2024, %v2025
        %v2027 = vrot.slane %v2020, 6
        %v2028 = vsel %vm1174, %v2025, %v2027
        %v2031 = vadd.f32 %v2015, %v2026
        %v2032 = vadd.f32 %v2016, %v2028
        %v2033 = vperm.slane %v1609, 7
        %v2034 = vmul.f32 %v1814, %v2033
        %v2035 = vmul.f32 %v1810, %v2033
        %v2036 = vmul.f32 %v1815, %v2033
        %v2040 = vrot.slane %v2034, 7
        %v2041 = vrot.slane %v2035, 7
        %v2042 = vsel %vm1191, %v2040, %v2041
        %v2043 = vrot.slane %v2036, 7
        %v2044 = vsel %vm1191, %v2041, %v2043
        %v2047 = vadd.f32 %v2031, %v2042
        %v2048 = vadd.f32 %v2032, %v2044
        %v2049 = vadd.f32 %v1932, %v2047
        %v2050 = vadd.f32 %v1933, %v2048
        %v2051 = vperm.slane %v1610, 0
        %v2052 = vmul.f32 %v1810, %v2051
        %v2053 = vmul.f32 %v1815, %v2051
        %v2054 = vperm.slane %v1610, 1
        %v2055 = vmul.f32 %v1810, %v2054
        %v2056 = vmul.f32 %v1815, %v2054
        %v2057 = vmul.f32 %v2054, 0.0
        %v2061 = vrot.slane %v2055, 1
        %v2062 = vrot.slane %v2056, 1
        %v2063 = vsel %vm1070, %v2061, %v2062
        %v2064 = vrot.slane %v2057, 1
        %v2065 = vsel %vm1070, %v2062, %v2064
        %v2068 = vadd.f32 %v2052, %v2063
        %v2069 = vadd.f32 %v2053, %v2065
        %v2070 = vperm.slane %v1610, 2
        %v2071 = vmul.f32 %v1810, %v2070
        %v2072 = vmul.f32 %v1815, %v2070
        %v2073 = vmul.f32 %v2070, 0.0
        %v2077 = vrot.slane %v2071, 2
        %v2078 = vrot.slane %v2072, 2
        %v2079 = vsel %vm1106, %v2077, %v2078
        %v2080 = vrot.slane %v2073, 2
        %v2081 = vsel %vm1106, %v2078, %v2080
        %v2084 = vadd.f32 %v2068, %v2079
        %v2085 = vadd.f32 %v2069, %v2081
        %v2086 = vperm.slane %v1610, 3
        %v2087 = vmul.f32 %v1810, %v2086
        %v2088 = vmul.f32 %v1815, %v2086
        %v2089 = vmul.f32 %v2086, 0.0
        %v2093 = vrot.slane %v2087, 3
        %v2094 = vrot.slane %v2088, 3
        %v2095 = vsel %vm1123, %v2093, %v2094
        %v2096 = vrot.slane %v2089, 3
        %v2097 = vsel %vm1123, %v2094, %v2096
        %v2100 = vadd.f32 %v2084, %v2095
        %v2101 = vadd.f32 %v2085, %v2097
        %v2102 = vperm.slane %v1610, 4
        %v2103 = vmul.f32 %v1810, %v2102
        %v2104 = vmul.f32 %v1815, %v2102
        %v2105 = vmul.f32 %v2102, 0.0
        %v2109 = vrot.slane %v2103, 4
        %v2110 = vrot.slane %v2104, 4
        %v2111 = vsel %vm1140, %v2109, %v2110
        %v2112 = vrot.slane %v2105, 4
        %v2113 = vsel %vm1140, %v2110, %v2112
        %v2116 = vadd.f32 %v2100, %v2111
        %v2117 = vadd.f32 %v2101, %v2113
        %v2118 = vperm.slane %v1610, 5
        %v2119 = vmul.f32 %v1810, %v2118
        %v2120 = vmul.f32 %v1815, %v2118
        %v2121 = vmul.f32 %v2118, 0.0
        %v2125 = vrot.slane %v2119, 5
        %v2126 = vrot.slane %v2120, 5
        %v2127 = vsel %vm1157, %v2125, %v2126
        %v2128 = vrot.slane %v2121, 5
        %v2129 = vsel %vm1157, %v2126, %v2128
        %v2132 = vadd.f32 %v2116, %v2127
        %v2133 = vadd.f32 %v2117, %v2129
        %v2134 = vperm.slane %v1610, 6
        %v2135 = vmul.f32 %v1810, %v2134
        %v2136 = vmul.f32 %v1815, %v2134
        %v2137 = vmul.f32 %v2134, 0.0
        %v2141 = vrot.slane %v2135, 6
        %v2142 = vrot.slane %v2136, 6
        %v2143 = vsel %vm1174, %v2141, %v2142
        %v2144 = vrot.slane %v2137, 6
        %v2145 = vsel %vm1174, %v2142, %v2144
        %v2148 = vadd.f32 %v2132, %v2143
        %v2149 = vadd.f32 %v2133, %v2145
        %v2150 = vperm.slane %v1610, 7
        %v2151 = vmul.f32 %v1810, %v2150
        %v2152 = vmul.f32 %v1815, %v2150
        %v2153 = vmul.f32 %v2150, 0.0
        %v2157 = vrot.slane %v2151, 7
        %v2158 = vrot.slane %v2152, 7
        %v2159 = vsel %vm1191, %v2157, %v2158
        %v2160 = vrot.slane %v2153, 7
        %v2161 = vsel %vm1191, %v2158, %v2160
        %v2164 = vadd.f32 %v2148, %v2159
        %v2165 = vadd.f32 %v2149, %v2161
        %v2166 = vadd.f32 %v2049, %v2164
        %v2167 = vadd.f32 %v2050, %v2165
        %v2168 = vperm.slane %v1611, 0
        %v2169 = vmul.f32 %v1815, %v2168
        %v2170 = vmul.f32 %v2168, 0.0
        %v2171 = vperm.slane %v1611, 1
        %v2172 = vmul.f32 %v1815, %v2171
        %v2173 = vmul.f32 %v2171, 0.0
        %v2176 = vrot.slane %v2172, 1
        %v2177 = vrot.slane %v2173, 1
        %v2178 = vsel %vm1070, %v2176, %v2177
        %v2179 = vsel %vm1070, %v2177, %v2177
        %v2182 = vadd.f32 %v2169, %v2178
        %v2183 = vadd.f32 %v2170, %v2179
        %v2184 = vperm.slane %v1611, 2
        %v2185 = vmul.f32 %v1815, %v2184
        %v2186 = vmul.f32 %v2184, 0.0
        %v2189 = vrot.slane %v2185, 2
        %v2190 = vrot.slane %v2186, 2
        %v2191 = vsel %vm1106, %v2189, %v2190
        %v2192 = vsel %vm1106, %v2190, %v2190
        %v2195 = vadd.f32 %v2182, %v2191
        %v2196 = vadd.f32 %v2183, %v2192
        %v2197 = vperm.slane %v1611, 3
        %v2198 = vmul.f32 %v1815, %v2197
        %v2199 = vmul.f32 %v2197, 0.0
        %v2202 = vrot.slane %v2198, 3
        %v2203 = vrot.slane %v2199, 3
        %v2204 = vsel %vm1123, %v2202, %v2203
        %v2205 = vsel %vm1123, %v2203, %v2203
        %v2208 = vadd.f32 %v2195, %v2204
        %v2209 = vadd.f32 %v2196, %v2205
        %v2210 = vperm.slane %v1611, 4
        %v2211 = vmul.f32 %v1815, %v2210
        %v2212 = vmul.f32 %v2210, 0.0
        %v2215 = vrot.slane %v2211, 4
        %v2216 = vrot.slane %v2212, 4
        %v2217 = vsel %vm1140, %v2215, %v2216
        %v2218 = vsel %vm1140, %v2216, %v2216
        %v2221 = vadd.f32 %v2208, %v2217
        %v2222 = vadd.f32 %v2209, %v2218
        %v2223 = vperm.slane %v1611, 5
        %v2224 = vmul.f32 %v1815, %v2223
        %v2225 = vmul.f32 %v2223, 0.0
        %v2228 = vrot.slane %v2224, 5
        %v2229 = vrot.slane %v2225, 5
        %v2230 = vsel %vm1157, %v2228, %v2229
        %v2231 = vsel %vm1157, %v2229, %v2229
        %v2234 = vadd.f32 %v2221, %v2230
        %v2235 = vadd.f32 %v2222, %v2231
        %v2236 = vperm.slane %v1611, 6
        %v2237 = vmul.f32 %v1815, %v2236
        %v2238 = vmul.f32 %v2236, 0.0
        %v2241 = vrot.slane %v2237, 6
        %v2242 = vrot.slane %v2238, 6
        %v2243 = vsel %vm1174, %v2241, %v2242
        %v2244 = vsel %vm1174, %v2242, %v2242
        %v2247 = vadd.f32 %v2234, %v2243
        %v2248 = vadd.f32 %v2235, %v2244
        %v2249 = vadd.f32 %v2166, %v2247
        %v2250 = vadd.f32 %v2167, %v2248
        %v2251 = vmul.f32 %v2249, %v2249
        %v2252 = vmul.f32 %v2250, %v2250
        %v2253 = vmul.f32 %v2249, %v2251
        %v2254 = vmul.f32 %v2250, %v2252
        %v2255 = vmul.f32 %v2253, 0.044715
        %v2256 = vmul.f32 %v2254, 0.044715
        %v2257 = vadd.f32 %v2249, %v2255
        %v2258 = vadd.f32 %v2250, %v2256
        %v2259 = vmul.f32 %v2257, 0.7978846
        %v2260 = vmul.f32 %v2258, 0.7978846
        %v2261 = vtanh.pop %v2259
        %v2262 = vtanh.pop %v2260
        %v2263 = vadd.f32 %v2261, 1.0
        %v2264 = vadd.f32 %v2262, 1.0
        %v2265 = vmul.f32 %v2263, 0.5
        %v2266 = vmul.f32 %v2264, 0.5
        %v2267 = vmul.f32 %v2249, %v2265
        %v2268 = vmul.f32 %v2250, %v2266
        %v2269 = vpack.c.bf16 %v2268, %v2267
        %v2270 = vperm.slane %v1585, 0
        %v2279 = vunpack.c.l.b16 %v1600
        %v2280 = vunpack.c.l.b16 %v1601
        %v2281 = vunpack.c.l.b16 %v1602
        %v2282 = vunpack.c.l.b16 %v1603
        %v2283 = vunpack.c.l.b16 %v1604
        %v2284 = vunpack.c.l.b16 %v1605
        %v2285 = vunpack.c.l.b16 %v1606
        %v2286 = vunpack.c.l.b16 %v1607
        %v2287 = vpack.c.b16 %v2280, %v2279
        %v2288 = vpack.c.b16 %v2282, %v2281
        %v2289 = vpack.c.b16 %v2284, %v2283
        %v2290 = vpack.c.b16 %v2286, %v2285
        %v2296 = vsel %vm540, %v2269, 0
        %2298 = vmatpush.bf16.msra.mxu0 0
        %2299 = vmatpush.bf16.msra.mxu0 0
        %2300 = vmatpush.bf16.msra.mxu0 0
        %2301 = vmatpush.bf16.msra.mxu0 0
        %2302 = vmatpush.bf16.msra.mxu0 %v2290
        %2303 = vmatpush.bf16.msra.mxu0 %v2289
        %2304 = vmatpush.bf16.msra.mxu0 %v2288
        %2305 = vmatpush.bf16.msra.mxu0 %v2287
        %2306 = vmatmul.bf16.gmra.mxu0 %v2296
        %v2307 = vpop.f32.mrf.mxu0
        %v2308 = vadd.f32 %v2270, %v2307
        %v2309 = vpop.f32.mrf.mxu0
        %v2310 = vadd.f32 %v2270, %v2309
        %2311 = vdwg.mxu0
        %v2312 = vadd.f32 %v1581, %v2308
        %v2313 = vadd.f32 %v1582, %v2310
        %2314 = vst.msk [vmem:[%s453] sm:$0xff] %vm537, %v2312
        %2315 = vst.msk [vmem:[%s453 + $0x8] sm:$0xff] %vm537, %v2313
        %s2316 = sand.u32 %s302, 1
        %s2317 = scalar_lea.sflag [#allocation4], %s2316
        %s2318 = sand.u32 %s302, 1
        %s2319 = smul.addr %s2318, 16
        %s2320 = scalar_lea.vmem [#allocation5], %s2319
        // Predicated region
        $region73: #{tpu_custom_call.1} parent=67 // pred_check
          %p2321 = pneg %p312
        $region74: #{tpu_custom_call.1} parent=67 // pred_check_branch
          %2323 = sbr.rel (%p2321) target = $region76
        $region75: #{tpu_custom_call.1} parent=67 // pred_region
          %2325 = vsyncadd %s2317, 0
          %s2326 = smul.addr %s27, 2
          %s2327 = smul.addr %s2326, 8
          %s2328 = scalar_lea.hbm %s12, %s2327
          %s2329 = sshll.u32 %s2320, 4
          %s2330 = int_to_ptr.vmem [resolvable:$true] %s2329
          %s2331 = sshll.u32 %s2328, 4
          %s2332 = int_to_ptr.hbm [resolvable:$true] %s2331
          %2337 = dma.vmem_to_hbm [thread:$0]  %s2330, 256, %s2332, %s2317, 128, 128, 8
        $region76: #{tpu_custom_call.1} parent=67 // pred_fallthru
          _
      $region68: #{tpu_custom_call.1} parent=5 // pred_fallthru
        _
      %p2338 = scmp.le.s32.totalorder 2, %s22
      // Predicated region
      $region77: #{tpu_custom_call.1} parent=5 // pred_check
        %p2339 = pneg %p2338
      $region78: #{tpu_custom_call.1} parent=5 // pred_check_branch
        %2341 = sbr.rel (%p2339) target = $region80
      $region79: #{tpu_custom_call.1} parent=5 // pred_region
        %s2342 = ssub.s32 %s22, 2
        // Predicated region
        $region81: #{tpu_custom_call.1} parent=79 // pred_check
          %p2343 = pneg %p318
        $region82: #{tpu_custom_call.1} parent=79 // pred_check_branch
          %2345 = sbr.rel (%p2343) target = $region84
        $region83: #{tpu_custom_call.1} parent=79 // pred_region
          %s2346 = sand.u32 %s303, 1
          %s2347 = scalar_lea.sflag [#allocation4], %s2346
          %s2348 = sand.u32 %s303, 1
          %s2349 = smul.addr %s2348, 16
          %s2350 = scalar_lea.vmem [#allocation5], %s2349
          %2352 = dma.done %s2347, 256
        $region84: #{tpu_custom_call.1} parent=79 // pred_fallthru
          _
      $region80: #{tpu_custom_call.1} parent=5 // pred_fallthru
        _
    $region6: #{tpu_custom_call.1} parent=1 // loop_footer
      %s26 = sadd.s32 1, %s22
    $region7: #{tpu_custom_call.1} parent=1 // loop_footer_branch
      %21 = sbr.rel target = $region3
    $region8: #{tpu_custom_call.1} parent=1 // loop_exit
      _
    %2353 = vsyncpa [#allocation3], 1
    %s2354 = scalar_lea.sflag [#allocation3], 1
    %2355 = vsyncpa %s2354, 1
    %2356 = vsyncpa [#allocation4], 1
    %s2357 = scalar_lea.sflag [#allocation4], 1
    %2358 = vsyncpa %s2357, 1

</llo_original>
